<compile_context>
chip_gen: v7x
topology: tpu7x:2x2x1
jax: 0.10.0
libtpu: 0.0.40
codegen_flags: <defaults>
</compile_context>

<pallas_src>
import functools

import jax
import jax.numpy as jnp
from jax.experimental import pallas as pl
from jax.experimental.pallas import tpu as pltpu


def _round_up(v, m):
    return (v + m - 1) // m * m


@functools.lru_cache(maxsize=None)
def _vmem_limit_bytes():
    cap = 64 * 1024 * 1024                     # conservative default (v7x physical VMEM)
    try:
        cap = int(getattr(pltpu.get_tpu_info(), "vmem_capacity_bytes", cap))
    except Exception:                          # query unavailable -> keep default
        pass
    # ~40 MiB on v7x, ~80 MiB on v5e/v6e; leaves headroom for Mosaic-internal scratch.
    return int(cap * 0.625)


# ----------------------------- Pallas kernels ------------------------------

def _matmul_bias_kernel(x_ref, w_ref, b_ref, o_ref, *, relu):
    """One M-tile of the im2col GEMM: bf16 (TM,Kp)@(Kp,Coutp) -> f32 acc, +bias (+ReLU)."""
    acc = jnp.dot(x_ref[...], w_ref[...], preferred_element_type=jnp.float32)
    acc = acc + b_ref[...]
    if relu:
        acc = jnp.maximum(acc, 0.0)
    o_ref[...] = acc.astype(o_ref.dtype)


def _cx_kernel(xn_ref, yn_ref, *refs, inv_h, w_sp):
    """CoBi CX map for one (batch, row-tile) step, optionally fused with the sp combine.

    xn_ref: (TL, Cp)  pre-normalized query rows (bf16 for the VGG branch, f32 otherwise)
    yn_ref: (Cp, L)   pre-normalized reference map, channels-major (constant over tiles)
    refs:   (sp_ref?, o_ref) — sp_ref (TL, L) f32 is present iff w_sp is not None
    Implements compute_relative_distance + compute_cx on top of the cosine matmul.
    """
    o_ref = refs[-1]
    cos = jnp.dot(xn_ref[...], yn_ref[...], preferred_element_type=jnp.float32)
    d = 1.0 - cos
    # d >= 0 mathematically (unit vectors); clamp rounding-induced negatives so bf16
    # error can never flip the sign of (d_min + 1e-5).  jnp.where keeps NaNs (d<0 is
    # False for NaN), preserving the reference's divide-by-zero-norm NaN behavior.
    d = jnp.where(d < 0.0, 0.0, d)
    d_min = jnp.min(d, axis=1, keepdims=True)          # reduction over the FULL L columns
    d_tilde = d * pl.reciprocal(d_min + 1e-05, approx=True)
    # exp((1 - d_tilde)/h) normalized along axis=1 is shift-invariant -> drop the "1 -".
    # TODO(synk): on v6e/v7x a bf16 exp would roughly double EUP throughput here.
    w = jnp.exp(d_tilde * (-inv_h))
    cx = w * pl.reciprocal(jnp.sum(w, axis=1, keepdims=True), approx=True)
    if w_sp is None:
        o_ref[...] = cx
    else:
        o_ref[...] = (1.0 - w_sp) * cx + w_sp * refs[0][...]


# ----------------------------- conv wrapper ---------------------------------

def conv3x3(x_nhwc, w, b, *, relu, tm=1024):
    """3x3 conv, stride 1, padding 1, NHWC bf16 — im2col (reshape-only) + tiled GEMM."""
    N, H, W_, Cin = x_nhwc.shape
    Cout = w.shape[0]
    K = Cin * 9
    Kp = _round_up(K, 16)              # bf16 sublane multiple; block is full along K
    Coutp = _round_up(Cout, 128)       # lane-dense output stores

    xb = x_nhwc.astype(jnp.bfloat16)
    xp = jnp.pad(xb, ((0, 0), (1, 1), (1, 1), (0, 0)))
    taps = [xp[:, dh:dh + H, dw:dw + W_, :] for dh in range(3) for dw in range(3)]
    cols = jnp.concatenate(taps, axis=-1).reshape(N * H * W_, K)
    # TODO(synk): fuse the 9-tap halo gather into the kernel (row-tiled manual DMA) to
    # avoid materializing the 9x-inflated im2col array in HBM entirely.

    M = N * H * W_
    if M <= tm:
        TM, Mp = M, M
    else:
        n_tiles = -(-M // tm)
        TM = _round_up(-(-M // n_tiles), 16)   # minimise padded-row waste
        Mp = _round_up(M, TM)
    cols = jnp.pad(cols, ((0, Mp - M), (0, Kp - K)))                     # (Mp, Kp) bf16

    wmat = jnp.pad(jnp.transpose(w, (2, 3, 1, 0)).reshape(K, Cout).astype(jnp.bfloat16),
                   ((0, Kp - K), (0, Coutp - Cout)))                     # (Kp, Coutp) bf16
    bias = jnp.pad(b.astype(jnp.float32).reshape(1, Cout),
                   ((0, 0), (0, Coutp - Cout)))                          # (1, Coutp) f32

    out = pl.pallas_call(
        functools.partial(_matmul_bias_kernel, relu=relu),
        out_shape=jax.ShapeDtypeStruct((Mp, Coutp), jnp.bfloat16),
        grid=(Mp // TM,),
        in_specs=[pl.BlockSpec((TM, Kp), lambda i: (i, 0)),
                  pl.BlockSpec((Kp, Coutp), lambda i: (0, 0)),
                  pl.BlockSpec((1, Coutp), lambda i: (0, 0))],
        out_specs=pl.BlockSpec((TM, Coutp), lambda i: (i, 0)),
        compiler_params=pltpu.CompilerParams(
            dimension_semantics=("parallel",),
            vmem_limit_bytes=_vmem_limit_bytes()),
        cost_estimate=pl.CostEstimate(
            flops=2 * Mp * Kp * Coutp,
            transcendentals=0,
            bytes_accessed=2 * Mp * Kp + 2 * Kp * Coutp + 2 * Mp * Coutp + 4 * Coutp),
    )(cols, wmat, bias)

    return out[:M, :Cout].reshape(N, H, W_, Cout)


def maxpool2x2(x_nhwc):
    # nn.MaxPool2d(2, 2) for even spatial dims — trivial reduction, kept as JAX glue.
    N, H, W_, C = x_nhwc.shape
    return x_nhwc.reshape(N, H // 2, 2, W_ // 2, 2, C).max(axis=(2, 4))


def vgg_slice(params, x_nchw):
    # First 8 modules of torchvision vgg19.features:
    # Conv(3,64)-ReLU-Conv(64,64)-ReLU-MaxPool(2,2)-Conv(64,128)-ReLU-Conv(128,128)
    (w1, b1), (w2, b2), (w3, b3), (w4, b4) = params
    x = jnp.transpose(x_nchw, (0, 2, 3, 1))          # NHWC once, 3 channels -> cheap
    x = conv3x3(x, w1, b1, relu=True)
    x = conv3x3(x, w2, b2, relu=True)
    x = maxpool2x2(x)
    x = conv3x3(x, w3, b3, relu=True)
    x = conv3x3(x, w4, b4, relu=False)               # module index 7 is the bare conv
    return x                                          # (N, H/2, W/2, 128) bf16


# ----------------------------- CX wrapper ------------------------------------

def _pick_row_tile(L, Cp, tl, itemsize, has_sp, budget):
    """Largest row tile (multiple of 16) whose resident VMEM working set fits `budget`."""
    if L <= tl:
        return L, L
    TL = max(16, (min(tl, L) // 16) * 16)

    def vmem_need(t):
        return (2 * t * Cp * itemsize              # xn tile (double buffered)
                + 2 * Cp * L * itemsize            # yn (double buffered)
                + (4 if has_sp else 2) * t * L * 4)  # out (+ sp) f32 tiles

    while TL > 16 and vmem_need(TL) > budget:
        TL = max(16, ((TL // 2) // 16) * 16)
    # shave the tile so Lp = ceil(L/TL)*TL wastes as little padded work as possible
    n_tiles = -(-L // TL)
    TL = min(TL, _round_up(-(-L // n_tiles), 16))
    return TL, _round_up(L, TL)
    # TODO(synk): for very large L the (Cp, L) yn buffer itself may exceed VMEM; a
    # column-tiled two-pass variant would be needed there.


def compute_cx_map(x_nlc, y_nlc, *, sp=None, combine_w=0.1, h=0.5, tl=512):
    """CoBi CX map (compute_cosine/relative_distance + compute_cx), optionally returning
    (1-combine_w)*CX(x,y) + combine_w*sp fused into the same kernel.

    x_nlc, y_nlc: (N, L, C) channels-last flattened feature maps.
    sp:           optional (1, L, L) spatial CX map, broadcast across the batch.
    """
    N, L, C = x_nlc.shape
    xf = x_nlc.astype(jnp.float32)
    yf = y_nlc.astype(jnp.float32)

    # Hoisted centering + L2 normalization (O(N*L*C) glue; faithful torch.norm division:
    # no epsilon, so zero norms yield NaN exactly like the PyTorch reference).
    y_mu = jnp.mean(yf, axis=1, keepdims=True)                       # == y.mean(3).mean(2)
    xc = xf - y_mu
    yc = yf - y_mu
    xn = xc * jax.lax.rsqrt(jnp.sum(xc * xc, axis=2, keepdims=True))
    yn = yc * jax.lax.rsqrt(jnp.sum(yc * yc, axis=2, keepdims=True))

    # bf16 matmul for the wide VGG branch; f32 for the tiny spatial/RGB branches.
    mm_dtype = jnp.bfloat16 if C >= 64 else jnp.float32
    isz = jnp.dtype(mm_dtype).itemsize
    Cp = _round_up(C, 16 if mm_dtype == jnp.bfloat16 else 8)         # not 128

    xn = jnp.pad(xn, ((0, 0), (0, 0), (0, Cp - C))).astype(mm_dtype)             # (N, L, Cp)
    ynT = jnp.transpose(jnp.pad(yn, ((0, 0), (0, 0), (0, Cp - C))).astype(mm_dtype),
                        (0, 2, 1))                                                 # (N, Cp, L)

    limit = _vmem_limit_bytes()
    TL, Lp = _pick_row_tile(L, Cp, tl, isz, sp is not None, limit - (6 << 20))
    if Lp != L:
        xn = jnp.pad(xn, ((0, 0), (0, Lp - L), (0, 0)))

    in_specs = [pl.BlockSpec((None, TL, Cp), lambda n, j: (n, j, 0)),
                pl.BlockSpec((None, Cp, L), lambda n, j: (n, 0, 0))]
    operands = [xn, ynT]
    w_sp = None
    if sp is not None:
        sp_f = sp.astype(jnp.float32)
        if sp_f.shape[1] != Lp:
            sp_f = jnp.pad(sp_f, ((0, 0), (0, Lp - sp_f.shape[1]), (0, 0)))
        # batch-invariant spatial map: index_map always reads batch block 0
        in_specs.append(pl.BlockSpec((None, TL, L), lambda n, j: (0, j, 0)))
        operands.append(sp_f)
        w_sp = float(combine_w)

    cx = pl.pallas_call(
        functools.partial(_cx_kernel, inv_h=1.0 / h, w_sp=w_sp),
        out_shape=jax.ShapeDtypeStruct((N, Lp, L), jnp.float32),
        grid=(N, Lp // TL),
        in_specs=in_specs,
        out_specs=pl.BlockSpec((None, TL, L), lambda n, j: (n, j, 0)),
        compiler_params=pltpu.CompilerParams(
            dimension_semantics=("parallel", "parallel"),
            vmem_limit_bytes=limit),
        cost_estimate=pl.CostEstimate(
            flops=2 * N * Lp * L * Cp + 8 * N * Lp * L,
            transcendentals=N * Lp * L + 4 * N * Lp,
            bytes_accessed=(N * Lp * Cp + N * Cp * L) * isz
                           + 4 * N * Lp * L * (2 if sp is not None else 1)),
    )(*operands)

    if Lp != L:
        cx = cx[:, :L, :]
    return cx


def _meshgrid_nlc(H, W):
    rows = jnp.arange(H, dtype=jnp.float32) / (H + 1)
    cols = jnp.arange(W, dtype=jnp.float32) / (W + 1)
    g0 = jnp.broadcast_to(rows[:, None], (H, W))       # torch.meshgrid(rows, cols)[0]
    g1 = jnp.broadcast_to(cols[None, :], (H, W))       # torch.meshgrid(rows, cols)[1]
    return jnp.stack([g0, g1], axis=-1).reshape(1, H * W, 2)   # (1, L, 2) channels-last


def _nchw_to_nlc(x):
    N, C, H, W = x.shape
    return jnp.transpose(x, (0, 2, 3, 1)).reshape(N, H * W, C)


def _cobi_from_nlc(x_nlc, y_nlc, hw, w=0.1, h=0.5, tl=512):
    H, W = hw
    grid = _meshgrid_nlc(H, W)
    # spatial CX is identical for every batch element -> compute once with N=1
    sp = compute_cx_map(grid, grid, h=h, tl=tl)                       # (1, L, L)
    # (1-w)*feat + w*sp fused into the feat CX kernel (no extra HBM pass)
    return compute_cx_map(x_nlc, y_nlc, sp=sp, combine_w=w, h=h, tl=tl)


def _cobi(x_nchw, y_nchw, w=0.1, h=0.5):
    H, W = x_nchw.shape[2], x_nchw.shape[3]
    return _cobi_from_nlc(_nchw_to_nlc(x_nchw), _nchw_to_nlc(y_nchw), (H, W), w=w, h=h)


def cobi_loss_forward(params, out_images, target_images, w=0.1):
    # NOTE: like the PyTorch module, forward's `w` arg is unused — cobi_vgg / cobi_rgb
    # are invoked with their own default w=0.1.
    vgg_out = vgg_slice(params, out_images)
    vgg_tgt = vgg_slice(params, target_images)
    n, hv, wv, cv = vgg_out.shape
    vgg_loss = _cobi_from_nlc(vgg_out.reshape(n, hv * wv, cv),
                              vgg_tgt.reshape(n, hv * wv, cv), (hv, wv))
    rgb_loss = _cobi(out_images, target_images)
    return vgg_loss + rgb_loss


def init_vgg_params(key):
    # TODO(synk): pretrained VGG19 weights are not loadable here; deterministic random init.
    shapes = [(64, 3, 3, 3), (64, 64, 3, 3), (128, 64, 3, 3), (128, 128, 3, 3)]
    keys = jax.random.split(key, len(shapes))
    params = []
    for k, s in zip(keys, shapes):
        wk, bk = jax.random.split(k)
        fan_in = s[1] * s[2] * s[3]
        wgt = jax.random.normal(wk, s, jnp.float32) * (1.0 / jnp.sqrt(fan_in))
        bia = jax.random.normal(bk, (s[0],), jnp.float32) * 0.01
        params.append((wgt, bia))
    return params


if __name__ == "__main__":
    key = jax.random.PRNGKey(0)
    k1, k2, kp = jax.random.split(key, 3)

    # spatial=2 is the only size at which the reference forward's final add
    # (vgg-branch CX (N,1,1) + rgb-branch CX (N,4,4)) broadcasts, exactly as in PyTorch.
    # The 1x1-pooled VGG map makes the vgg spatial branch NaN — faithful, not a bug.
    N, H, W = 2, 2, 2
    out_images = jax.random.uniform(k1, (N, 3, H, W), dtype=jnp.float32)
    target_images = jax.random.uniform(k2, (N, 3, H, W), dtype=jnp.float32)
    params = init_vgg_params(kp)

    fwd = jax.jit(cobi_loss_forward)
    loss = fwd(params, out_images, target_images)   # (N, 4, 4); NaN-valued, matching PyTorch
    jax.block_until_ready(loss)

    # Extra exercise 1: full CoBi CX (spatial-once + fused combine) at a small
    # non-degenerate spatial size — finite, well-formed outputs, single row tile.
    xa = jax.random.uniform(k1, (2, 3, 4, 4), dtype=jnp.float32)
    xb = jax.random.uniform(k2, (2, 3, 4, 4), dtype=jnp.float32)
    cx_small = _cobi(xa, xb)                        # (2, 16, 16), finite
    jax.block_until_ready(cx_small)

    # Extra exercise 2: CX with multiple row tiles (L=400 > TL) exercising row padding
    # and the waste-minimised tile shave (TL=208, Lp=416).
    xc = jax.random.uniform(k1, (2, 3, 20, 20), dtype=jnp.float32)
    xd = jax.random.uniform(k2, (2, 3, 20, 20), dtype=jnp.float32)
    cx_big = compute_cx_map(_nchw_to_nlc(xc), _nchw_to_nlc(xd), h=0.5, tl=256)
    jax.block_until_ready(cx_big)                   # (2, 400, 400), finite

    # Extra exercise 3: conv GEMM with M > TM (multiple grid tiles + M padding), NHWC bf16.
    xi = jax.random.uniform(k2, (2, 3, 24, 24), dtype=jnp.float32)
    yi = conv3x3(jnp.transpose(xi, (0, 2, 3, 1)), params[0][0], params[0][1], relu=True)
    jax.block_until_ready(yi)                       # (2, 24, 24, 64) bf16

    print("KERNEL_OK")
</pallas_src>

<mosaic_0001>
module attributes {stable_mosaic.version = 11 : i64} {
  func.func @_cx_kernel(%arg0: i32, %arg1: i32, %arg2: memref<1x4x8xf32, #tpu.memory_space<vmem>>, %arg3: memref<1x8x4xf32, #tpu.memory_space<vmem>>, %arg4: memref<1x4x4xf32, #tpu.memory_space<vmem>>) attributes {dimension_semantics = [#tpu.dimension_semantics<parallel>, #tpu.dimension_semantics<parallel>], iteration_bounds = array<i64: 1, 1>, scalar_prefetch = 0 : i64, scratch_operands = 0 : i64, tpu.core_type = #tpu.core_type<tc>, window_params = [{transform_indices = @transform_0, window_bounds = array<i64: 1, 4, 8>}, {transform_indices = @transform_1, window_bounds = array<i64: 1, 8, 4>}, {transform_indices = @transform_2, window_bounds = array<i64: 1, 4, 4>}]} {
    %c0 = arith.constant 0 : index
    %c0_0 = arith.constant 0 : index
    %c0_1 = arith.constant 0 : index
    %0 = vector.load %arg2[%c0, %c0_0, %c0_1] : memref<1x4x8xf32, #tpu.memory_space<vmem>>, vector<1x4x8xf32>
    %1 = vector.shape_cast %0 : vector<1x4x8xf32> to vector<4x8xf32>
    %c0_2 = arith.constant 0 : index
    %c0_3 = arith.constant 0 : index
    %c0_4 = arith.constant 0 : index
    %2 = vector.load %arg3[%c0_2, %c0_3, %c0_4] : memref<1x8x4xf32, #tpu.memory_space<vmem>>, vector<1x8x4xf32>
    %3 = vector.shape_cast %2 : vector<1x8x4xf32> to vector<8x4xf32>
    %cst = arith.constant dense<0.000000e+00> : vector<4x4xf32>
    %4 = tpu.matmul %1, %3, %cst {dimension_numbers = #tpu.dot_dimension_numbers<[1], [0], [0], [1], [0, 0, 1, 1], [], []>} : vector<4x8xf32>, vector<8x4xf32>, vector<4x4xf32> -> vector<4x4xf32>
    %cst_5 = arith.constant 1.000000e+00 : f32
    %5 = vector.broadcast %cst_5 : f32 to vector<4x4xf32>
    %6 = arith.subf %5, %4 : vector<4x4xf32>
    %cst_6 = arith.constant 0.000000e+00 : f32
    %7 = vector.broadcast %cst_6 : f32 to vector<4x4xf32>
    %8 = arith.cmpf olt, %6, %7 : vector<4x4xf32>
    %cst_7 = arith.constant 0.000000e+00 : f32
    %9 = vector.broadcast %cst_7 : f32 to vector<4x4xf32>
    %10 = arith.select %8, %9, %6 : vector<4x4xi1>, vector<4x4xf32>
    %cst_8 = arith.constant dense<0x7F800000> : vector<4xf32>
    %11 = vector.multi_reduction <minimumf>, %10, %cst_8 [1] : vector<4x4xf32> to vector<4xf32>
    %12 = vector.shape_cast %11 : vector<4xf32> to vector<4x1xf32>
    %cst_9 = arith.constant 9.99999974E-6 : f32
    %13 = vector.broadcast %cst_9 : f32 to vector<4x1xf32>
    %14 = arith.addf %12, %13 : vector<4x1xf32>
    %15 = tpu.reciprocal %14 {approx = true} : vector<4x1xf32> -> vector<4x1xf32>
    %16 = vector.broadcast %15 : vector<4x1xf32> to vector<4x4xf32>
    %17 = arith.mulf %10, %16 : vector<4x4xf32>
    %cst_10 = arith.constant -2.000000e+00 : f32
    %18 = vector.broadcast %cst_10 : f32 to vector<4x4xf32>
    %19 = arith.mulf %17, %18 : vector<4x4xf32>
    %20 = math.exp %19 : vector<4x4xf32>
    %cst_11 = arith.constant dense<0.000000e+00> : vector<4xf32>
    %21 = vector.multi_reduction <add>, %20, %cst_11 [1] : vector<4x4xf32> to vector<4xf32>
    %22 = vector.shape_cast %21 : vector<4xf32> to vector<4x1xf32>
    %23 = tpu.reciprocal %22 {approx = true} : vector<4x1xf32> -> vector<4x1xf32>
    %24 = vector.broadcast %23 : vector<4x1xf32> to vector<4x4xf32>
    %25 = arith.mulf %20, %24 : vector<4x4xf32>
    %c0_12 = arith.constant 0 : index
    %c0_13 = arith.constant 0 : index
    %c0_14 = arith.constant 0 : index
    %26 = vector.load %arg4[%c0_12, %c0_13, %c0_14] : memref<1x4x4xf32, #tpu.memory_space<vmem>>, vector<1x4x4xf32>
    %27 = vector.shape_cast %26 : vector<1x4x4xf32> to vector<4x4xf32>
    %28 = vector.shape_cast %25 : vector<4x4xf32> to vector<1x4x4xf32>
    tpu.vector_store %arg4[%c0_12, %c0_13, %c0_14], %28 {strides = array<i32>} : memref<1x4x4xf32, #tpu.memory_space<vmem>>, vector<1x4x4xf32>,
    return
  }
  func.func @transform_0(%arg0: i32, %arg1: i32) -> (i32, i32, i32) {
    %c0_i32 = arith.constant 0 : i32
    %c0_i32_0 = arith.constant 0 : i32
    return %arg0, %arg1, %c0_i32 : i32, i32, i32
  }
  func.func @transform_1(%arg0: i32, %arg1: i32) -> (i32, i32, i32) {
    %c0_i32 = arith.constant 0 : i32
    %c0_i32_0 = arith.constant 0 : i32
    %c0_i32_1 = arith.constant 0 : i32
    return %arg0, %c0_i32, %c0_i32_0 : i32, i32, i32
  }
  func.func @transform_2(%arg0: i32, %arg1: i32) -> (i32, i32, i32) {
    %c0_i32 = arith.constant 0 : i32
    %c0_i32_0 = arith.constant 0 : i32
    return %arg0, %arg1, %c0_i32 : i32, i32, i32
  }
}

module attributes {stable_mosaic.version = 11 : i64} {
  func.func @_cx_kernel(%arg0: i32, %arg1: i32, %arg2: memref<1x1x8xf32, #tpu.memory_space<vmem>>, %arg3: memref<1x8x1xf32, #tpu.memory_space<vmem>>, %arg4: memref<1x1x1xf32, #tpu.memory_space<vmem>>) attributes {dimension_semantics = [#tpu.dimension_semantics<parallel>, #tpu.dimension_semantics<parallel>], iteration_bounds = array<i64: 1, 1>, scalar_prefetch = 0 : i64, scratch_operands = 0 : i64, tpu.core_type = #tpu.core_type<tc>, window_params = [{transform_indices = @transform_0, window_bounds = array<i64: 1, 1, 8>}, {transform_indices = @transform_1, window_bounds = array<i64: 1, 8, 1>}, {transform_indices = @transform_2, window_bounds = array<i64: 1, 1, 1>}]} {
    %c0 = arith.constant 0 : index
    %c0_0 = arith.constant 0 : index
    %c0_1 = arith.constant 0 : index
    %0 = vector.load %arg2[%c0, %c0_0, %c0_1] : memref<1x1x8xf32, #tpu.memory_space<vmem>>, vector<1x1x8xf32>
    %1 = vector.shape_cast %0 : vector<1x1x8xf32> to vector<1x8xf32>
    %c0_2 = arith.constant 0 : index
    %c0_3 = arith.constant 0 : index
    %c0_4 = arith.constant 0 : index
    %2 = vector.load %arg3[%c0_2, %c0_3, %c0_4] : memref<1x8x1xf32, #tpu.memory_space<vmem>>, vector<1x8x1xf32>
    %3 = vector.shape_cast %2 : vector<1x8x1xf32> to vector<8x1xf32>
    %cst = arith.constant dense<0.000000e+00> : vector<1x1xf32>
    %4 = tpu.matmul %1, %3, %cst {dimension_numbers = #tpu.dot_dimension_numbers<[1], [0], [0], [1], [0, 0, 1, 1], [], []>} : vector<1x8xf32>, vector<8x1xf32>, vector<1x1xf32> -> vector<1x1xf32>
    %cst_5 = arith.constant 1.000000e+00 : f32
    %5 = vector.broadcast %cst_5 : f32 to vector<1x1xf32>
    %6 = arith.subf %5, %4 : vector<1x1xf32>
    %cst_6 = arith.constant 0.000000e+00 : f32
    %7 = vector.broadcast %cst_6 : f32 to vector<1x1xf32>
    %8 = arith.cmpf olt, %6, %7 : vector<1x1xf32>
    %cst_7 = arith.constant 0.000000e+00 : f32
    %9 = vector.broadcast %cst_7 : f32 to vector<1x1xf32>
    %10 = arith.select %8, %9, %6 : vector<1x1xi1>, vector<1x1xf32>
    %cst_8 = arith.constant dense<0x7F800000> : vector<1xf32>
    %11 = vector.multi_reduction <minimumf>, %10, %cst_8 [1] : vector<1x1xf32> to vector<1xf32>
    %12 = vector.shape_cast %11 : vector<1xf32> to vector<1x1xf32>
    %cst_9 = arith.constant 9.99999974E-6 : f32
    %13 = vector.broadcast %cst_9 : f32 to vector<1x1xf32>
    %14 = arith.addf %12, %13 : vector<1x1xf32>
    %15 = tpu.reciprocal %14 {approx = true} : vector<1x1xf32> -> vector<1x1xf32>
    %16 = arith.mulf %10, %15 : vector<1x1xf32>
    %cst_10 = arith.constant -2.000000e+00 : f32
    %17 = vector.broadcast %cst_10 : f32 to vector<1x1xf32>
    %18 = arith.mulf %16, %17 : vector<1x1xf32>
    %19 = math.exp %18 : vector<1x1xf32>
    %cst_11 = arith.constant dense<0.000000e+00> : vector<1xf32>
    %20 = vector.multi_reduction <add>, %19, %cst_11 [1] : vector<1x1xf32> to vector<1xf32>
    %21 = vector.shape_cast %20 : vector<1xf32> to vector<1x1xf32>
    %22 = tpu.reciprocal %21 {approx = true} : vector<1x1xf32> -> vector<1x1xf32>
    %23 = arith.mulf %19, %22 : vector<1x1xf32>
    %c0_12 = arith.constant 0 : index
    %c0_13 = arith.constant 0 : index
    %c0_14 = arith.constant 0 : index
    %24 = vector.load %arg4[%c0_12, %c0_13, %c0_14] : memref<1x1x1xf32, #tpu.memory_space<vmem>>, vector<1x1x1xf32>
    %25 = vector.shape_cast %24 : vector<1x1x1xf32> to vector<1x1xf32>
    %26 = vector.shape_cast %23 : vector<1x1xf32> to vector<1x1x1xf32>
    tpu.vector_store %arg4[%c0_12, %c0_13, %c0_14], %26 {strides = array<i32>} : memref<1x1x1xf32, #tpu.memory_space<vmem>>, vector<1x1x1xf32>,
    return
  }
  func.func @transform_0(%arg0: i32, %arg1: i32) -> (i32, i32, i32) {
    %c0_i32 = arith.constant 0 : i32
    %c0_i32_0 = arith.constant 0 : i32
    return %arg0, %arg1, %c0_i32 : i32, i32, i32
  }
  func.func @transform_1(%arg0: i32, %arg1: i32) -> (i32, i32, i32) {
    %c0_i32 = arith.constant 0 : i32
    %c0_i32_0 = arith.constant 0 : i32
    %c0_i32_1 = arith.constant 0 : i32
    return %arg0, %c0_i32, %c0_i32_0 : i32, i32, i32
  }
  func.func @transform_2(%arg0: i32, %arg1: i32) -> (i32, i32, i32) {
    %c0_i32 = arith.constant 0 : i32
    %c0_i32_0 = arith.constant 0 : i32
    return %arg0, %arg1, %c0_i32 : i32, i32, i32
  }
}

module attributes {stable_mosaic.version = 11 : i64} {
  func.func @_cx_kernel(%arg0: i32, %arg1: i32, %arg2: memref<1x4x8xf32, #tpu.memory_space<vmem>>, %arg3: memref<1x8x4xf32, #tpu.memory_space<vmem>>, %arg4: memref<1x4x4xf32, #tpu.memory_space<vmem>>, %arg5: memref<1x4x4xf32, #tpu.memory_space<vmem>>) attributes {dimension_semantics = [#tpu.dimension_semantics<parallel>, #tpu.dimension_semantics<parallel>], iteration_bounds = array<i64: 2, 1>, scalar_prefetch = 0 : i64, scratch_operands = 0 : i64, tpu.core_type = #tpu.core_type<tc>, window_params = [{transform_indices = @transform_0, window_bounds = array<i64: 1, 4, 8>}, {transform_indices = @transform_1, window_bounds = array<i64: 1, 8, 4>}, {transform_indices = @transform_2, window_bounds = array<i64: 1, 4, 4>}, {transform_indices = @transform_3, window_bounds = array<i64: 1, 4, 4>}]} {
    %c0 = arith.constant 0 : index
    %c0_0 = arith.constant 0 : index
    %c0_1 = arith.constant 0 : index
    %0 = vector.load %arg2[%c0, %c0_0, %c0_1] : memref<1x4x8xf32, #tpu.memory_space<vmem>>, vector<1x4x8xf32>
    %1 = vector.shape_cast %0 : vector<1x4x8xf32> to vector<4x8xf32>
    %c0_2 = arith.constant 0 : index
    %c0_3 = arith.constant 0 : index
    %c0_4 = arith.constant 0 : index
    %2 = vector.load %arg3[%c0_2, %c0_3, %c0_4] : memref<1x8x4xf32, #tpu.memory_space<vmem>>, vector<1x8x4xf32>
    %3 = vector.shape_cast %2 : vector<1x8x4xf32> to vector<8x4xf32>
    %cst = arith.constant dense<0.000000e+00> : vector<4x4xf32>
    %4 = tpu.matmul %1, %3, %cst {dimension_numbers = #tpu.dot_dimension_numbers<[1], [0], [0], [1], [0, 0, 1, 1], [], []>} : vector<4x8xf32>, vector<8x4xf32>, vector<4x4xf32> -> vector<4x4xf32>
    %cst_5 = arith.constant 1.000000e+00 : f32
    %5 = vector.broadcast %cst_5 : f32 to vector<4x4xf32>
    %6 = arith.subf %5, %4 : vector<4x4xf32>
    %cst_6 = arith.constant 0.000000e+00 : f32
    %7 = vector.broadcast %cst_6 : f32 to vector<4x4xf32>
    %8 = arith.cmpf olt, %6, %7 : vector<4x4xf32>
    %cst_7 = arith.constant 0.000000e+00 : f32
    %9 = vector.broadcast %cst_7 : f32 to vector<4x4xf32>
    %10 = arith.select %8, %9, %6 : vector<4x4xi1>, vector<4x4xf32>
    %cst_8 = arith.constant dense<0x7F800000> : vector<4xf32>
    %11 = vector.multi_reduction <minimumf>, %10, %cst_8 [1] : vector<4x4xf32> to vector<4xf32>
    %12 = vector.shape_cast %11 : vector<4xf32> to vector<4x1xf32>
    %cst_9 = arith.constant 9.99999974E-6 : f32
    %13 = vector.broadcast %cst_9 : f32 to vector<4x1xf32>
    %14 = arith.addf %12, %13 : vector<4x1xf32>
    %15 = tpu.reciprocal %14 {approx = true} : vector<4x1xf32> -> vector<4x1xf32>
    %16 = vector.broadcast %15 : vector<4x1xf32> to vector<4x4xf32>
    %17 = arith.mulf %10, %16 : vector<4x4xf32>
    %cst_10 = arith.constant -2.000000e+00 : f32
    %18 = vector.broadcast %cst_10 : f32 to vector<4x4xf32>
    %19 = arith.mulf %17, %18 : vector<4x4xf32>
    %20 = math.exp %19 : vector<4x4xf32>
    %cst_11 = arith.constant dense<0.000000e+00> : vector<4xf32>
    %21 = vector.multi_reduction <add>, %20, %cst_11 [1] : vector<4x4xf32> to vector<4xf32>
    %22 = vector.shape_cast %21 : vector<4xf32> to vector<4x1xf32>
    %23 = tpu.reciprocal %22 {approx = true} : vector<4x1xf32> -> vector<4x1xf32>
    %24 = vector.broadcast %23 : vector<4x1xf32> to vector<4x4xf32>
    %25 = arith.mulf %20, %24 : vector<4x4xf32>
    %cst_12 = arith.constant 0.899999976 : f32
    %26 = vector.broadcast %cst_12 : f32 to vector<4x4xf32>
    %27 = arith.mulf %26, %25 : vector<4x4xf32>
    %c0_13 = arith.constant 0 : index
    %c0_14 = arith.constant 0 : index
    %c0_15 = arith.constant 0 : index
    %28 = vector.load %arg4[%c0_13, %c0_14, %c0_15] : memref<1x4x4xf32, #tpu.memory_space<vmem>>, vector<1x4x4xf32>
    %29 = vector.shape_cast %28 : vector<1x4x4xf32> to vector<4x4xf32>
    %cst_16 = arith.constant 1.000000e-01 : f32
    %30 = vector.broadcast %cst_16 : f32 to vector<4x4xf32>
    %31 = arith.mulf %30, %29 : vector<4x4xf32>
    %32 = arith.addf %27, %31 : vector<4x4xf32>
    %c0_17 = arith.constant 0 : index
    %c0_18 = arith.constant 0 : index
    %c0_19 = arith.constant 0 : index
    %33 = vector.load %arg5[%c0_17, %c0_18, %c0_19] : memref<1x4x4xf32, #tpu.memory_space<vmem>>, vector<1x4x4xf32>
    %34 = vector.shape_cast %33 : vector<1x4x4xf32> to vector<4x4xf32>
    %35 = vector.shape_cast %32 : vector<4x4xf32> to vector<1x4x4xf32>
    tpu.vector_store %arg5[%c0_17, %c0_18, %c0_19], %35 {strides = array<i32>} : memref<1x4x4xf32, #tpu.memory_space<vmem>>, vector<1x4x4xf32>,
    return
  }
  func.func @transform_0(%arg0: i32, %arg1: i32) -> (i32, i32, i32) {
    %c0_i32 = arith.constant 0 : i32
    %c0_i32_0 = arith.constant 0 : i32
    return %arg0, %arg1, %c0_i32 : i32, i32, i32
  }
  func.func @transform_1(%arg0: i32, %arg1: i32) -> (i32, i32, i32) {
    %c0_i32 = arith.constant 0 : i32
    %c0_i32_0 = arith.constant 0 : i32
    %c0_i32_1 = arith.constant 0 : i32
    return %arg0, %c0_i32, %c0_i32_0 : i32, i32, i32
  }
  func.func @transform_2(%arg0: i32, %arg1: i32) -> (i32, i32, i32) {
    %c0_i32 = arith.constant 0 : i32
    %c0_i32_0 = arith.constant 0 : i32
    %c0_i32_1 = arith.constant 0 : i32
    return %c0_i32, %arg1, %c0_i32_0 : i32, i32, i32
  }
  func.func @transform_3(%arg0: i32, %arg1: i32) -> (i32, i32, i32) {
    %c0_i32 = arith.constant 0 : i32
    %c0_i32_0 = arith.constant 0 : i32
    return %arg0, %arg1, %c0_i32 : i32, i32, i32
  }
}

module attributes {stable_mosaic.version = 11 : i64} {
  func.func @_matmul_bias_kernel(%arg0: i32, %arg1: memref<8x32xbf16, #tpu.memory_space<vmem>>, %arg2: memref<32x128xbf16, #tpu.memory_space<vmem>>, %arg3: memref<1x128xf32, #tpu.memory_space<vmem>>, %arg4: memref<8x128xbf16, #tpu.memory_space<vmem>>) attributes {dimension_semantics = [#tpu.dimension_semantics<parallel>], iteration_bounds = array<i64: 1>, scalar_prefetch = 0 : i64, scratch_operands = 0 : i64, tpu.core_type = #tpu.core_type<tc>, window_params = [{transform_indices = @transform_0, window_bounds = array<i64: 8, 32>}, {pipeline_mode = #tpu.pipeline_mode<synchronous>, transform_indices = @transform_1, window_bounds = array<i64: 32, 128>}, {pipeline_mode = #tpu.pipeline_mode<synchronous>, transform_indices = @transform_2, window_bounds = array<i64: 1, 128>}, {transform_indices = @transform_3, window_bounds = array<i64: 8, 128>}]} {
    %c0 = arith.constant 0 : index
    %c0_0 = arith.constant 0 : index
    %0 = vector.load %arg1[%c0, %c0_0] : memref<8x32xbf16, #tpu.memory_space<vmem>>, vector<8x32xbf16>
    %c0_1 = arith.constant 0 : index
    %c0_2 = arith.constant 0 : index
    %1 = vector.load %arg2[%c0_1, %c0_2] : memref<32x128xbf16, #tpu.memory_space<vmem>>, vector<32x128xbf16>
    %cst = arith.constant dense<0.000000e+00> : vector<8x128xf32>
    %2 = tpu.matmul %0, %1, %cst {dimension_numbers = #tpu.dot_dimension_numbers<[1], [0], [0], [1], [0, 0, 1, 1], [], []>} : vector<8x32xbf16>, vector<32x128xbf16>, vector<8x128xf32> -> vector<8x128xf32>
    %c0_3 = arith.constant 0 : index
    %c0_4 = arith.constant 0 : index
    %3 = vector.load %arg3[%c0_3, %c0_4] : memref<1x128xf32, #tpu.memory_space<vmem>>, vector<1x128xf32>
    %4 = vector.broadcast %3 : vector<1x128xf32> to vector<8x128xf32>
    %5 = arith.addf %2, %4 : vector<8x128xf32>
    %cst_5 = arith.constant 0.000000e+00 : f32
    %6 = vector.broadcast %cst_5 : f32 to vector<8x128xf32>
    %7 = arith.maximumf %5, %6 : vector<8x128xf32>
    %8 = arith.truncf %7 : vector<8x128xf32> to vector<8x128xbf16>
    %c0_6 = arith.constant 0 : index
    %c0_7 = arith.constant 0 : index
    %9 = vector.load %arg4[%c0_6, %c0_7] : memref<8x128xbf16, #tpu.memory_space<vmem>>, vector<8x128xbf16>
    tpu.vector_store %arg4[%c0_6, %c0_7], %8 {strides = array<i32>} : memref<8x128xbf16, #tpu.memory_space<vmem>>, vector<8x128xbf16>,
    return
  }
  func.func @transform_0(%arg0: i32) -> (i32, i32) {
    %c0_i32 = arith.constant 0 : i32
    %c0_i32_0 = arith.constant 0 : i32
    return %arg0, %c0_i32 : i32, i32
  }
  func.func @transform_1(%arg0: i32) -> (i32, i32) {
    %c0_i32 = arith.constant 0 : i32
    %c0_i32_0 = arith.constant 0 : i32
    %c0_i32_1 = arith.constant 0 : i32
    return %c0_i32, %c0_i32_0 : i32, i32
  }
  func.func @transform_2(%arg0: i32) -> (i32, i32) {
    %c0_i32 = arith.constant 0 : i32
    %c0_i32_0 = arith.constant 0 : i32
    %c0_i32_1 = arith.constant 0 : i32
    return %c0_i32, %c0_i32_0 : i32, i32
  }
  func.func @transform_3(%arg0: i32) -> (i32, i32) {
    %c0_i32 = arith.constant 0 : i32
    %c0_i32_0 = arith.constant 0 : i32
    return %arg0, %c0_i32 : i32, i32
  }
}

module attributes {stable_mosaic.version = 11 : i64} {
  func.func @_matmul_bias_kernel(%arg0: i32, %arg1: memref<8x576xbf16, #tpu.memory_space<vmem>>, %arg2: memref<576x128xbf16, #tpu.memory_space<vmem>>, %arg3: memref<1x128xf32, #tpu.memory_space<vmem>>, %arg4: memref<8x128xbf16, #tpu.memory_space<vmem>>) attributes {dimension_semantics = [#tpu.dimension_semantics<parallel>], iteration_bounds = array<i64: 1>, scalar_prefetch = 0 : i64, scratch_operands = 0 : i64, tpu.core_type = #tpu.core_type<tc>, window_params = [{transform_indices = @transform_0, window_bounds = array<i64: 8, 576>}, {pipeline_mode = #tpu.pipeline_mode<synchronous>, transform_indices = @transform_1, window_bounds = array<i64: 576, 128>}, {pipeline_mode = #tpu.pipeline_mode<synchronous>, transform_indices = @transform_2, window_bounds = array<i64: 1, 128>}, {transform_indices = @transform_3, window_bounds = array<i64: 8, 128>}]} {
    %c0 = arith.constant 0 : index
    %c0_0 = arith.constant 0 : index
    %0 = vector.load %arg1[%c0, %c0_0] : memref<8x576xbf16, #tpu.memory_space<vmem>>, vector<8x576xbf16>
    %c0_1 = arith.constant 0 : index
    %c0_2 = arith.constant 0 : index
    %1 = vector.load %arg2[%c0_1, %c0_2] : memref<576x128xbf16, #tpu.memory_space<vmem>>, vector<576x128xbf16>
    %cst = arith.constant dense<0.000000e+00> : vector<8x128xf32>
    %2 = tpu.matmul %0, %1, %cst {dimension_numbers = #tpu.dot_dimension_numbers<[1], [0], [0], [1], [0, 0, 1, 1], [], []>} : vector<8x576xbf16>, vector<576x128xbf16>, vector<8x128xf32> -> vector<8x128xf32>
    %c0_3 = arith.constant 0 : index
    %c0_4 = arith.constant 0 : index
    %3 = vector.load %arg3[%c0_3, %c0_4] : memref<1x128xf32, #tpu.memory_space<vmem>>, vector<1x128xf32>
    %4 = vector.broadcast %3 : vector<1x128xf32> to vector<8x128xf32>
    %5 = arith.addf %2, %4 : vector<8x128xf32>
    %cst_5 = arith.constant 0.000000e+00 : f32
    %6 = vector.broadcast %cst_5 : f32 to vector<8x128xf32>
    %7 = arith.maximumf %5, %6 : vector<8x128xf32>
    %8 = arith.truncf %7 : vector<8x128xf32> to vector<8x128xbf16>
    %c0_6 = arith.constant 0 : index
    %c0_7 = arith.constant 0 : index
    %9 = vector.load %arg4[%c0_6, %c0_7] : memref<8x128xbf16, #tpu.memory_space<vmem>>, vector<8x128xbf16>
    tpu.vector_store %arg4[%c0_6, %c0_7], %8 {strides = array<i32>} : memref<8x128xbf16, #tpu.memory_space<vmem>>, vector<8x128xbf16>,
    return
  }
  func.func @transform_0(%arg0: i32) -> (i32, i32) {
    %c0_i32 = arith.constant 0 : i32
    %c0_i32_0 = arith.constant 0 : i32
    return %arg0, %c0_i32 : i32, i32
  }
  func.func @transform_1(%arg0: i32) -> (i32, i32) {
    %c0_i32 = arith.constant 0 : i32
    %c0_i32_0 = arith.constant 0 : i32
    %c0_i32_1 = arith.constant 0 : i32
    return %c0_i32, %c0_i32_0 : i32, i32
  }
  func.func @transform_2(%arg0: i32) -> (i32, i32) {
    %c0_i32 = arith.constant 0 : i32
    %c0_i32_0 = arith.constant 0 : i32
    %c0_i32_1 = arith.constant 0 : i32
    return %c0_i32, %c0_i32_0 : i32, i32
  }
  func.func @transform_3(%arg0: i32) -> (i32, i32) {
    %c0_i32 = arith.constant 0 : i32
    %c0_i32_0 = arith.constant 0 : i32
    return %arg0, %c0_i32 : i32, i32
  }
}

module attributes {stable_mosaic.version = 11 : i64} {
  func.func @_matmul_bias_kernel(%arg0: i32, %arg1: memref<2x576xbf16, #tpu.memory_space<vmem>>, %arg2: memref<576x128xbf16, #tpu.memory_space<vmem>>, %arg3: memref<1x128xf32, #tpu.memory_space<vmem>>, %arg4: memref<2x128xbf16, #tpu.memory_space<vmem>>) attributes {dimension_semantics = [#tpu.dimension_semantics<parallel>], iteration_bounds = array<i64: 1>, scalar_prefetch = 0 : i64, scratch_operands = 0 : i64, tpu.core_type = #tpu.core_type<tc>, window_params = [{transform_indices = @transform_0, window_bounds = array<i64: 2, 576>}, {pipeline_mode = #tpu.pipeline_mode<synchronous>, transform_indices = @transform_1, window_bounds = array<i64: 576, 128>}, {pipeline_mode = #tpu.pipeline_mode<synchronous>, transform_indices = @transform_2, window_bounds = array<i64: 1, 128>}, {transform_indices = @transform_3, window_bounds = array<i64: 2, 128>}]} {
    %c0 = arith.constant 0 : index
    %c0_0 = arith.constant 0 : index
    %0 = vector.load %arg1[%c0, %c0_0] : memref<2x576xbf16, #tpu.memory_space<vmem>>, vector<2x576xbf16>
    %c0_1 = arith.constant 0 : index
    %c0_2 = arith.constant 0 : index
    %1 = vector.load %arg2[%c0_1, %c0_2] : memref<576x128xbf16, #tpu.memory_space<vmem>>, vector<576x128xbf16>
    %cst = arith.constant dense<0.000000e+00> : vector<2x128xf32>
    %2 = tpu.matmul %0, %1, %cst {dimension_numbers = #tpu.dot_dimension_numbers<[1], [0], [0], [1], [0, 0, 1, 1], [], []>} : vector<2x576xbf16>, vector<576x128xbf16>, vector<2x128xf32> -> vector<2x128xf32>
    %c0_3 = arith.constant 0 : index
    %c0_4 = arith.constant 0 : index
    %3 = vector.load %arg3[%c0_3, %c0_4] : memref<1x128xf32, #tpu.memory_space<vmem>>, vector<1x128xf32>
    %4 = vector.broadcast %3 : vector<1x128xf32> to vector<2x128xf32>
    %5 = arith.addf %2, %4 : vector<2x128xf32>
    %cst_5 = arith.constant 0.000000e+00 : f32
    %6 = vector.broadcast %cst_5 : f32 to vector<2x128xf32>
    %7 = arith.maximumf %5, %6 : vector<2x128xf32>
    %8 = arith.truncf %7 : vector<2x128xf32> to vector<2x128xbf16>
    %c0_6 = arith.constant 0 : index
    %c0_7 = arith.constant 0 : index
    %9 = vector.load %arg4[%c0_6, %c0_7] : memref<2x128xbf16, #tpu.memory_space<vmem>>, vector<2x128xbf16>
    tpu.vector_store %arg4[%c0_6, %c0_7], %8 {strides = array<i32>} : memref<2x128xbf16, #tpu.memory_space<vmem>>, vector<2x128xbf16>,
    return
  }
  func.func @transform_0(%arg0: i32) -> (i32, i32) {
    %c0_i32 = arith.constant 0 : i32
    %c0_i32_0 = arith.constant 0 : i32
    return %arg0, %c0_i32 : i32, i32
  }
  func.func @transform_1(%arg0: i32) -> (i32, i32) {
    %c0_i32 = arith.constant 0 : i32
    %c0_i32_0 = arith.constant 0 : i32
    %c0_i32_1 = arith.constant 0 : i32
    return %c0_i32, %c0_i32_0 : i32, i32
  }
  func.func @transform_2(%arg0: i32) -> (i32, i32) {
    %c0_i32 = arith.constant 0 : i32
    %c0_i32_0 = arith.constant 0 : i32
    %c0_i32_1 = arith.constant 0 : i32
    return %c0_i32, %c0_i32_0 : i32, i32
  }
  func.func @transform_3(%arg0: i32) -> (i32, i32) {
    %c0_i32 = arith.constant 0 : i32
    %c0_i32_0 = arith.constant 0 : i32
    return %arg0, %c0_i32 : i32, i32
  }
}

module attributes {stable_mosaic.version = 11 : i64} {
  func.func @_matmul_bias_kernel(%arg0: i32, %arg1: memref<2x1152xbf16, #tpu.memory_space<vmem>>, %arg2: memref<1152x128xbf16, #tpu.memory_space<vmem>>, %arg3: memref<1x128xf32, #tpu.memory_space<vmem>>, %arg4: memref<2x128xbf16, #tpu.memory_space<vmem>>) attributes {dimension_semantics = [#tpu.dimension_semantics<parallel>], iteration_bounds = array<i64: 1>, scalar_prefetch = 0 : i64, scratch_operands = 0 : i64, tpu.core_type = #tpu.core_type<tc>, window_params = [{transform_indices = @transform_0, window_bounds = array<i64: 2, 1152>}, {pipeline_mode = #tpu.pipeline_mode<synchronous>, transform_indices = @transform_1, window_bounds = array<i64: 1152, 128>}, {pipeline_mode = #tpu.pipeline_mode<synchronous>, transform_indices = @transform_2, window_bounds = array<i64: 1, 128>}, {transform_indices = @transform_3, window_bounds = array<i64: 2, 128>}]} {
    %c0 = arith.constant 0 : index
    %c0_0 = arith.constant 0 : index
    %0 = vector.load %arg1[%c0, %c0_0] : memref<2x1152xbf16, #tpu.memory_space<vmem>>, vector<2x1152xbf16>
    %c0_1 = arith.constant 0 : index
    %c0_2 = arith.constant 0 : index
    %1 = vector.load %arg2[%c0_1, %c0_2] : memref<1152x128xbf16, #tpu.memory_space<vmem>>, vector<1152x128xbf16>
    %cst = arith.constant dense<0.000000e+00> : vector<2x128xf32>
    %2 = tpu.matmul %0, %1, %cst {dimension_numbers = #tpu.dot_dimension_numbers<[1], [0], [0], [1], [0, 0, 1, 1], [], []>} : vector<2x1152xbf16>, vector<1152x128xbf16>, vector<2x128xf32> -> vector<2x128xf32>
    %c0_3 = arith.constant 0 : index
    %c0_4 = arith.constant 0 : index
    %3 = vector.load %arg3[%c0_3, %c0_4] : memref<1x128xf32, #tpu.memory_space<vmem>>, vector<1x128xf32>
    %4 = vector.broadcast %3 : vector<1x128xf32> to vector<2x128xf32>
    %5 = arith.addf %2, %4 : vector<2x128xf32>
    %6 = arith.truncf %5 : vector<2x128xf32> to vector<2x128xbf16>
    %c0_5 = arith.constant 0 : index
    %c0_6 = arith.constant 0 : index
    %7 = vector.load %arg4[%c0_5, %c0_6] : memref<2x128xbf16, #tpu.memory_space<vmem>>, vector<2x128xbf16>
    tpu.vector_store %arg4[%c0_5, %c0_6], %6 {strides = array<i32>} : memref<2x128xbf16, #tpu.memory_space<vmem>>, vector<2x128xbf16>,
    return
  }
  func.func @transform_0(%arg0: i32) -> (i32, i32) {
    %c0_i32 = arith.constant 0 : i32
    %c0_i32_0 = arith.constant 0 : i32
    return %arg0, %c0_i32 : i32, i32
  }
  func.func @transform_1(%arg0: i32) -> (i32, i32) {
    %c0_i32 = arith.constant 0 : i32
    %c0_i32_0 = arith.constant 0 : i32
    %c0_i32_1 = arith.constant 0 : i32
    return %c0_i32, %c0_i32_0 : i32, i32
  }
  func.func @transform_2(%arg0: i32) -> (i32, i32) {
    %c0_i32 = arith.constant 0 : i32
    %c0_i32_0 = arith.constant 0 : i32
    %c0_i32_1 = arith.constant 0 : i32
    return %c0_i32, %c0_i32_0 : i32, i32
  }
  func.func @transform_3(%arg0: i32) -> (i32, i32) {
    %c0_i32 = arith.constant 0 : i32
    %c0_i32_0 = arith.constant 0 : i32
    return %arg0, %c0_i32 : i32, i32
  }
}

module attributes {stable_mosaic.version = 11 : i64} {
  func.func @_cx_kernel(%arg0: i32, %arg1: i32, %arg2: memref<1x1x128xbf16, #tpu.memory_space<vmem>>, %arg3: memref<1x128x1xbf16, #tpu.memory_space<vmem>>, %arg4: memref<1x1x1xf32, #tpu.memory_space<vmem>>, %arg5: memref<1x1x1xf32, #tpu.memory_space<vmem>>) attributes {dimension_semantics = [#tpu.dimension_semantics<parallel>, #tpu.dimension_semantics<parallel>], iteration_bounds = array<i64: 2, 1>, scalar_prefetch = 0 : i64, scratch_operands = 0 : i64, tpu.core_type = #tpu.core_type<tc>, window_params = [{transform_indices = @transform_0, window_bounds = array<i64: 1, 1, 128>}, {transform_indices = @transform_1, window_bounds = array<i64: 1, 128, 1>}, {transform_indices = @transform_2, window_bounds = array<i64: 1, 1, 1>}, {transform_indices = @transform_3, window_bounds = array<i64: 1, 1, 1>}]} {
    %c0 = arith.constant 0 : index
    %c0_0 = arith.constant 0 : index
    %c0_1 = arith.constant 0 : index
    %0 = vector.load %arg2[%c0, %c0_0, %c0_1] : memref<1x1x128xbf16, #tpu.memory_space<vmem>>, vector<1x1x128xbf16>
    %1 = vector.shape_cast %0 : vector<1x1x128xbf16> to vector<1x128xbf16>
    %c0_2 = arith.constant 0 : index
    %c0_3 = arith.constant 0 : index
    %c0_4 = arith.constant 0 : index
    %2 = vector.load %arg3[%c0_2, %c0_3, %c0_4] : memref<1x128x1xbf16, #tpu.memory_space<vmem>>, vector<1x128x1xbf16>
    %3 = vector.shape_cast %2 : vector<1x128x1xbf16> to vector<128x1xbf16>
    %cst = arith.constant dense<0.000000e+00> : vector<1x1xf32>
    %4 = tpu.matmul %1, %3, %cst {dimension_numbers = #tpu.dot_dimension_numbers<[1], [0], [0], [1], [0, 0, 1, 1], [], []>} : vector<1x128xbf16>, vector<128x1xbf16>, vector<1x1xf32> -> vector<1x1xf32>
    %cst_5 = arith.constant 1.000000e+00 : f32
    %5 = vector.broadcast %cst_5 : f32 to vector<1x1xf32>
    %6 = arith.subf %5, %4 : vector<1x1xf32>
    %cst_6 = arith.constant 0.000000e+00 : f32
    %7 = vector.broadcast %cst_6 : f32 to vector<1x1xf32>
    %8 = arith.cmpf olt, %6, %7 : vector<1x1xf32>
    %cst_7 = arith.constant 0.000000e+00 : f32
    %9 = vector.broadcast %cst_7 : f32 to vector<1x1xf32>
    %10 = arith.select %8, %9, %6 : vector<1x1xi1>, vector<1x1xf32>
    %cst_8 = arith.constant dense<0x7F800000> : vector<1xf32>
    %11 = vector.multi_reduction <minimumf>, %10, %cst_8 [1] : vector<1x1xf32> to vector<1xf32>
    %12 = vector.shape_cast %11 : vector<1xf32> to vector<1x1xf32>
    %cst_9 = arith.constant 9.99999974E-6 : f32
    %13 = vector.broadcast %cst_9 : f32 to vector<1x1xf32>
    %14 = arith.addf %12, %13 : vector<1x1xf32>
    %15 = tpu.reciprocal %14 {approx = true} : vector<1x1xf32> -> vector<1x1xf32>
    %16 = arith.mulf %10, %15 : vector<1x1xf32>
    %cst_10 = arith.constant -2.000000e+00 : f32
    %17 = vector.broadcast %cst_10 : f32 to vector<1x1xf32>
    %18 = arith.mulf %16, %17 : vector<1x1xf32>
    %19 = math.exp %18 : vector<1x1xf32>
    %cst_11 = arith.constant dense<0.000000e+00> : vector<1xf32>
    %20 = vector.multi_reduction <add>, %19, %cst_11 [1] : vector<1x1xf32> to vector<1xf32>
    %21 = vector.shape_cast %20 : vector<1xf32> to vector<1x1xf32>
    %22 = tpu.reciprocal %21 {approx = true} : vector<1x1xf32> -> vector<1x1xf32>
    %23 = arith.mulf %19, %22 : vector<1x1xf32>
    %cst_12 = arith.constant 0.899999976 : f32
    %24 = vector.broadcast %cst_12 : f32 to vector<1x1xf32>
    %25 = arith.mulf %24, %23 : vector<1x1xf32>
    %c0_13 = arith.constant 0 : index
    %c0_14 = arith.constant 0 : index
    %c0_15 = arith.constant 0 : index
    %26 = vector.load %arg4[%c0_13, %c0_14, %c0_15] : memref<1x1x1xf32, #tpu.memory_space<vmem>>, vector<1x1x1xf32>
    %27 = vector.shape_cast %26 : vector<1x1x1xf32> to vector<1x1xf32>
    %cst_16 = arith.constant 1.000000e-01 : f32
    %28 = vector.broadcast %cst_16 : f32 to vector<1x1xf32>
    %29 = arith.mulf %28, %27 : vector<1x1xf32>
    %30 = arith.addf %25, %29 : vector<1x1xf32>
    %c0_17 = arith.constant 0 : index
    %c0_18 = arith.constant 0 : index
    %c0_19 = arith.constant 0 : index
    %31 = vector.load %arg5[%c0_17, %c0_18, %c0_19] : memref<1x1x1xf32, #tpu.memory_space<vmem>>, vector<1x1x1xf32>
    %32 = vector.shape_cast %31 : vector<1x1x1xf32> to vector<1x1xf32>
    %33 = vector.shape_cast %30 : vector<1x1xf32> to vector<1x1x1xf32>
    tpu.vector_store %arg5[%c0_17, %c0_18, %c0_19], %33 {strides = array<i32>} : memref<1x1x1xf32, #tpu.memory_space<vmem>>, vector<1x1x1xf32>,
    return
  }
  func.func @transform_0(%arg0: i32, %arg1: i32) -> (i32, i32, i32) {
    %c0_i32 = arith.constant 0 : i32
    %c0_i32_0 = arith.constant 0 : i32
    return %arg0, %arg1, %c0_i32 : i32, i32, i32
  }
  func.func @transform_1(%arg0: i32, %arg1: i32) -> (i32, i32, i32) {
    %c0_i32 = arith.constant 0 : i32
    %c0_i32_0 = arith.constant 0 : i32
    %c0_i32_1 = arith.constant 0 : i32
    return %arg0, %c0_i32, %c0_i32_0 : i32, i32, i32
  }
  func.func @transform_2(%arg0: i32, %arg1: i32) -> (i32, i32, i32) {
    %c0_i32 = arith.constant 0 : i32
    %c0_i32_0 = arith.constant 0 : i32
    %c0_i32_1 = arith.constant 0 : i32
    return %c0_i32, %arg1, %c0_i32_0 : i32, i32, i32
  }
  func.func @transform_3(%arg0: i32, %arg1: i32) -> (i32, i32, i32) {
    %c0_i32 = arith.constant 0 : i32
    %c0_i32_0 = arith.constant 0 : i32
    return %arg0, %arg1, %c0_i32 : i32, i32, i32
  }
}

</mosaic_0001>

<llo_original>
// kernel: cobi_loss_forward.22
$region0: #{cobi_loss_forward.22}
  #allocation0 [shape = 'u32[]', space=smem, size = 0x4, offset = 0x4, fixed_abs, tag = 'smem constant byte address 0x4 - core index']
  #allocation1 [shape = 'u32[144,128]{1,0:T(1,128)}', space=vmem, size = 0x12000, scoped, tag = 'internal scratch']
  %s0 = inlined_call_operand.vmem [shape: f32[1,4,8], index: 0, kind: input, shape index: {}]
  %s1 = inlined_call_operand.vmem [shape: f32[1,8,4], index: 1, kind: input, shape index: {}]
  %s2 = inlined_call_operand.vmem [shape: f32[1,4,4], index: 2, kind: output, shape index: {}]
  %s3 = sld [smem:[#allocation0]]
  $region18: #{cobi_loss_forward.22} parent=0
    _
  %s5 = ssub.s32 1, %s3
  %s6 = scalar_select 0, %s5, %s3
  // Predicated region
  $region2: #{cobi_loss_forward.22} parent=0 // pred_check
    _
  $region3: #{cobi_loss_forward.22} parent=0 // pred_check_branch
    %8 = sbr.rel (0) target = $region5
  $region4: #{cobi_loss_forward.22} parent=0 // pred_region
    _
  $region5: #{cobi_loss_forward.22} parent=0 // pred_fallthru
    _
  // Predicated region
  $region6: #{cobi_loss_forward.22} parent=0 // pred_check
    _
  $region7: #{cobi_loss_forward.22} parent=0 // pred_check_branch
    %10 = sbr.rel (0) target = $region9
  $region8: #{cobi_loss_forward.22} parent=0 // pred_region
    _
  $region9: #{cobi_loss_forward.22} parent=0 // pred_fallthru
    _
  %v11 = vld [vmem:[%s0] sm:$0xf]
  %v12 = vld [vmem:[%s1] sm:$0xff]
  %vm13 = vcmask 64512
  %v15 = vsel %vm13, %v11, 0
  %17 = vmatprep.subr.mxu0 0.0
  %18 = vmatpush1.msra.mxu0 %v12
  %19 = vmatprep.subr.mxu0 0.0
  %20 = vmatpush1.msra.mxu0 0.0
  %21 = vmatprep.subr.mxu0 0.0
  %22 = vmatpush1.msra.mxu0 0.0
  %23 = vmatprep.subr.mxu0 0.0
  %24 = vmatpush1.msra.mxu0 0.0
  %25 = vmatprep.subr.mxu0 0.0
  %26 = vmatpush1.msra.mxu0 0.0
  %27 = vmatprep.subr.mxu0 0.0
  %28 = vmatpush1.msra.mxu0 0.0
  %29 = vmatprep.subr.mxu0 0.0
  %30 = vmatpush1.msra.mxu0 0.0
  %31 = vmatprep.subr.mxu0 0.0
  %32 = vmatpush1.msra.mxu0 0.0
  %33 = vmatprep.subr.mxu0 0.0
  %34 = vmatpush1.msra.mxu0 0.0
  %35 = vmatprep.subr.mxu0 0.0
  %36 = vmatpush1.msra.mxu0 0.0
  %37 = vmatprep.subr.mxu0 0.0
  %38 = vmatpush1.msra.mxu0 0.0
  %39 = vmatprep.subr.mxu0 0.0
  %40 = vmatpush1.msra.mxu0 0.0
  %41 = vmatprep.subr.mxu0 0.0
  %42 = vmatpush1.msra.mxu0 0.0
  %43 = vmatprep.subr.mxu0 0.0
  %44 = vmatpush1.msra.mxu0 0.0
  %45 = vmatprep.subr.mxu0 0.0
  %46 = vmatpush1.msra.mxu0 0.0
  %47 = vmatprep.subr.mxu0 0.0
  %48 = vmatpush1.msra.mxu0 0.0
  %49 = vmatprep.subr.mxu0 0.0
  %50 = vmatpush1.msra.mxu0 0.0
  %51 = vmatprep.subr.mxu0 0.0
  %52 = vmatpush1.msra.mxu0 0.0
  %53 = vmatprep.subr.mxu0 0.0
  %54 = vmatpush1.msra.mxu0 0.0
  %55 = vmatprep.subr.mxu0 0.0
  %56 = vmatpush1.msra.mxu0 0.0
  %57 = vmatprep.subr.mxu0 0.0
  %58 = vmatpush1.msra.mxu0 0.0
  %59 = vmatprep.subr.mxu0 0.0
  %60 = vmatpush1.msra.mxu0 0.0
  %61 = vmatprep.subr.mxu0 0.0
  %62 = vmatpush1.msra.mxu0 0.0
  %63 = vmatprep.subr.mxu0 0.0
  %64 = vmatpush1.msra.mxu0 0.0
  %65 = vmatprep.subr.mxu0 0.0
  %66 = vmatpush1.msra.mxu0 0.0
  %67 = vmatprep.subr.mxu0 0.0
  %68 = vmatpush1.msra.mxu0 0.0
  %69 = vmatprep.subr.mxu0 0.0
  %70 = vmatpush1.msra.mxu0 0.0
  %71 = vmatprep.subr.mxu0 0.0
  %72 = vmatpush1.msra.mxu0 0.0
  %73 = vmatprep.subr.mxu0 0.0
  %74 = vmatpush1.msra.mxu0 0.0
  %75 = vmatprep.subr.mxu0 0.0
  %76 = vmatpush1.msra.mxu0 0.0
  %77 = vmatprep.subr.mxu0 0.0
  %78 = vmatpush1.msra.mxu0 0.0
  %79 = vmatprep.subr.mxu0 0.0
  %80 = vmatpush1.msra.mxu0 0.0
  %81 = vmatprep.mubr.f32.mxu0 0.0
  %82 = vmatmul.mubr.f32.gmra.mrb[0].mxu0 %v15
  %v83 = vpop.f32.mrb[0].mxu0
  %v84 = vadd.f32 0.0, %v83
  %v85 = vpop.f32.mrb[0].mxu0
  %86 = vdwg.mxu0
  %v87 = vsub.f32 1.0, %v84
  %vm88 = vcmp.lt.f32.partialorder %v87, 0.0
  %v89 = vsel %vm88, 0.0, %v87
  %vm90 = vcmask 27648
  %v91 = vsel %vm90, %v89, inf
  %92 = vmin.xlane.f32.xlu0 %v91
  %v93 = vpop.xlane.xlu0 %92
  %v94 = vadd.f32 %v93, 1e-05
  %v95 = vrcp.pop %v94
  %v96 = vmul.f32 %v89, %v95
  %v97 = vmul.f32 %v96, -2.0
  %v98 = vmul.f32 %v97, 1.442695
  %v99 = vpow.pop %v98
  %v100 = vsel %vm90, %v99, 0.0
  %101 = vadd.xlane.f32.xlu0 %v100
  %v102 = vpop.xlane.xlu0 %101
  %v103 = vrcp.pop %v102
  %v104 = vmul.f32 %v99, %v103
  %105 = vst.msk [vmem:[%s2] sm:$0xf] %vm90, %v104
  // Predicated region
  $region10: #{cobi_loss_forward.22} parent=0 // pred_check
    _
  $region11: #{cobi_loss_forward.22} parent=0 // pred_check_branch
    %107 = sbr.rel (0) target = $region13
  $region12: #{cobi_loss_forward.22} parent=0 // pred_region
    _
  $region13: #{cobi_loss_forward.22} parent=0 // pred_fallthru
    _
  // Predicated region
  $region14: #{cobi_loss_forward.22} parent=0 // pred_check
    _
  $region15: #{cobi_loss_forward.22} parent=0 // pred_check_branch
    %109 = sbr.rel (0) target = $region17
  $region16: #{cobi_loss_forward.22} parent=0 // pred_region
    _
  $region17: #{cobi_loss_forward.22} parent=0 // pred_fallthru
    _

// kernel: cobi_loss_forward.20
$region0: #{cobi_loss_forward.20}
  #allocation0 [shape = 'u32[]', space=smem, size = 0x4, offset = 0x4, fixed_abs, tag = 'smem constant byte address 0x4 - core index']
  #allocation1 [shape = 'u32[144,128]{1,0:T(1,128)}', space=vmem, size = 0x12000, scoped, tag = 'internal scratch']
  %s0 = inlined_call_operand.vmem [shape: f32[1,1,8], index: 0, kind: input, shape index: {}]
  %s1 = inlined_call_operand.vmem [shape: f32[1,8,1], index: 1, kind: input, shape index: {}]
  %s2 = inlined_call_operand.hbm [shape: f32[1,1,1], index: 2, kind: output, shape index: {}]
  %s3 = sld [smem:[#allocation0]]
  $region18: #{cobi_loss_forward.20} parent=0
    _
  %s5 = ssub.s32 1, %s3
  %s6 = scalar_select 0, %s5, %s3
  $region1: #{cobi_loss_forward.20} parent=0
    #allocation2 [shape = 'u8[512]{0}', space=vmem, size = 0x400, scoped, tag = 'output window, operand 0, single buffered']
    #allocation3 [shape = 's32[1]{0}', space=sflag, size = 0x4, scoped, tag = 'scoped memory for cobi_loss_forward.20']
    %7 = vsyncpa [#allocation3], 0
    // Predicated region
    $region2: #{cobi_loss_forward.20} parent=1 // pred_check
      _
    $region3: #{cobi_loss_forward.20} parent=1 // pred_check_branch
      %9 = sbr.rel (0) target = $region5
    $region4: #{cobi_loss_forward.20} parent=1 // pred_region
      _
    $region5: #{cobi_loss_forward.20} parent=1 // pred_fallthru
      _
    // Predicated region
    $region6: #{cobi_loss_forward.20} parent=1 // pred_check
      _
    $region7: #{cobi_loss_forward.20} parent=1 // pred_check_branch
      %11 = sbr.rel (0) target = $region9
    $region8: #{cobi_loss_forward.20} parent=1 // pred_region
      _
    $region9: #{cobi_loss_forward.20} parent=1 // pred_fallthru
      _
    %v12 = vld [vmem:[%s0] sm:$0x1]
    %v13 = vld [vmem:[%s1] sm:$0xff]
    %vm14 = vcmask 64512
    %v16 = vsel %vm14, %v12, 0
    %18 = vmatprep.subr.mxu0 0.0
    %19 = vmatpush1.msra.mxu0 %v13
    %20 = vmatprep.subr.mxu0 0.0
    %21 = vmatpush1.msra.mxu0 0.0
    %22 = vmatprep.subr.mxu0 0.0
    %23 = vmatpush1.msra.mxu0 0.0
    %24 = vmatprep.subr.mxu0 0.0
    %25 = vmatpush1.msra.mxu0 0.0
    %26 = vmatprep.subr.mxu0 0.0
    %27 = vmatpush1.msra.mxu0 0.0
    %28 = vmatprep.subr.mxu0 0.0
    %29 = vmatpush1.msra.mxu0 0.0
    %30 = vmatprep.subr.mxu0 0.0
    %31 = vmatpush1.msra.mxu0 0.0
    %32 = vmatprep.subr.mxu0 0.0
    %33 = vmatpush1.msra.mxu0 0.0
    %34 = vmatprep.subr.mxu0 0.0
    %35 = vmatpush1.msra.mxu0 0.0
    %36 = vmatprep.subr.mxu0 0.0
    %37 = vmatpush1.msra.mxu0 0.0
    %38 = vmatprep.subr.mxu0 0.0
    %39 = vmatpush1.msra.mxu0 0.0
    %40 = vmatprep.subr.mxu0 0.0
    %41 = vmatpush1.msra.mxu0 0.0
    %42 = vmatprep.subr.mxu0 0.0
    %43 = vmatpush1.msra.mxu0 0.0
    %44 = vmatprep.subr.mxu0 0.0
    %45 = vmatpush1.msra.mxu0 0.0
    %46 = vmatprep.subr.mxu0 0.0
    %47 = vmatpush1.msra.mxu0 0.0
    %48 = vmatprep.subr.mxu0 0.0
    %49 = vmatpush1.msra.mxu0 0.0
    %50 = vmatprep.subr.mxu0 0.0
    %51 = vmatpush1.msra.mxu0 0.0
    %52 = vmatprep.subr.mxu0 0.0
    %53 = vmatpush1.msra.mxu0 0.0
    %54 = vmatprep.subr.mxu0 0.0
    %55 = vmatpush1.msra.mxu0 0.0
    %56 = vmatprep.subr.mxu0 0.0
    %57 = vmatpush1.msra.mxu0 0.0
    %58 = vmatprep.subr.mxu0 0.0
    %59 = vmatpush1.msra.mxu0 0.0
    %60 = vmatprep.subr.mxu0 0.0
    %61 = vmatpush1.msra.mxu0 0.0
    %62 = vmatprep.subr.mxu0 0.0
    %63 = vmatpush1.msra.mxu0 0.0
    %64 = vmatprep.subr.mxu0 0.0
    %65 = vmatpush1.msra.mxu0 0.0
    %66 = vmatprep.subr.mxu0 0.0
    %67 = vmatpush1.msra.mxu0 0.0
    %68 = vmatprep.subr.mxu0 0.0
    %69 = vmatpush1.msra.mxu0 0.0
    %70 = vmatprep.subr.mxu0 0.0
    %71 = vmatpush1.msra.mxu0 0.0
    %72 = vmatprep.subr.mxu0 0.0
    %73 = vmatpush1.msra.mxu0 0.0
    %74 = vmatprep.subr.mxu0 0.0
    %75 = vmatpush1.msra.mxu0 0.0
    %76 = vmatprep.subr.mxu0 0.0
    %77 = vmatpush1.msra.mxu0 0.0
    %78 = vmatprep.subr.mxu0 0.0
    %79 = vmatpush1.msra.mxu0 0.0
    %80 = vmatprep.subr.mxu0 0.0
    %81 = vmatpush1.msra.mxu0 0.0
    %82 = vmatprep.mubr.f32.mxu0 0.0
    %83 = vmatmul.mubr.f32.gmra.mrb[0].mxu0 %v16
    %v84 = vpop.f32.mrb[0].mxu0
    %v85 = vadd.f32 0.0, %v84
    %v86 = vpop.f32.mrb[0].mxu0
    %87 = vdwg.mxu0
    %v88 = vsub.f32 1.0, %v85
    %vm89 = vcmp.lt.f32.partialorder %v88, 0.0
    %v90 = vsel %vm89, 0.0, %v88
    %v91 = vadd.f32 %v90, 1e-05
    %v92 = vrcp.pop %v91
    %v93 = vmul.f32 %v90, %v92
    %v94 = vmul.f32 %v93, -2.0
    %v95 = vmul.f32 %v94, 1.442695
    %v96 = vpow.pop %v95
    %v97 = vadd.f32 %v96, 0.0
    %v98 = vrcp.pop %v97
    %v99 = vmul.f32 %v96, %v98
    %vm100 = vcmask 0
    %101 = vst.msk [vmem:[#allocation2] sm:$0x1] %vm100, %v99
    // Predicated region
    $region10: #{cobi_loss_forward.20} parent=1 // pred_check
      _
    $region11: #{cobi_loss_forward.20} parent=1 // pred_check_branch
      %103 = sbr.rel (0) target = $region13
    $region12: #{cobi_loss_forward.20} parent=1 // pred_region
      %s105 = ssub.s32 16, 16
      %106 = vsyncadd [#allocation3], %s105
      %s108 = sshll.u32 [#allocation2], 4
      %s109 = int_to_ptr.vmem [resolvable:$true] %s108
      %111 = dma.vmem_to_hbm [thread:$0]  %s109, 16, %s2, [#allocation3]
    $region13: #{cobi_loss_forward.20} parent=1 // pred_fallthru
      _
    // Predicated region
    $region14: #{cobi_loss_forward.20} parent=1 // pred_check
      _
    $region15: #{cobi_loss_forward.20} parent=1 // pred_check_branch
      %113 = sbr.rel (0) target = $region17
    $region16: #{cobi_loss_forward.20} parent=1 // pred_region
      %114 = dma.done [#allocation3], 16
    $region17: #{cobi_loss_forward.20} parent=1 // pred_fallthru
      _
    %115 = vsyncpa [#allocation3], 1

// kernel: cobi_loss_forward.23
$region0: #{cobi_loss_forward.23}
  #allocation0 [shape = 'u32[]', space=smem, size = 0x4, offset = 0x4, fixed_abs, tag = 'smem constant byte address 0x4 - core index']
  #allocation1 [shape = 'u32[144,128]{1,0:T(1,128)}', space=vmem, size = 0x12000, scoped, tag = 'internal scratch']
  %s0 = inlined_call_operand.vmem [shape: f32[2,4,8], index: 0, kind: input, shape index: {}]
  %s1 = inlined_call_operand.vmem [shape: f32[2,8,4], index: 1, kind: input, shape index: {}]
  %s2 = inlined_call_operand.vmem [shape: f32[1,4,4], index: 2, kind: input, shape index: {}]
  %s3 = inlined_call_operand.vmem [shape: f32[2,4,4], index: 3, kind: output, shape index: {}]
  %s4 = sld [smem:[#allocation0]]
  $region45: #{cobi_loss_forward.23} parent=0
    _
  %s6 = ssub.s32 1, %s4
  %s7 = scalar_select 0, %s6, %s4
  loop: start=0, step=1, limit=4
  $region2: #{cobi_loss_forward.23} parent=0 // loop_pre_header
    _
  $region3: #{cobi_loss_forward.23} parent=0 // loop_header
    %s9 = sphi 0, %s13
    %p10 = scmp.ge.s32.totalorder %s9, 4
    %s16 = sphi 0, %s28
    %s17 = sphi 0, %s24
    %s18 = sphi 0, %s16
    %s19 = sphi 0, %s17
    %s20 = sphi 0, %s18
    %s21 = sphi 0, %s19
    %s33 = sphi 0, %s35
    %s36 = sphi 0, %s33
    %s37 = sphi 0, %s36
    %s53 = sphi 0, %s37
    %s59 = sphi 0, %s61
    %s62 = sphi 0, %s59
    %s63 = sphi 0, %s62
    %s79 = sphi 0, %s63
    %s85 = sphi 0, %s87
    %s88 = sphi 0, %s85
    %s89 = sphi 0, %s88
    %s105 = sphi 0, %s89
    %s113 = sphi 0, %s115
    %s116 = sphi 0, %s113
    %s117 = sphi 0, %s116
    %s133 = sphi 0, %s117
  $region4: #{cobi_loss_forward.23} parent=0 // loop_header_branch
    %12 = sbr.rel (%p10) target = $region8
  $region5: #{cobi_loss_forward.23} parent=0 // loop_body
    %s14 = ssub.s32 %s9, 1
    %s15 = ssub.s32 %s9, 2
    %s22 = sadd.s32 1, %s17
    %p23 = scmp.ge.s32.totalorder %s22, 1
    %s24 = scalar_select %p23, 0, %s22
    %s25 = sadd.s32 1, %s16
    %s26 = scalar_select %p23, %s25, %s16
    %p27 = scmp.ge.s32.totalorder %s26, 2
    %s28 = scalar_select %p27, 0, %s26
    %s29 = ssub.s32 %s16, %s28
    %s30 = ssub.s32 %s17, %s24
    %s31 = sor.u32 %s29, %s30
    %p32 = scmp.eq.s32.totalorder %s31, 0
    %s34 = sadd.s32 %s33, 1
    %s35 = scalar_select %p32, %s33, %s34
    %p38 = pneg %p32
    %p39 = scmp.eq.s32.totalorder %s9, 1
    %p40 = por %p38, %p39
    %p41 = scmp.ne.s32.totalorder %s33, %s36
    %p42 = scmp.eq.s32.totalorder %s9, 0
    %p43 = por %p41, %p42
    %p44 = scmp.ne.s32.totalorder %s33, %s36
    %p45 = scmp.eq.s32.totalorder %s14, 1
    %p46 = por %p44, %p45
    %p47 = scmp.ne.s32.totalorder %s36, %s37
    %p48 = scmp.eq.s32.totalorder %s14, 0
    %p49 = por %p47, %p48
    %p50 = scmp.ne.s32.totalorder %s36, %s37
    %p51 = scmp.eq.s32.totalorder %s15, 1
    %p52 = por %p50, %p51
    %p54 = scmp.ne.s32.totalorder %s37, %s53
    %p55 = scmp.eq.s32.totalorder %s15, 0
    %p56 = por %p54, %p55
    %s57 = ssub.s32 %s16, %s28
    %p58 = scmp.eq.s32.totalorder %s57, 0
    %s60 = sadd.s32 %s59, 1
    %s61 = scalar_select %p58, %s59, %s60
    %p64 = pneg %p58
    %p65 = scmp.eq.s32.totalorder %s9, 1
    %p66 = por %p64, %p65
    %p67 = scmp.ne.s32.totalorder %s59, %s62
    %p68 = scmp.eq.s32.totalorder %s9, 0
    %p69 = por %p67, %p68
    %p70 = scmp.ne.s32.totalorder %s59, %s62
    %p71 = scmp.eq.s32.totalorder %s14, 1
    %p72 = por %p70, %p71
    %p73 = scmp.ne.s32.totalorder %s62, %s63
    %p74 = scmp.eq.s32.totalorder %s14, 0
    %p75 = por %p73, %p74
    %p76 = scmp.ne.s32.totalorder %s62, %s63
    %p77 = scmp.eq.s32.totalorder %s15, 1
    %p78 = por %p76, %p77
    %p80 = scmp.ne.s32.totalorder %s63, %s79
    %p81 = scmp.eq.s32.totalorder %s15, 0
    %p82 = por %p80, %p81
    %s83 = ssub.s32 %s17, %s24
    %p84 = scmp.eq.s32.totalorder %s83, 0
    %s86 = sadd.s32 %s85, 1
    %s87 = scalar_select %p84, %s85, %s86
    %p90 = pneg %p84
    %p91 = scmp.eq.s32.totalorder %s9, 1
    %p92 = por %p90, %p91
    %p93 = scmp.ne.s32.totalorder %s85, %s88
    %p94 = scmp.eq.s32.totalorder %s9, 0
    %p95 = por %p93, %p94
    %p96 = scmp.ne.s32.totalorder %s85, %s88
    %p97 = scmp.eq.s32.totalorder %s14, 1
    %p98 = por %p96, %p97
    %p99 = scmp.ne.s32.totalorder %s88, %s89
    %p100 = scmp.eq.s32.totalorder %s14, 0
    %p101 = por %p99, %p100
    %p102 = scmp.ne.s32.totalorder %s88, %s89
    %p103 = scmp.eq.s32.totalorder %s15, 1
    %p104 = por %p102, %p103
    %p106 = scmp.ne.s32.totalorder %s89, %s105
    %p107 = scmp.eq.s32.totalorder %s15, 0
    %p108 = por %p106, %p107
    %s109 = ssub.s32 %s16, %s28
    %s110 = ssub.s32 %s17, %s24
    %s111 = sor.u32 %s109, %s110
    %p112 = scmp.eq.s32.totalorder %s111, 0
    %s114 = sadd.s32 %s113, 1
    %s115 = scalar_select %p112, %s113, %s114
    %p118 = pneg %p112
    %p119 = scmp.eq.s32.totalorder %s9, 1
    %p120 = por %p118, %p119
    %p121 = scmp.ne.s32.totalorder %s113, %s116
    %p122 = scmp.eq.s32.totalorder %s9, 0
    %p123 = por %p121, %p122
    %p124 = scmp.ne.s32.totalorder %s113, %s116
    %p125 = scmp.eq.s32.totalorder %s14, 1
    %p126 = por %p124, %p125
    %p127 = scmp.ne.s32.totalorder %s116, %s117
    %p128 = scmp.eq.s32.totalorder %s14, 0
    %p129 = por %p127, %p128
    %p130 = scmp.ne.s32.totalorder %s116, %s117
    %p131 = scmp.eq.s32.totalorder %s15, 1
    %p132 = por %p130, %p131
    %p134 = scmp.ne.s32.totalorder %s117, %s133
    %p135 = scmp.eq.s32.totalorder %s15, 0
    %p136 = por %p134, %p135
    %p137 = scmp.le.s32.totalorder 1, %s9
    %p138 = scmp.lt.s32.totalorder %s9, 3
    %p139 = pnand %p137, %p138
    %p140 = pneg %p139
    // Predicated region
    $region9: #{cobi_loss_forward.23} parent=5 // pred_check
      _
    $region10: #{cobi_loss_forward.23} parent=5 // pred_check_branch
      %142 = sbr.rel (%p139) target = $region12
    $region11: #{cobi_loss_forward.23} parent=5 // pred_region
      %s143 = ssub.s32 %s9, 1
      // Predicated region
      $region13: #{cobi_loss_forward.23} parent=11 // pred_check
        %p144 = pneg %p101
      $region14: #{cobi_loss_forward.23} parent=11 // pred_check_branch
        %146 = sbr.rel (%p144) target = $region16
      $region15: #{cobi_loss_forward.23} parent=11 // pred_region
        %p147 = scmp.lt.s32.totalorder %s19, 0
        %s148 = scalar_select %p147, %s19, 0
        %s149 = smul.addr %s148, 4
        %s150 = scalar_lea.vmem %s2, %s149
      $region16: #{cobi_loss_forward.23} parent=11 // pred_fallthru
        _
    $region12: #{cobi_loss_forward.23} parent=5 // pred_fallthru
      _
    %p151 = scmp.lt.s32.totalorder %s9, 2
    // Predicated region
    $region17: #{cobi_loss_forward.23} parent=5 // pred_check
      %p152 = pneg %p151
    $region18: #{cobi_loss_forward.23} parent=5 // pred_check_branch
      %154 = sbr.rel (%p152) target = $region20
    $region19: #{cobi_loss_forward.23} parent=5 // pred_region
      // Predicated region
      $region21: #{cobi_loss_forward.23} parent=19 // pred_check
        %p155 = pneg %p43
      $region22: #{cobi_loss_forward.23} parent=19 // pred_check_branch
        %157 = sbr.rel (%p155) target = $region24
      $region23: #{cobi_loss_forward.23} parent=19 // pred_region
        %p158 = scmp.lt.s32.totalorder %s16, 1
        %s159 = scalar_select %p158, %s16, 1
        %p160 = scmp.lt.s32.totalorder %s17, 0
        %s161 = scalar_select %p160, %s17, 0
        %s162 = sadd.s32 %s161, %s159
        %s163 = smul.addr %s162, 4
        %s164 = scalar_lea.vmem %s0, %s163
      $region24: #{cobi_loss_forward.23} parent=19 // pred_fallthru
        _
      // Predicated region
      $region25: #{cobi_loss_forward.23} parent=19 // pred_check
        %p165 = pneg %p69
      $region26: #{cobi_loss_forward.23} parent=19 // pred_check_branch
        %167 = sbr.rel (%p165) target = $region28
      $region27: #{cobi_loss_forward.23} parent=19 // pred_region
        %p168 = scmp.lt.s32.totalorder %s16, 1
        %s169 = scalar_select %p168, %s16, 1
        %s170 = smul.addr %s169, 8
        %s171 = scalar_lea.vmem %s1, %s170
      $region28: #{cobi_loss_forward.23} parent=19 // pred_fallthru
        _
    $region20: #{cobi_loss_forward.23} parent=5 // pred_fallthru
      _
    %p172 = scmp.le.s32.totalorder 1, %s9
    %p173 = scmp.lt.s32.totalorder %s9, 3
    %p174 = pnand %p172, %p173
    %p175 = pneg %p174
    // Predicated region
    $region29: #{cobi_loss_forward.23} parent=5 // pred_check
      _
    $region30: #{cobi_loss_forward.23} parent=5 // pred_check_branch
      %177 = sbr.rel (%p174) target = $region32
    $region31: #{cobi_loss_forward.23} parent=5 // pred_region
      %s178 = ssub.s32 %s9, 1
      %p179 = scmp.lt.s32.totalorder %s18, 1
      %s180 = scalar_select %p179, %s18, 1
      %p181 = scmp.lt.s32.totalorder %s19, 0
      %s182 = scalar_select %p181, %s19, 0
      %s183 = sadd.s32 %s182, %s180
      %s184 = smul.addr %s183, 4
      %s185 = scalar_lea.vmem %s0, %s184
      %p186 = pneg %p49
      %p187 = pneg %p46
      %p188 = scmp.lt.s32.totalorder %s18, 1
      %s189 = scalar_select %p188, %s18, 1
      %s190 = smul.addr %s189, 8
      %s191 = scalar_lea.vmem %s1, %s190
      %p192 = pneg %p75
      %p193 = pneg %p72
      %p194 = scmp.lt.s32.totalorder %s19, 0
      %s195 = scalar_select %p194, %s19, 0
      %s196 = smul.addr %s195, 4
      %s197 = scalar_lea.vmem %s2, %s196
      %p198 = pneg %p101
      %p199 = pneg %p98
      %p200 = pneg %p129
      %p201 = pneg %p126
      %p202 = scmp.lt.s32.totalorder %s18, 1
      %s203 = scalar_select %p202, %s18, 1
      %p204 = scmp.lt.s32.totalorder %s19, 0
      %s205 = scalar_select %p204, %s19, 0
      %s206 = sadd.s32 %s205, %s203
      %s207 = smul.addr %s206, 4
      %s208 = scalar_lea.vmem %s3, %s207
      %p209 = scmp.lt.s32.totalorder %s18, 1
      %s210 = scalar_select %p209, %s18, 1
      %p211 = scmp.lt.s32.totalorder %s19, 0
      %s212 = scalar_select %p211, %s19, 0
      %s213 = sadd.s32 %s212, %s210
      %s214 = smul.addr %s213, 4
      %s215 = scalar_lea.vmem %s0, %s214
      %p216 = scmp.lt.s32.totalorder %s18, 1
      %s217 = scalar_select %p216, %s18, 1
      %s218 = smul.addr %s217, 8
      %s219 = scalar_lea.vmem %s1, %s218
      %p220 = scmp.lt.s32.totalorder %s19, 0
      %s221 = scalar_select %p220, %s19, 0
      %s222 = smul.addr %s221, 4
      %s223 = scalar_lea.vmem %s2, %s222
      %p224 = scmp.lt.s32.totalorder %s18, 1
      %s225 = scalar_select %p224, %s18, 1
      %p226 = scmp.lt.s32.totalorder %s19, 0
      %s227 = scalar_select %p226, %s19, 0
      %s228 = sadd.s32 %s227, %s225
      %s229 = smul.addr %s228, 4
      %s230 = scalar_lea.vmem %s3, %s229
      %v231 = vld [vmem:[%s215] sm:$0xf]
      %v232 = vld [vmem:[%s219] sm:$0xff]
      %vm233 = vcmask 64512
      %v235 = vsel %vm233, %v231, 0
      %237 = vmatprep.subr.mxu0 0.0
      %238 = vmatpush1.msra.mxu0 %v232
      %239 = vmatprep.subr.mxu0 0.0
      %240 = vmatpush1.msra.mxu0 0.0
      %241 = vmatprep.subr.mxu0 0.0
      %242 = vmatpush1.msra.mxu0 0.0
      %243 = vmatprep.subr.mxu0 0.0
      %244 = vmatpush1.msra.mxu0 0.0
      %245 = vmatprep.subr.mxu0 0.0
      %246 = vmatpush1.msra.mxu0 0.0
      %247 = vmatprep.subr.mxu0 0.0
      %248 = vmatpush1.msra.mxu0 0.0
      %249 = vmatprep.subr.mxu0 0.0
      %250 = vmatpush1.msra.mxu0 0.0
      %251 = vmatprep.subr.mxu0 0.0
      %252 = vmatpush1.msra.mxu0 0.0
      %253 = vmatprep.subr.mxu0 0.0
      %254 = vmatpush1.msra.mxu0 0.0
      %255 = vmatprep.subr.mxu0 0.0
      %256 = vmatpush1.msra.mxu0 0.0
      %257 = vmatprep.subr.mxu0 0.0
      %258 = vmatpush1.msra.mxu0 0.0
      %259 = vmatprep.subr.mxu0 0.0
      %260 = vmatpush1.msra.mxu0 0.0
      %261 = vmatprep.subr.mxu0 0.0
      %262 = vmatpush1.msra.mxu0 0.0
      %263 = vmatprep.subr.mxu0 0.0
      %264 = vmatpush1.msra.mxu0 0.0
      %265 = vmatprep.subr.mxu0 0.0
      %266 = vmatpush1.msra.mxu0 0.0
      %267 = vmatprep.subr.mxu0 0.0
      %268 = vmatpush1.msra.mxu0 0.0
      %269 = vmatprep.subr.mxu0 0.0
      %270 = vmatpush1.msra.mxu0 0.0
      %271 = vmatprep.subr.mxu0 0.0
      %272 = vmatpush1.msra.mxu0 0.0
      %273 = vmatprep.subr.mxu0 0.0
      %274 = vmatpush1.msra.mxu0 0.0
      %275 = vmatprep.subr.mxu0 0.0
      %276 = vmatpush1.msra.mxu0 0.0
      %277 = vmatprep.subr.mxu0 0.0
      %278 = vmatpush1.msra.mxu0 0.0
      %279 = vmatprep.subr.mxu0 0.0
      %280 = vmatpush1.msra.mxu0 0.0
      %281 = vmatprep.subr.mxu0 0.0
      %282 = vmatpush1.msra.mxu0 0.0
      %283 = vmatprep.subr.mxu0 0.0
      %284 = vmatpush1.msra.mxu0 0.0
      %285 = vmatprep.subr.mxu0 0.0
      %286 = vmatpush1.msra.mxu0 0.0
      %287 = vmatprep.subr.mxu0 0.0
      %288 = vmatpush1.msra.mxu0 0.0
      %289 = vmatprep.subr.mxu0 0.0
      %290 = vmatpush1.msra.mxu0 0.0
      %291 = vmatprep.subr.mxu0 0.0
      %292 = vmatpush1.msra.mxu0 0.0
      %293 = vmatprep.subr.mxu0 0.0
      %294 = vmatpush1.msra.mxu0 0.0
      %295 = vmatprep.subr.mxu0 0.0
      %296 = vmatpush1.msra.mxu0 0.0
      %297 = vmatprep.subr.mxu0 0.0
      %298 = vmatpush1.msra.mxu0 0.0
      %299 = vmatprep.subr.mxu0 0.0
      %300 = vmatpush1.msra.mxu0 0.0
      %301 = vmatprep.mubr.f32.mxu0 0.0
      %302 = vmatmul.mubr.f32.gmra.mrb[0].mxu0 %v235
      %v303 = vpop.f32.mrb[0].mxu0
      %v304 = vadd.f32 0.0, %v303
      %v305 = vpop.f32.mrb[0].mxu0
      %306 = vdwg.mxu0
      %v307 = vsub.f32 1.0, %v304
      %vm308 = vcmp.lt.f32.partialorder %v307, 0.0
      %v309 = vsel %vm308, 0.0, %v307
      %vm310 = vcmask 27648
      %v311 = vsel %vm310, %v309, inf
      %312 = vmin.xlane.f32.xlu0 %v311
      %v313 = vpop.xlane.xlu0 %312
      %v314 = vadd.f32 %v313, 1e-05
      %v315 = vrcp.pop %v314
      %v316 = vmul.f32 %v309, %v315
      %v317 = vmul.f32 %v316, -2.0
      %v318 = vmul.f32 %v317, 1.442695
      %v319 = vpow.pop %v318
      %v320 = vsel %vm310, %v319, 0.0
      %321 = vadd.xlane.f32.xlu0 %v320
      %v322 = vpop.xlane.xlu0 %321
      %v323 = vrcp.pop %v322
      %v324 = vmul.f32 %v319, %v323
      %v325 = vmul.f32 %v324, 0.9
      %v326 = vld [vmem:[%s223] sm:$0xf]
      %v327 = vmul.f32 %v326, 0.1
      %v328 = vadd.f32 %v325, %v327
      %329 = vst.msk [vmem:[%s230] sm:$0xf] %vm310, %v328
      %p330 = scmp.lt.s32.totalorder %s18, 1
      %s331 = scalar_select %p330, %s18, 1
      %p332 = scmp.lt.s32.totalorder %s19, 0
      %s333 = scalar_select %p332, %s19, 0
      %s334 = sadd.s32 %s333, %s331
      %s335 = smul.addr %s334, 4
      %s336 = scalar_lea.vmem %s3, %s335
      // Predicated region
      $region33: #{cobi_loss_forward.23} parent=31 // pred_check
        %p337 = pneg %p126
      $region34: #{cobi_loss_forward.23} parent=31 // pred_check_branch
        %339 = sbr.rel (%p337) target = $region36
      $region35: #{cobi_loss_forward.23} parent=31 // pred_region
        _
      $region36: #{cobi_loss_forward.23} parent=31 // pred_fallthru
        _
    $region32: #{cobi_loss_forward.23} parent=5 // pred_fallthru
      _
    %p340 = scmp.le.s32.totalorder 2, %s9
    // Predicated region
    $region37: #{cobi_loss_forward.23} parent=5 // pred_check
      %p341 = pneg %p340
    $region38: #{cobi_loss_forward.23} parent=5 // pred_check_branch
      %343 = sbr.rel (%p341) target = $region40
    $region39: #{cobi_loss_forward.23} parent=5 // pred_region
      %s344 = ssub.s32 %s9, 2
      // Predicated region
      $region41: #{cobi_loss_forward.23} parent=39 // pred_check
        %p345 = pneg %p132
      $region42: #{cobi_loss_forward.23} parent=39 // pred_check_branch
        %347 = sbr.rel (%p345) target = $region44
      $region43: #{cobi_loss_forward.23} parent=39 // pred_region
        %p348 = scmp.lt.s32.totalorder %s20, 1
        %s349 = scalar_select %p348, %s20, 1
        %p350 = scmp.lt.s32.totalorder %s21, 0
        %s351 = scalar_select %p350, %s21, 0
        %s352 = sadd.s32 %s351, %s349
        %s353 = smul.addr %s352, 4
        %s354 = scalar_lea.vmem %s3, %s353
      $region44: #{cobi_loss_forward.23} parent=39 // pred_fallthru
        _
    $region40: #{cobi_loss_forward.23} parent=5 // pred_fallthru
      _
  $region6: #{cobi_loss_forward.23} parent=0 // loop_footer
    %s13 = sadd.s32 1, %s9
  $region7: #{cobi_loss_forward.23} parent=0 // loop_footer_branch
    %8 = sbr.rel target = $region3
  $region8: #{cobi_loss_forward.23} parent=0 // loop_exit
    _

// kernel: cobi_loss_forward.16
$region0: #{cobi_loss_forward.16}
  #allocation0 [shape = 'u32[]', space=smem, size = 0x4, offset = 0x4, fixed_abs, tag = 'smem constant byte address 0x4 - core index']
  #allocation1 [shape = 'u32[144,128]{1,0:T(1,128)}', space=vmem, size = 0x12000, scoped, tag = 'internal scratch']
  %s0 = inlined_call_operand.vmem [shape: bf16[8,32], index: 0, kind: input, shape index: {}]
  %s1 = inlined_call_operand.vmem [shape: bf16[32,128], index: 1, kind: input, shape index: {}]
  %s2 = inlined_call_operand.vmem [shape: f32[1,128], index: 2, kind: input, shape index: {}]
  %s3 = inlined_call_operand.vmem [shape: bf16[8,128], index: 3, kind: output, shape index: {}]
  %s4 = sld [smem:[#allocation0]]
  $region22: #{cobi_loss_forward.16} parent=0
    _
  %s6 = ssub.s32 1, %s4
  %s7 = scalar_select 0, %s6, %s4
  // Predicated region
  $region2: #{cobi_loss_forward.16} parent=0 // pred_check
    _
  $region3: #{cobi_loss_forward.16} parent=0 // pred_check_branch
    %9 = sbr.rel (0) target = $region5
  $region4: #{cobi_loss_forward.16} parent=0 // pred_region
    _
  $region5: #{cobi_loss_forward.16} parent=0 // pred_fallthru
    _
  // Predicated region
  $region6: #{cobi_loss_forward.16} parent=0 // pred_check
    _
  $region7: #{cobi_loss_forward.16} parent=0 // pred_check_branch
    %11 = sbr.rel (0) target = $region9
  $region8: #{cobi_loss_forward.16} parent=0 // pred_region
    _
  $region9: #{cobi_loss_forward.16} parent=0 // pred_fallthru
    _
  // Predicated region
  $region10: #{cobi_loss_forward.16} parent=0 // pred_check
    _
  $region11: #{cobi_loss_forward.16} parent=0 // pred_check_branch
    %13 = sbr.rel (0) target = $region13
  $region12: #{cobi_loss_forward.16} parent=0 // pred_region
    _
  $region13: #{cobi_loss_forward.16} parent=0 // pred_fallthru
    _
  %v15 = vld [vmem:[%s0] sm:$0xf]
  %v16 = vld [vmem:[%s1] sm:$0xf]
  %v17 = vld [vmem:[%s1 + $0x4] sm:$0xf]
  %v18 = vld [vmem:[%s1 + $0x8] sm:$0xf]
  %v19 = vld [vmem:[%s1 + $0xc] sm:$0xf]
  %v20 = vld [vmem:[%s2] sm:$0x1]
  %v22 = vlaneseq
  %v23 = vshrl.u32 %v22, 7
  %v24 = vsub.s32 0, %v23
  %v25 = vrot.slane %v20, %v24
  %v31 = vunpack.c.l.b16 %v16
  %v32 = vunpack.c.l.b16 %v17
  %v33 = vunpack.c.l.b16 %v18
  %v34 = vunpack.c.l.b16 %v19
  %v35 = vpack.c.b16 %v32, %v31
  %v36 = vpack.c.b16 %v34, %v33
  %vm39 = vcmask 261120
  %v41 = vsel %vm39, %v15, 0
  %43 = vmatprep.subr.bf16.mxu0 0
  %44 = vmatpush1.bf16.msra.mxu0 %v35
  %45 = vmatprep.subr.bf16.mxu0 0
  %46 = vmatpush1.bf16.msra.mxu0 %v36
  %47 = vmatprep.subr.bf16.mxu0 0
  %48 = vmatpush1.bf16.msra.mxu0 0
  %49 = vmatprep.subr.bf16.mxu0 0
  %50 = vmatpush1.bf16.msra.mxu0 0
  %51 = vmatprep.subr.bf16.mxu0 0
  %52 = vmatpush1.bf16.msra.mxu0 0
  %53 = vmatprep.subr.bf16.mxu0 0
  %54 = vmatpush1.bf16.msra.mxu0 0
  %55 = vmatprep.subr.bf16.mxu0 0
  %56 = vmatpush1.bf16.msra.mxu0 0
  %57 = vmatprep.subr.bf16.mxu0 0
  %58 = vmatpush1.bf16.msra.mxu0 0
  %59 = vmatprep.subr.bf16.mxu0 0
  %60 = vmatpush1.bf16.msra.mxu0 0
  %61 = vmatprep.subr.bf16.mxu0 0
  %62 = vmatpush1.bf16.msra.mxu0 0
  %63 = vmatprep.subr.bf16.mxu0 0
  %64 = vmatpush1.bf16.msra.mxu0 0
  %65 = vmatprep.subr.bf16.mxu0 0
  %66 = vmatpush1.bf16.msra.mxu0 0
  %67 = vmatprep.subr.bf16.mxu0 0
  %68 = vmatpush1.bf16.msra.mxu0 0
  %69 = vmatprep.subr.bf16.mxu0 0
  %70 = vmatpush1.bf16.msra.mxu0 0
  %71 = vmatprep.subr.bf16.mxu0 0
  %72 = vmatpush1.bf16.msra.mxu0 0
  %73 = vmatprep.subr.bf16.mxu0 0
  %74 = vmatpush1.bf16.msra.mxu0 0
  %75 = vmatprep.mubr.bf16.mxu0 0
  %76 = vmatmul.mubr.bf16.gmra.mrb[0].mxu0 %v41
  %v77 = vpop.f32.mrb[0].mxu0
  %v78 = vadd.f32 %v25, %v77
  %v79 = vpop.f32.mrb[0].mxu0
  %v80 = vpop.f32.mrb[0].mxu0
  %v81 = vpop.f32.mrb[0].mxu0
  %82 = vdwg.mxu0
  %v83 = vmax.f32 %v78, 0.0
  %v84 = vpack.c.bf16 %v83, %v83
  %85 = vst [vmem:[%s3] sm:$0xf] %v84
  // Predicated region
  $region14: #{cobi_loss_forward.16} parent=0 // pred_check
    _
  $region15: #{cobi_loss_forward.16} parent=0 // pred_check_branch
    %87 = sbr.rel (0) target = $region17
  $region16: #{cobi_loss_forward.16} parent=0 // pred_region
    _
  $region17: #{cobi_loss_forward.16} parent=0 // pred_fallthru
    _
  // Predicated region
  $region18: #{cobi_loss_forward.16} parent=0 // pred_check
    _
  $region19: #{cobi_loss_forward.16} parent=0 // pred_check_branch
    %89 = sbr.rel (0) target = $region21
  $region20: #{cobi_loss_forward.16} parent=0 // pred_region
    _
  $region21: #{cobi_loss_forward.16} parent=0 // pred_fallthru
    _

// kernel: cobi_loss_forward.17
$region0: #{cobi_loss_forward.17}
  #allocation0 [shape = 'u32[]', space=smem, size = 0x4, offset = 0x4, fixed_abs, tag = 'smem constant byte address 0x4 - core index']
  #allocation1 [shape = 'u32[144,128]{1,0:T(1,128)}', space=vmem, size = 0x12000, scoped, tag = 'internal scratch']
  %s0 = inlined_call_operand.vmem [shape: bf16[8,576], index: 0, kind: input, shape index: {}]
  %s1 = inlined_call_operand.vmem [shape: bf16[576,128], index: 1, kind: input, shape index: {}]
  %s2 = inlined_call_operand.vmem [shape: f32[1,128], index: 2, kind: input, shape index: {}]
  %s3 = inlined_call_operand.vmem [shape: bf16[8,128], index: 3, kind: output, shape index: {}]
  %s4 = sld [smem:[#allocation0]]
  $region22: #{cobi_loss_forward.17} parent=0
    _
  %s6 = ssub.s32 1, %s4
  %s7 = scalar_select 0, %s6, %s4
  // Predicated region
  $region2: #{cobi_loss_forward.17} parent=0 // pred_check
    _
  $region3: #{cobi_loss_forward.17} parent=0 // pred_check_branch
    %9 = sbr.rel (0) target = $region5
  $region4: #{cobi_loss_forward.17} parent=0 // pred_region
    _
  $region5: #{cobi_loss_forward.17} parent=0 // pred_fallthru
    _
  // Predicated region
  $region6: #{cobi_loss_forward.17} parent=0 // pred_check
    _
  $region7: #{cobi_loss_forward.17} parent=0 // pred_check_branch
    %11 = sbr.rel (0) target = $region9
  $region8: #{cobi_loss_forward.17} parent=0 // pred_region
    _
  $region9: #{cobi_loss_forward.17} parent=0 // pred_fallthru
    _
  // Predicated region
  $region10: #{cobi_loss_forward.17} parent=0 // pred_check
    _
  $region11: #{cobi_loss_forward.17} parent=0 // pred_check_branch
    %13 = sbr.rel (0) target = $region13
  $region12: #{cobi_loss_forward.17} parent=0 // pred_region
    _
  $region13: #{cobi_loss_forward.17} parent=0 // pred_fallthru
    _
  %v15 = vld [vmem:[%s0] sm:$0xff]
  %v16 = vld [vmem:[%s0 + $0x8] sm:$0xff]
  %v17 = vld [vmem:[%s0 + $0x10] sm:$0xf]
  %v18 = vld [vmem:[%s1] sm:$0xf]
  %v19 = vld [vmem:[%s1 + $0x4] sm:$0xf]
  %v20 = vld [vmem:[%s1 + $0x8] sm:$0xf]
  %v21 = vld [vmem:[%s1 + $0xc] sm:$0xf]
  %v22 = vld [vmem:[%s1 + $0x10] sm:$0xf]
  %v23 = vld [vmem:[%s1 + $0x14] sm:$0xf]
  %v24 = vld [vmem:[%s1 + $0x18] sm:$0xf]
  %v25 = vld [vmem:[%s1 + $0x1c] sm:$0xf]
  %v26 = vld [vmem:[%s1 + $0x20] sm:$0xf]
  %v27 = vld [vmem:[%s1 + $0x24] sm:$0xf]
  %v28 = vld [vmem:[%s1 + $0x28] sm:$0xf]
  %v29 = vld [vmem:[%s1 + $0x2c] sm:$0xf]
  %v30 = vld [vmem:[%s1 + $0x30] sm:$0xf]
  %v31 = vld [vmem:[%s1 + $0x34] sm:$0xf]
  %v32 = vld [vmem:[%s1 + $0x38] sm:$0xf]
  %v33 = vld [vmem:[%s1 + $0x3c] sm:$0xf]
  %v34 = vld [vmem:[%s1 + $0x40] sm:$0xf]
  %v35 = vld [vmem:[%s1 + $0x44] sm:$0xf]
  %v36 = vld [vmem:[%s1 + $0x48] sm:$0xf]
  %v37 = vld [vmem:[%s1 + $0x4c] sm:$0xf]
  %v38 = vld [vmem:[%s1 + $0x50] sm:$0xf]
  %v39 = vld [vmem:[%s1 + $0x54] sm:$0xf]
  %v40 = vld [vmem:[%s1 + $0x58] sm:$0xf]
  %v41 = vld [vmem:[%s1 + $0x5c] sm:$0xf]
  %v42 = vld [vmem:[%s1 + $0x60] sm:$0xf]
  %v43 = vld [vmem:[%s1 + $0x64] sm:$0xf]
  %v44 = vld [vmem:[%s1 + $0x68] sm:$0xf]
  %v45 = vld [vmem:[%s1 + $0x6c] sm:$0xf]
  %v46 = vld [vmem:[%s1 + $0x70] sm:$0xf]
  %v47 = vld [vmem:[%s1 + $0x74] sm:$0xf]
  %v48 = vld [vmem:[%s1 + $0x78] sm:$0xf]
  %v49 = vld [vmem:[%s1 + $0x7c] sm:$0xf]
  %v50 = vld [vmem:[%s1 + $0x80] sm:$0xf]
  %v51 = vld [vmem:[%s1 + $0x84] sm:$0xf]
  %v52 = vld [vmem:[%s1 + $0x88] sm:$0xf]
  %v53 = vld [vmem:[%s1 + $0x8c] sm:$0xf]
  %v54 = vld [vmem:[%s1 + $0x90] sm:$0xf]
  %v55 = vld [vmem:[%s1 + $0x94] sm:$0xf]
  %v56 = vld [vmem:[%s1 + $0x98] sm:$0xf]
  %v57 = vld [vmem:[%s1 + $0x9c] sm:$0xf]
  %v58 = vld [vmem:[%s1 + $0xa0] sm:$0xf]
  %v59 = vld [vmem:[%s1 + $0xa4] sm:$0xf]
  %v60 = vld [vmem:[%s1 + $0xa8] sm:$0xf]
  %v61 = vld [vmem:[%s1 + $0xac] sm:$0xf]
  %v62 = vld [vmem:[%s1 + $0xb0] sm:$0xf]
  %v63 = vld [vmem:[%s1 + $0xb4] sm:$0xf]
  %v64 = vld [vmem:[%s1 + $0xb8] sm:$0xf]
  %v65 = vld [vmem:[%s1 + $0xbc] sm:$0xf]
  %v66 = vld [vmem:[%s1 + $0xc0] sm:$0xf]
  %v67 = vld [vmem:[%s1 + $0xc4] sm:$0xf]
  %v68 = vld [vmem:[%s1 + $0xc8] sm:$0xf]
  %v69 = vld [vmem:[%s1 + $0xcc] sm:$0xf]
  %v70 = vld [vmem:[%s1 + $0xd0] sm:$0xf]
  %v71 = vld [vmem:[%s1 + $0xd4] sm:$0xf]
  %v72 = vld [vmem:[%s1 + $0xd8] sm:$0xf]
  %v73 = vld [vmem:[%s1 + $0xdc] sm:$0xf]
  %v74 = vld [vmem:[%s1 + $0xe0] sm:$0xf]
  %v75 = vld [vmem:[%s1 + $0xe4] sm:$0xf]
  %v76 = vld [vmem:[%s1 + $0xe8] sm:$0xf]
  %v77 = vld [vmem:[%s1 + $0xec] sm:$0xf]
  %v78 = vld [vmem:[%s1 + $0xf0] sm:$0xf]
  %v79 = vld [vmem:[%s1 + $0xf4] sm:$0xf]
  %v80 = vld [vmem:[%s1 + $0xf8] sm:$0xf]
  %v81 = vld [vmem:[%s1 + $0xfc] sm:$0xf]
  %v82 = vld [vmem:[%s1 + $0x100] sm:$0xf]
  %v83 = vld [vmem:[%s1 + $0x104] sm:$0xf]
  %v84 = vld [vmem:[%s1 + $0x108] sm:$0xf]
  %v85 = vld [vmem:[%s1 + $0x10c] sm:$0xf]
  %v86 = vld [vmem:[%s1 + $0x110] sm:$0xf]
  %v87 = vld [vmem:[%s1 + $0x114] sm:$0xf]
  %v88 = vld [vmem:[%s1 + $0x118] sm:$0xf]
  %v89 = vld [vmem:[%s1 + $0x11c] sm:$0xf]
  %v90 = vld [vmem:[%s2] sm:$0x1]
  %v92 = vlaneseq
  %v93 = vshrl.u32 %v92, 7
  %v94 = vsub.s32 0, %v93
  %v95 = vrot.slane %v90, %v94
  %v100 = vunpack.c.l.b16 %v15
  %v101 = vunpack.c.h.b16 %v15
  %v102 = vunpack.c.l.b16 %v16
  %v103 = vunpack.c.h.b16 %v16
  %v104 = vunpack.c.l.b16 %v17
  %v105 = vpack.c.b16 %v100, %v100
  %v106 = vpack.c.b16 %v101, %v101
  %v107 = vpack.c.b16 %v102, %v102
  %v108 = vpack.c.b16 %v103, %v103
  %v109 = vpack.c.b16 %v104, %v104
  %v186 = vunpack.c.l.b16 %v18
  %v187 = vunpack.c.l.b16 %v19
  %v188 = vunpack.c.l.b16 %v20
  %v189 = vunpack.c.l.b16 %v21
  %v190 = vunpack.c.l.b16 %v22
  %v191 = vunpack.c.l.b16 %v23
  %v192 = vunpack.c.l.b16 %v24
  %v193 = vunpack.c.l.b16 %v25
  %v194 = vunpack.c.l.b16 %v26
  %v195 = vunpack.c.l.b16 %v27
  %v196 = vunpack.c.l.b16 %v28
  %v197 = vunpack.c.l.b16 %v29
  %v198 = vunpack.c.l.b16 %v30
  %v199 = vunpack.c.l.b16 %v31
  %v200 = vunpack.c.l.b16 %v32
  %v201 = vunpack.c.l.b16 %v33
  %v202 = vunpack.c.l.b16 %v34
  %v203 = vunpack.c.l.b16 %v35
  %v204 = vunpack.c.l.b16 %v36
  %v205 = vunpack.c.l.b16 %v37
  %v206 = vunpack.c.l.b16 %v38
  %v207 = vunpack.c.l.b16 %v39
  %v208 = vunpack.c.l.b16 %v40
  %v209 = vunpack.c.l.b16 %v41
  %v210 = vunpack.c.l.b16 %v42
  %v211 = vunpack.c.l.b16 %v43
  %v212 = vunpack.c.l.b16 %v44
  %v213 = vunpack.c.l.b16 %v45
  %v214 = vunpack.c.l.b16 %v46
  %v215 = vunpack.c.l.b16 %v47
  %v216 = vunpack.c.l.b16 %v48
  %v217 = vunpack.c.l.b16 %v49
  %v218 = vunpack.c.l.b16 %v50
  %v219 = vunpack.c.l.b16 %v51
  %v220 = vunpack.c.l.b16 %v52
  %v221 = vunpack.c.l.b16 %v53
  %v222 = vunpack.c.l.b16 %v54
  %v223 = vunpack.c.l.b16 %v55
  %v224 = vunpack.c.l.b16 %v56
  %v225 = vunpack.c.l.b16 %v57
  %v226 = vunpack.c.l.b16 %v58
  %v227 = vunpack.c.l.b16 %v59
  %v228 = vunpack.c.l.b16 %v60
  %v229 = vunpack.c.l.b16 %v61
  %v230 = vunpack.c.l.b16 %v62
  %v231 = vunpack.c.l.b16 %v63
  %v232 = vunpack.c.l.b16 %v64
  %v233 = vunpack.c.l.b16 %v65
  %v234 = vunpack.c.l.b16 %v66
  %v235 = vunpack.c.l.b16 %v67
  %v236 = vunpack.c.l.b16 %v68
  %v237 = vunpack.c.l.b16 %v69
  %v238 = vunpack.c.l.b16 %v70
  %v239 = vunpack.c.l.b16 %v71
  %v240 = vunpack.c.l.b16 %v72
  %v241 = vunpack.c.l.b16 %v73
  %v242 = vunpack.c.l.b16 %v74
  %v243 = vunpack.c.l.b16 %v75
  %v244 = vunpack.c.l.b16 %v76
  %v245 = vunpack.c.l.b16 %v77
  %v246 = vunpack.c.l.b16 %v78
  %v247 = vunpack.c.l.b16 %v79
  %v248 = vunpack.c.l.b16 %v80
  %v249 = vunpack.c.l.b16 %v81
  %v250 = vunpack.c.l.b16 %v82
  %v251 = vunpack.c.l.b16 %v83
  %v252 = vunpack.c.l.b16 %v84
  %v253 = vunpack.c.l.b16 %v85
  %v254 = vunpack.c.l.b16 %v86
  %v255 = vunpack.c.l.b16 %v87
  %v256 = vunpack.c.l.b16 %v88
  %v257 = vunpack.c.l.b16 %v89
  %v258 = vpack.c.b16 %v187, %v186
  %v259 = vpack.c.b16 %v189, %v188
  %v260 = vpack.c.b16 %v191, %v190
  %v261 = vpack.c.b16 %v193, %v192
  %v262 = vpack.c.b16 %v195, %v194
  %v263 = vpack.c.b16 %v197, %v196
  %v264 = vpack.c.b16 %v199, %v198
  %v265 = vpack.c.b16 %v201, %v200
  %v266 = vpack.c.b16 %v203, %v202
  %v267 = vpack.c.b16 %v205, %v204
  %v268 = vpack.c.b16 %v207, %v206
  %v269 = vpack.c.b16 %v209, %v208
  %v270 = vpack.c.b16 %v211, %v210
  %v271 = vpack.c.b16 %v213, %v212
  %v272 = vpack.c.b16 %v215, %v214
  %v273 = vpack.c.b16 %v217, %v216
  %v274 = vpack.c.b16 %v219, %v218
  %v275 = vpack.c.b16 %v221, %v220
  %v276 = vpack.c.b16 %v223, %v222
  %v277 = vpack.c.b16 %v225, %v224
  %v278 = vpack.c.b16 %v227, %v226
  %v279 = vpack.c.b16 %v229, %v228
  %v280 = vpack.c.b16 %v231, %v230
  %v281 = vpack.c.b16 %v233, %v232
  %v282 = vpack.c.b16 %v235, %v234
  %v283 = vpack.c.b16 %v237, %v236
  %v284 = vpack.c.b16 %v239, %v238
  %v285 = vpack.c.b16 %v241, %v240
  %v286 = vpack.c.b16 %v243, %v242
  %v287 = vpack.c.b16 %v245, %v244
  %v288 = vpack.c.b16 %v247, %v246
  %v289 = vpack.c.b16 %v249, %v248
  %v290 = vpack.c.b16 %v251, %v250
  %v291 = vpack.c.b16 %v253, %v252
  %v292 = vpack.c.b16 %v255, %v254
  %v293 = vpack.c.b16 %v257, %v256
  %vm330 = vcmask 523264
  %v332 = vsel %vm330, %v109, 0
  %334 = vmatprep.subr.bf16.mxu0 0
  %335 = vmatpush1.bf16.msra.mxu0 %v258
  %336 = vmatprep.subr.bf16.mxu0 0
  %337 = vmatpush1.bf16.msra.mxu0 %v259
  %338 = vmatprep.subr.bf16.mxu0 0
  %339 = vmatpush1.bf16.msra.mxu0 %v260
  %340 = vmatprep.subr.bf16.mxu0 0
  %341 = vmatpush1.bf16.msra.mxu0 %v261
  %342 = vmatprep.subr.bf16.mxu0 0
  %343 = vmatpush1.bf16.msra.mxu0 %v262
  %344 = vmatprep.subr.bf16.mxu0 0
  %345 = vmatpush1.bf16.msra.mxu0 %v263
  %346 = vmatprep.subr.bf16.mxu0 0
  %347 = vmatpush1.bf16.msra.mxu0 %v264
  %348 = vmatprep.subr.bf16.mxu0 0
  %349 = vmatpush1.bf16.msra.mxu0 %v265
  %350 = vmatprep.subr.bf16.mxu0 0
  %351 = vmatpush1.bf16.msra.mxu0 %v266
  %352 = vmatprep.subr.bf16.mxu0 0
  %353 = vmatpush1.bf16.msra.mxu0 %v267
  %354 = vmatprep.subr.bf16.mxu0 0
  %355 = vmatpush1.bf16.msra.mxu0 %v268
  %356 = vmatprep.subr.bf16.mxu0 0
  %357 = vmatpush1.bf16.msra.mxu0 %v269
  %358 = vmatprep.subr.bf16.mxu0 0
  %359 = vmatpush1.bf16.msra.mxu0 %v270
  %360 = vmatprep.subr.bf16.mxu0 0
  %361 = vmatpush1.bf16.msra.mxu0 %v271
  %362 = vmatprep.subr.bf16.mxu0 0
  %363 = vmatpush1.bf16.msra.mxu0 %v272
  %364 = vmatprep.subr.bf16.mxu0 0
  %365 = vmatpush1.bf16.msra.mxu0 %v273
  %366 = vmatprep.mubr.bf16.mxu0 %v106
  %367 = vmatmul.mubr.bf16.gmra.mrb[0].mxu0 %v105
  %v368 = vpop.f32.mrb[0].mxu0
  %v369 = vadd.f32 %v95, %v368
  %v370 = vpop.f32.mrb[0].mxu0
  %v371 = vpop.f32.mrb[0].mxu0
  %v372 = vpop.f32.mrb[0].mxu0
  %373 = vdwg.mxu0
  %374 = vmatprep.subr.bf16.mxu0 0
  %375 = vmatpush1.bf16.msra.mxu0 %v274
  %376 = vmatprep.subr.bf16.mxu0 0
  %377 = vmatpush1.bf16.msra.mxu0 %v275
  %378 = vmatprep.subr.bf16.mxu0 0
  %379 = vmatpush1.bf16.msra.mxu0 %v276
  %380 = vmatprep.subr.bf16.mxu0 0
  %381 = vmatpush1.bf16.msra.mxu0 %v277
  %382 = vmatprep.subr.bf16.mxu0 0
  %383 = vmatpush1.bf16.msra.mxu0 %v278
  %384 = vmatprep.subr.bf16.mxu0 0
  %385 = vmatpush1.bf16.msra.mxu0 %v279
  %386 = vmatprep.subr.bf16.mxu0 0
  %387 = vmatpush1.bf16.msra.mxu0 %v280
  %388 = vmatprep.subr.bf16.mxu0 0
  %389 = vmatpush1.bf16.msra.mxu0 %v281
  %390 = vmatprep.subr.bf16.mxu0 0
  %391 = vmatpush1.bf16.msra.mxu0 %v282
  %392 = vmatprep.subr.bf16.mxu0 0
  %393 = vmatpush1.bf16.msra.mxu0 %v283
  %394 = vmatprep.subr.bf16.mxu0 0
  %395 = vmatpush1.bf16.msra.mxu0 %v284
  %396 = vmatprep.subr.bf16.mxu0 0
  %397 = vmatpush1.bf16.msra.mxu0 %v285
  %398 = vmatprep.subr.bf16.mxu0 0
  %399 = vmatpush1.bf16.msra.mxu0 %v286
  %400 = vmatprep.subr.bf16.mxu0 0
  %401 = vmatpush1.bf16.msra.mxu0 %v287
  %402 = vmatprep.subr.bf16.mxu0 0
  %403 = vmatpush1.bf16.msra.mxu0 %v288
  %404 = vmatprep.subr.bf16.mxu0 0
  %405 = vmatpush1.bf16.msra.mxu0 %v289
  %406 = vmatprep.mubr.bf16.mxu0 %v108
  %407 = vmatmul.mubr.bf16.gmra.mrb[0].mxu0 %v107
  %v408 = vpop.f32.mrb[0].mxu0
  %v409 = vadd.f32 %v369, %v408
  %v410 = vpop.f32.mrb[0].mxu0
  %v411 = vpop.f32.mrb[0].mxu0
  %v412 = vpop.f32.mrb[0].mxu0
  %413 = vdwg.mxu0
  %414 = vmatprep.subr.bf16.mxu0 0
  %415 = vmatpush1.bf16.msra.mxu0 %v290
  %416 = vmatprep.subr.bf16.mxu0 0
  %417 = vmatpush1.bf16.msra.mxu0 %v291
  %418 = vmatprep.subr.bf16.mxu0 0
  %419 = vmatpush1.bf16.msra.mxu0 %v292
  %420 = vmatprep.subr.bf16.mxu0 0
  %421 = vmatpush1.bf16.msra.mxu0 %v293
  %422 = vmatprep.subr.bf16.mxu0 0
  %423 = vmatpush1.bf16.msra.mxu0 0
  %424 = vmatprep.subr.bf16.mxu0 0
  %425 = vmatpush1.bf16.msra.mxu0 0
  %426 = vmatprep.subr.bf16.mxu0 0
  %427 = vmatpush1.bf16.msra.mxu0 0
  %428 = vmatprep.subr.bf16.mxu0 0
  %429 = vmatpush1.bf16.msra.mxu0 0
  %430 = vmatprep.subr.bf16.mxu0 0
  %431 = vmatpush1.bf16.msra.mxu0 0
  %432 = vmatprep.subr.bf16.mxu0 0
  %433 = vmatpush1.bf16.msra.mxu0 0
  %434 = vmatprep.subr.bf16.mxu0 0
  %435 = vmatpush1.bf16.msra.mxu0 0
  %436 = vmatprep.subr.bf16.mxu0 0
  %437 = vmatpush1.bf16.msra.mxu0 0
  %438 = vmatprep.subr.bf16.mxu0 0
  %439 = vmatpush1.bf16.msra.mxu0 0
  %440 = vmatprep.subr.bf16.mxu0 0
  %441 = vmatpush1.bf16.msra.mxu0 0
  %442 = vmatprep.subr.bf16.mxu0 0
  %443 = vmatpush1.bf16.msra.mxu0 0
  %444 = vmatprep.subr.bf16.mxu0 0
  %445 = vmatpush1.bf16.msra.mxu0 0
  %446 = vmatprep.mubr.bf16.mxu0 0
  %447 = vmatmul.mubr.bf16.gmra.mrb[0].mxu0 %v332
  %v448 = vpop.f32.mrb[0].mxu0
  %v449 = vadd.f32 %v409, %v448
  %v450 = vpop.f32.mrb[0].mxu0
  %v451 = vpop.f32.mrb[0].mxu0
  %v452 = vpop.f32.mrb[0].mxu0
  %453 = vdwg.mxu0
  %v454 = vmax.f32 %v449, 0.0
  %v455 = vpack.c.bf16 %v454, %v454
  %456 = vst [vmem:[%s3] sm:$0xf] %v455
  // Predicated region
  $region14: #{cobi_loss_forward.17} parent=0 // pred_check
    _
  $region15: #{cobi_loss_forward.17} parent=0 // pred_check_branch
    %458 = sbr.rel (0) target = $region17
  $region16: #{cobi_loss_forward.17} parent=0 // pred_region
    _
  $region17: #{cobi_loss_forward.17} parent=0 // pred_fallthru
    _
  // Predicated region
  $region18: #{cobi_loss_forward.17} parent=0 // pred_check
    _
  $region19: #{cobi_loss_forward.17} parent=0 // pred_check_branch
    %460 = sbr.rel (0) target = $region21
  $region20: #{cobi_loss_forward.17} parent=0 // pred_region
    _
  $region21: #{cobi_loss_forward.17} parent=0 // pred_fallthru
    _

// kernel: cobi_loss_forward.18
$region0: #{cobi_loss_forward.18}
  #allocation0 [shape = 'u32[]', space=smem, size = 0x4, offset = 0x4, fixed_abs, tag = 'smem constant byte address 0x4 - core index']
  #allocation1 [shape = 'u32[144,128]{1,0:T(1,128)}', space=vmem, size = 0x12000, scoped, tag = 'internal scratch']
  %s0 = inlined_call_operand.vmem [shape: bf16[2,576], index: 0, kind: input, shape index: {}]
  %s1 = inlined_call_operand.vmem [shape: bf16[576,128], index: 1, kind: input, shape index: {}]
  %s2 = inlined_call_operand.vmem [shape: f32[1,128], index: 2, kind: input, shape index: {}]
  %s3 = inlined_call_operand.vmem [shape: bf16[2,128], index: 3, kind: output, shape index: {}]
  %s4 = sld [smem:[#allocation0]]
  $region22: #{cobi_loss_forward.18} parent=0
    _
  %s6 = ssub.s32 1, %s4
  %s7 = scalar_select 0, %s6, %s4
  // Predicated region
  $region2: #{cobi_loss_forward.18} parent=0 // pred_check
    _
  $region3: #{cobi_loss_forward.18} parent=0 // pred_check_branch
    %9 = sbr.rel (0) target = $region5
  $region4: #{cobi_loss_forward.18} parent=0 // pred_region
    _
  $region5: #{cobi_loss_forward.18} parent=0 // pred_fallthru
    _
  // Predicated region
  $region6: #{cobi_loss_forward.18} parent=0 // pred_check
    _
  $region7: #{cobi_loss_forward.18} parent=0 // pred_check_branch
    %11 = sbr.rel (0) target = $region9
  $region8: #{cobi_loss_forward.18} parent=0 // pred_region
    _
  $region9: #{cobi_loss_forward.18} parent=0 // pred_fallthru
    _
  // Predicated region
  $region10: #{cobi_loss_forward.18} parent=0 // pred_check
    _
  $region11: #{cobi_loss_forward.18} parent=0 // pred_check_branch
    %13 = sbr.rel (0) target = $region13
  $region12: #{cobi_loss_forward.18} parent=0 // pred_region
    _
  $region13: #{cobi_loss_forward.18} parent=0 // pred_fallthru
    _
  %v15 = vld [vmem:[%s0] sm:$0x1f]
  %v16 = vld [vmem:[%s1] sm:$0xf]
  %v17 = vld [vmem:[%s1 + $0x4] sm:$0xf]
  %v18 = vld [vmem:[%s1 + $0x8] sm:$0xf]
  %v19 = vld [vmem:[%s1 + $0xc] sm:$0xf]
  %v20 = vld [vmem:[%s1 + $0x10] sm:$0xf]
  %v21 = vld [vmem:[%s1 + $0x14] sm:$0xf]
  %v22 = vld [vmem:[%s1 + $0x18] sm:$0xf]
  %v23 = vld [vmem:[%s1 + $0x1c] sm:$0xf]
  %v24 = vld [vmem:[%s1 + $0x20] sm:$0xf]
  %v25 = vld [vmem:[%s1 + $0x24] sm:$0xf]
  %v26 = vld [vmem:[%s1 + $0x28] sm:$0xf]
  %v27 = vld [vmem:[%s1 + $0x2c] sm:$0xf]
  %v28 = vld [vmem:[%s1 + $0x30] sm:$0xf]
  %v29 = vld [vmem:[%s1 + $0x34] sm:$0xf]
  %v30 = vld [vmem:[%s1 + $0x38] sm:$0xf]
  %v31 = vld [vmem:[%s1 + $0x3c] sm:$0xf]
  %v32 = vld [vmem:[%s1 + $0x40] sm:$0xf]
  %v33 = vld [vmem:[%s1 + $0x44] sm:$0xf]
  %v34 = vld [vmem:[%s1 + $0x48] sm:$0xf]
  %v35 = vld [vmem:[%s1 + $0x4c] sm:$0xf]
  %v36 = vld [vmem:[%s1 + $0x50] sm:$0xf]
  %v37 = vld [vmem:[%s1 + $0x54] sm:$0xf]
  %v38 = vld [vmem:[%s1 + $0x58] sm:$0xf]
  %v39 = vld [vmem:[%s1 + $0x5c] sm:$0xf]
  %v40 = vld [vmem:[%s1 + $0x60] sm:$0xf]
  %v41 = vld [vmem:[%s1 + $0x64] sm:$0xf]
  %v42 = vld [vmem:[%s1 + $0x68] sm:$0xf]
  %v43 = vld [vmem:[%s1 + $0x6c] sm:$0xf]
  %v44 = vld [vmem:[%s1 + $0x70] sm:$0xf]
  %v45 = vld [vmem:[%s1 + $0x74] sm:$0xf]
  %v46 = vld [vmem:[%s1 + $0x78] sm:$0xf]
  %v47 = vld [vmem:[%s1 + $0x7c] sm:$0xf]
  %v48 = vld [vmem:[%s1 + $0x80] sm:$0xf]
  %v49 = vld [vmem:[%s1 + $0x84] sm:$0xf]
  %v50 = vld [vmem:[%s1 + $0x88] sm:$0xf]
  %v51 = vld [vmem:[%s1 + $0x8c] sm:$0xf]
  %v52 = vld [vmem:[%s1 + $0x90] sm:$0xf]
  %v53 = vld [vmem:[%s1 + $0x94] sm:$0xf]
  %v54 = vld [vmem:[%s1 + $0x98] sm:$0xf]
  %v55 = vld [vmem:[%s1 + $0x9c] sm:$0xf]
  %v56 = vld [vmem:[%s1 + $0xa0] sm:$0xf]
  %v57 = vld [vmem:[%s1 + $0xa4] sm:$0xf]
  %v58 = vld [vmem:[%s1 + $0xa8] sm:$0xf]
  %v59 = vld [vmem:[%s1 + $0xac] sm:$0xf]
  %v60 = vld [vmem:[%s1 + $0xb0] sm:$0xf]
  %v61 = vld [vmem:[%s1 + $0xb4] sm:$0xf]
  %v62 = vld [vmem:[%s1 + $0xb8] sm:$0xf]
  %v63 = vld [vmem:[%s1 + $0xbc] sm:$0xf]
  %v64 = vld [vmem:[%s1 + $0xc0] sm:$0xf]
  %v65 = vld [vmem:[%s1 + $0xc4] sm:$0xf]
  %v66 = vld [vmem:[%s1 + $0xc8] sm:$0xf]
  %v67 = vld [vmem:[%s1 + $0xcc] sm:$0xf]
  %v68 = vld [vmem:[%s1 + $0xd0] sm:$0xf]
  %v69 = vld [vmem:[%s1 + $0xd4] sm:$0xf]
  %v70 = vld [vmem:[%s1 + $0xd8] sm:$0xf]
  %v71 = vld [vmem:[%s1 + $0xdc] sm:$0xf]
  %v72 = vld [vmem:[%s1 + $0xe0] sm:$0xf]
  %v73 = vld [vmem:[%s1 + $0xe4] sm:$0xf]
  %v74 = vld [vmem:[%s1 + $0xe8] sm:$0xf]
  %v75 = vld [vmem:[%s1 + $0xec] sm:$0xf]
  %v76 = vld [vmem:[%s1 + $0xf0] sm:$0xf]
  %v77 = vld [vmem:[%s1 + $0xf4] sm:$0xf]
  %v78 = vld [vmem:[%s1 + $0xf8] sm:$0xf]
  %v79 = vld [vmem:[%s1 + $0xfc] sm:$0xf]
  %v80 = vld [vmem:[%s1 + $0x100] sm:$0xf]
  %v81 = vld [vmem:[%s1 + $0x104] sm:$0xf]
  %v82 = vld [vmem:[%s1 + $0x108] sm:$0xf]
  %v83 = vld [vmem:[%s1 + $0x10c] sm:$0xf]
  %v84 = vld [vmem:[%s1 + $0x110] sm:$0xf]
  %v85 = vld [vmem:[%s1 + $0x114] sm:$0xf]
  %v86 = vld [vmem:[%s1 + $0x118] sm:$0xf]
  %v87 = vld [vmem:[%s1 + $0x11c] sm:$0xf]
  %v88 = vld [vmem:[%s2] sm:$0x1]
  %v90 = vlaneseq
  %v91 = vshrl.u32 %v90, 7
  %v92 = vsub.s32 0, %v91
  %v93 = vrot.slane %v88, %v92
  %v96 = vcombine.high %v15, %v15
  %v98 = vunpack.c.l.s4 1966171168
  %v99 = vunpack.c.0.s8 %v98
  %v100 = vlaneseq
  %v101 = vshrl.u32 %v100, 7
  %v102 = vsub.s32 %v99, %v101
  %v103 = vrot.slane %v15, %v102
  %v105 = vunpack.c.l.s4 1966171168
  %v106 = vunpack.c.0.s8 %v105
  %v107 = vlaneseq
  %v108 = vshrl.u32 %v107, 7
  %v109 = vsub.s32 %v106, %v108
  %v110 = vrot.slane %v96, %v109
  %v111 = vcombine.high %v103, %v103
  %v113 = vunpack.c.l.s4 1966171168
  %v114 = vunpack.c.0.s8 %v113
  %v115 = vlaneseq
  %v116 = vshrl.u32 %v115, 7
  %v117 = vsub.s32 %v114, %v116
  %v118 = vrot.slane %v103, %v117
  %v120 = vunpack.c.l.s4 1966171168
  %v121 = vunpack.c.0.s8 %v120
  %v122 = vlaneseq
  %v123 = vshrl.u32 %v122, 7
  %v124 = vsub.s32 %v121, %v123
  %v125 = vrot.slane %v110, %v124
  %v127 = vunpack.c.l.s4 1966171168
  %v128 = vunpack.c.0.s8 %v127
  %v129 = vlaneseq
  %v130 = vshrl.u32 %v129, 7
  %v131 = vsub.s32 %v128, %v130
  %v132 = vrot.slane %v111, %v131
  %v133 = vcombine.high %v118, %v118
  %v134 = vcombine.high %v132, %v132
  %v211 = vunpack.c.l.b16 %v16
  %v212 = vunpack.c.l.b16 %v17
  %v213 = vunpack.c.l.b16 %v18
  %v214 = vunpack.c.l.b16 %v19
  %v215 = vunpack.c.l.b16 %v20
  %v216 = vunpack.c.l.b16 %v21
  %v217 = vunpack.c.l.b16 %v22
  %v218 = vunpack.c.l.b16 %v23
  %v219 = vunpack.c.l.b16 %v24
  %v220 = vunpack.c.l.b16 %v25
  %v221 = vunpack.c.l.b16 %v26
  %v222 = vunpack.c.l.b16 %v27
  %v223 = vunpack.c.l.b16 %v28
  %v224 = vunpack.c.l.b16 %v29
  %v225 = vunpack.c.l.b16 %v30
  %v226 = vunpack.c.l.b16 %v31
  %v227 = vunpack.c.l.b16 %v32
  %v228 = vunpack.c.l.b16 %v33
  %v229 = vunpack.c.l.b16 %v34
  %v230 = vunpack.c.l.b16 %v35
  %v231 = vunpack.c.l.b16 %v36
  %v232 = vunpack.c.l.b16 %v37
  %v233 = vunpack.c.l.b16 %v38
  %v234 = vunpack.c.l.b16 %v39
  %v235 = vunpack.c.l.b16 %v40
  %v236 = vunpack.c.l.b16 %v41
  %v237 = vunpack.c.l.b16 %v42
  %v238 = vunpack.c.l.b16 %v43
  %v239 = vunpack.c.l.b16 %v44
  %v240 = vunpack.c.l.b16 %v45
  %v241 = vunpack.c.l.b16 %v46
  %v242 = vunpack.c.l.b16 %v47
  %v243 = vunpack.c.l.b16 %v48
  %v244 = vunpack.c.l.b16 %v49
  %v245 = vunpack.c.l.b16 %v50
  %v246 = vunpack.c.l.b16 %v51
  %v247 = vunpack.c.l.b16 %v52
  %v248 = vunpack.c.l.b16 %v53
  %v249 = vunpack.c.l.b16 %v54
  %v250 = vunpack.c.l.b16 %v55
  %v251 = vunpack.c.l.b16 %v56
  %v252 = vunpack.c.l.b16 %v57
  %v253 = vunpack.c.l.b16 %v58
  %v254 = vunpack.c.l.b16 %v59
  %v255 = vunpack.c.l.b16 %v60
  %v256 = vunpack.c.l.b16 %v61
  %v257 = vunpack.c.l.b16 %v62
  %v258 = vunpack.c.l.b16 %v63
  %v259 = vunpack.c.l.b16 %v64
  %v260 = vunpack.c.l.b16 %v65
  %v261 = vunpack.c.l.b16 %v66
  %v262 = vunpack.c.l.b16 %v67
  %v263 = vunpack.c.l.b16 %v68
  %v264 = vunpack.c.l.b16 %v69
  %v265 = vunpack.c.l.b16 %v70
  %v266 = vunpack.c.l.b16 %v71
  %v267 = vunpack.c.l.b16 %v72
  %v268 = vunpack.c.l.b16 %v73
  %v269 = vunpack.c.l.b16 %v74
  %v270 = vunpack.c.l.b16 %v75
  %v271 = vunpack.c.l.b16 %v76
  %v272 = vunpack.c.l.b16 %v77
  %v273 = vunpack.c.l.b16 %v78
  %v274 = vunpack.c.l.b16 %v79
  %v275 = vunpack.c.l.b16 %v80
  %v276 = vunpack.c.l.b16 %v81
  %v277 = vunpack.c.l.b16 %v82
  %v278 = vunpack.c.l.b16 %v83
  %v279 = vunpack.c.l.b16 %v84
  %v280 = vunpack.c.l.b16 %v85
  %v281 = vunpack.c.l.b16 %v86
  %v282 = vunpack.c.l.b16 %v87
  %v283 = vpack.c.b16 %v212, %v211
  %v284 = vpack.c.b16 %v214, %v213
  %v285 = vpack.c.b16 %v216, %v215
  %v286 = vpack.c.b16 %v218, %v217
  %v287 = vpack.c.b16 %v220, %v219
  %v288 = vpack.c.b16 %v222, %v221
  %v289 = vpack.c.b16 %v224, %v223
  %v290 = vpack.c.b16 %v226, %v225
  %v291 = vpack.c.b16 %v228, %v227
  %v292 = vpack.c.b16 %v230, %v229
  %v293 = vpack.c.b16 %v232, %v231
  %v294 = vpack.c.b16 %v234, %v233
  %v295 = vpack.c.b16 %v236, %v235
  %v296 = vpack.c.b16 %v238, %v237
  %v297 = vpack.c.b16 %v240, %v239
  %v298 = vpack.c.b16 %v242, %v241
  %v299 = vpack.c.b16 %v244, %v243
  %v300 = vpack.c.b16 %v246, %v245
  %v301 = vpack.c.b16 %v248, %v247
  %v302 = vpack.c.b16 %v250, %v249
  %v303 = vpack.c.b16 %v252, %v251
  %v304 = vpack.c.b16 %v254, %v253
  %v305 = vpack.c.b16 %v256, %v255
  %v306 = vpack.c.b16 %v258, %v257
  %v307 = vpack.c.b16 %v260, %v259
  %v308 = vpack.c.b16 %v262, %v261
  %v309 = vpack.c.b16 %v264, %v263
  %v310 = vpack.c.b16 %v266, %v265
  %v311 = vpack.c.b16 %v268, %v267
  %v312 = vpack.c.b16 %v270, %v269
  %v313 = vpack.c.b16 %v272, %v271
  %v314 = vpack.c.b16 %v274, %v273
  %v315 = vpack.c.b16 %v276, %v275
  %v316 = vpack.c.b16 %v278, %v277
  %v317 = vpack.c.b16 %v280, %v279
  %v318 = vpack.c.b16 %v282, %v281
  %vm355 = vcmask 523264
  %v357 = vsel %vm355, %v125, 0
  %359 = vmatprep.subr.bf16.mxu0 0
  %360 = vmatpush1.bf16.msra.mxu0 %v283
  %361 = vmatprep.subr.bf16.mxu0 0
  %362 = vmatpush1.bf16.msra.mxu0 %v284
  %363 = vmatprep.subr.bf16.mxu0 0
  %364 = vmatpush1.bf16.msra.mxu0 %v285
  %365 = vmatprep.subr.bf16.mxu0 0
  %366 = vmatpush1.bf16.msra.mxu0 %v286
  %367 = vmatprep.subr.bf16.mxu0 0
  %368 = vmatpush1.bf16.msra.mxu0 %v287
  %369 = vmatprep.subr.bf16.mxu0 0
  %370 = vmatpush1.bf16.msra.mxu0 %v288
  %371 = vmatprep.subr.bf16.mxu0 0
  %372 = vmatpush1.bf16.msra.mxu0 %v289
  %373 = vmatprep.subr.bf16.mxu0 0
  %374 = vmatpush1.bf16.msra.mxu0 %v290
  %375 = vmatprep.subr.bf16.mxu0 0
  %376 = vmatpush1.bf16.msra.mxu0 %v291
  %377 = vmatprep.subr.bf16.mxu0 0
  %378 = vmatpush1.bf16.msra.mxu0 %v292
  %379 = vmatprep.subr.bf16.mxu0 0
  %380 = vmatpush1.bf16.msra.mxu0 %v293
  %381 = vmatprep.subr.bf16.mxu0 0
  %382 = vmatpush1.bf16.msra.mxu0 %v294
  %383 = vmatprep.subr.bf16.mxu0 0
  %384 = vmatpush1.bf16.msra.mxu0 %v295
  %385 = vmatprep.subr.bf16.mxu0 0
  %386 = vmatpush1.bf16.msra.mxu0 %v296
  %387 = vmatprep.subr.bf16.mxu0 0
  %388 = vmatpush1.bf16.msra.mxu0 %v297
  %389 = vmatprep.subr.bf16.mxu0 0
  %390 = vmatpush1.bf16.msra.mxu0 %v298
  %391 = vmatprep.mubr.bf16.mxu0 %v132
  %392 = vmatmul.mubr.bf16.gmra.mrb[0].mxu0 %v118
  %v393 = vpop.f32.mrb[0].mxu0
  %v394 = vadd.f32 %v93, %v393
  %v395 = vpop.f32.mrb[0].mxu0
  %v396 = vpop.f32.mrb[0].mxu0
  %v397 = vpop.f32.mrb[0].mxu0
  %398 = vdwg.mxu0
  %399 = vmatprep.subr.bf16.mxu0 0
  %400 = vmatpush1.bf16.msra.mxu0 %v299
  %401 = vmatprep.subr.bf16.mxu0 0
  %402 = vmatpush1.bf16.msra.mxu0 %v300
  %403 = vmatprep.subr.bf16.mxu0 0
  %404 = vmatpush1.bf16.msra.mxu0 %v301
  %405 = vmatprep.subr.bf16.mxu0 0
  %406 = vmatpush1.bf16.msra.mxu0 %v302
  %407 = vmatprep.subr.bf16.mxu0 0
  %408 = vmatpush1.bf16.msra.mxu0 %v303
  %409 = vmatprep.subr.bf16.mxu0 0
  %410 = vmatpush1.bf16.msra.mxu0 %v304
  %411 = vmatprep.subr.bf16.mxu0 0
  %412 = vmatpush1.bf16.msra.mxu0 %v305
  %413 = vmatprep.subr.bf16.mxu0 0
  %414 = vmatpush1.bf16.msra.mxu0 %v306
  %415 = vmatprep.subr.bf16.mxu0 0
  %416 = vmatpush1.bf16.msra.mxu0 %v307
  %417 = vmatprep.subr.bf16.mxu0 0
  %418 = vmatpush1.bf16.msra.mxu0 %v308
  %419 = vmatprep.subr.bf16.mxu0 0
  %420 = vmatpush1.bf16.msra.mxu0 %v309
  %421 = vmatprep.subr.bf16.mxu0 0
  %422 = vmatpush1.bf16.msra.mxu0 %v310
  %423 = vmatprep.subr.bf16.mxu0 0
  %424 = vmatpush1.bf16.msra.mxu0 %v311
  %425 = vmatprep.subr.bf16.mxu0 0
  %426 = vmatpush1.bf16.msra.mxu0 %v312
  %427 = vmatprep.subr.bf16.mxu0 0
  %428 = vmatpush1.bf16.msra.mxu0 %v313
  %429 = vmatprep.subr.bf16.mxu0 0
  %430 = vmatpush1.bf16.msra.mxu0 %v314
  %431 = vmatprep.mubr.bf16.mxu0 %v134
  %432 = vmatmul.mubr.bf16.gmra.mrb[0].mxu0 %v133
  %v433 = vpop.f32.mrb[0].mxu0
  %v434 = vadd.f32 %v394, %v433
  %v435 = vpop.f32.mrb[0].mxu0
  %v436 = vpop.f32.mrb[0].mxu0
  %v437 = vpop.f32.mrb[0].mxu0
  %438 = vdwg.mxu0
  %439 = vmatprep.subr.bf16.mxu0 0
  %440 = vmatpush1.bf16.msra.mxu0 %v315
  %441 = vmatprep.subr.bf16.mxu0 0
  %442 = vmatpush1.bf16.msra.mxu0 %v316
  %443 = vmatprep.subr.bf16.mxu0 0
  %444 = vmatpush1.bf16.msra.mxu0 %v317
  %445 = vmatprep.subr.bf16.mxu0 0
  %446 = vmatpush1.bf16.msra.mxu0 %v318
  %447 = vmatprep.subr.bf16.mxu0 0
  %448 = vmatpush1.bf16.msra.mxu0 0
  %449 = vmatprep.subr.bf16.mxu0 0
  %450 = vmatpush1.bf16.msra.mxu0 0
  %451 = vmatprep.subr.bf16.mxu0 0
  %452 = vmatpush1.bf16.msra.mxu0 0
  %453 = vmatprep.subr.bf16.mxu0 0
  %454 = vmatpush1.bf16.msra.mxu0 0
  %455 = vmatprep.subr.bf16.mxu0 0
  %456 = vmatpush1.bf16.msra.mxu0 0
  %457 = vmatprep.subr.bf16.mxu0 0
  %458 = vmatpush1.bf16.msra.mxu0 0
  %459 = vmatprep.subr.bf16.mxu0 0
  %460 = vmatpush1.bf16.msra.mxu0 0
  %461 = vmatprep.subr.bf16.mxu0 0
  %462 = vmatpush1.bf16.msra.mxu0 0
  %463 = vmatprep.subr.bf16.mxu0 0
  %464 = vmatpush1.bf16.msra.mxu0 0
  %465 = vmatprep.subr.bf16.mxu0 0
  %466 = vmatpush1.bf16.msra.mxu0 0
  %467 = vmatprep.subr.bf16.mxu0 0
  %468 = vmatpush1.bf16.msra.mxu0 0
  %469 = vmatprep.subr.bf16.mxu0 0
  %470 = vmatpush1.bf16.msra.mxu0 0
  %471 = vmatprep.mubr.bf16.mxu0 0
  %472 = vmatmul.mubr.bf16.gmra.mrb[0].mxu0 %v357
  %v473 = vpop.f32.mrb[0].mxu0
  %v474 = vadd.f32 %v434, %v473
  %v475 = vpop.f32.mrb[0].mxu0
  %v476 = vpop.f32.mrb[0].mxu0
  %v477 = vpop.f32.mrb[0].mxu0
  %478 = vdwg.mxu0
  %v479 = vmax.f32 %v474, 0.0
  %v480 = vpack.c.bf16 %v479, %v479
  %481 = vst [vmem:[%s3] sm:$0x1] %v480
  // Predicated region
  $region14: #{cobi_loss_forward.18} parent=0 // pred_check
    _
  $region15: #{cobi_loss_forward.18} parent=0 // pred_check_branch
    %483 = sbr.rel (0) target = $region17
  $region16: #{cobi_loss_forward.18} parent=0 // pred_region
    _
  $region17: #{cobi_loss_forward.18} parent=0 // pred_fallthru
    _
  // Predicated region
  $region18: #{cobi_loss_forward.18} parent=0 // pred_check
    _
  $region19: #{cobi_loss_forward.18} parent=0 // pred_check_branch
    %485 = sbr.rel (0) target = $region21
  $region20: #{cobi_loss_forward.18} parent=0 // pred_region
    _
  $region21: #{cobi_loss_forward.18} parent=0 // pred_fallthru
    _

// kernel: cobi_loss_forward.19
$region0: #{cobi_loss_forward.19}
  #allocation0 [shape = 'u32[]', space=smem, size = 0x4, offset = 0x4, fixed_abs, tag = 'smem constant byte address 0x4 - core index']
  #allocation1 [shape = 'u32[144,128]{1,0:T(1,128)}', space=vmem, size = 0x12000, scoped, tag = 'internal scratch']
  %s0 = inlined_call_operand.vmem [shape: bf16[2,1152], index: 0, kind: input, shape index: {}]
  %s1 = inlined_call_operand.vmem [shape: bf16[1152,128], index: 1, kind: input, shape index: {}]
  %s2 = inlined_call_operand.vmem [shape: f32[1,128], index: 2, kind: input, shape index: {}]
  %s3 = inlined_call_operand.vmem [shape: bf16[2,128], index: 3, kind: output, shape index: {}]
  %s4 = sld [smem:[#allocation0]]
  $region22: #{cobi_loss_forward.19} parent=0
    _
  %s6 = ssub.s32 1, %s4
  %s7 = scalar_select 0, %s6, %s4
  // Predicated region
  $region2: #{cobi_loss_forward.19} parent=0 // pred_check
    _
  $region3: #{cobi_loss_forward.19} parent=0 // pred_check_branch
    %9 = sbr.rel (0) target = $region5
  $region4: #{cobi_loss_forward.19} parent=0 // pred_region
    _
  $region5: #{cobi_loss_forward.19} parent=0 // pred_fallthru
    _
  // Predicated region
  $region6: #{cobi_loss_forward.19} parent=0 // pred_check
    _
  $region7: #{cobi_loss_forward.19} parent=0 // pred_check_branch
    %11 = sbr.rel (0) target = $region9
  $region8: #{cobi_loss_forward.19} parent=0 // pred_region
    _
  $region9: #{cobi_loss_forward.19} parent=0 // pred_fallthru
    _
  // Predicated region
  $region10: #{cobi_loss_forward.19} parent=0 // pred_check
    _
  $region11: #{cobi_loss_forward.19} parent=0 // pred_check_branch
    %13 = sbr.rel (0) target = $region13
  $region12: #{cobi_loss_forward.19} parent=0 // pred_region
    _
  $region13: #{cobi_loss_forward.19} parent=0 // pred_fallthru
    _
  %v15 = vld [vmem:[%s0] sm:$0xff]
  %v16 = vld [vmem:[%s0 + $0x8] sm:$0x1]
  %v17 = vld [vmem:[%s1] sm:$0xf]
  %v18 = vld [vmem:[%s1 + $0x4] sm:$0xf]
  %v19 = vld [vmem:[%s1 + $0x8] sm:$0xf]
  %v20 = vld [vmem:[%s1 + $0xc] sm:$0xf]
  %v21 = vld [vmem:[%s1 + $0x10] sm:$0xf]
  %v22 = vld [vmem:[%s1 + $0x14] sm:$0xf]
  %v23 = vld [vmem:[%s1 + $0x18] sm:$0xf]
  %v24 = vld [vmem:[%s1 + $0x1c] sm:$0xf]
  %v25 = vld [vmem:[%s1 + $0x20] sm:$0xf]
  %v26 = vld [vmem:[%s1 + $0x24] sm:$0xf]
  %v27 = vld [vmem:[%s1 + $0x28] sm:$0xf]
  %v28 = vld [vmem:[%s1 + $0x2c] sm:$0xf]
  %v29 = vld [vmem:[%s1 + $0x30] sm:$0xf]
  %v30 = vld [vmem:[%s1 + $0x34] sm:$0xf]
  %v31 = vld [vmem:[%s1 + $0x38] sm:$0xf]
  %v32 = vld [vmem:[%s1 + $0x3c] sm:$0xf]
  %v33 = vld [vmem:[%s1 + $0x40] sm:$0xf]
  %v34 = vld [vmem:[%s1 + $0x44] sm:$0xf]
  %v35 = vld [vmem:[%s1 + $0x48] sm:$0xf]
  %v36 = vld [vmem:[%s1 + $0x4c] sm:$0xf]
  %v37 = vld [vmem:[%s1 + $0x50] sm:$0xf]
  %v38 = vld [vmem:[%s1 + $0x54] sm:$0xf]
  %v39 = vld [vmem:[%s1 + $0x58] sm:$0xf]
  %v40 = vld [vmem:[%s1 + $0x5c] sm:$0xf]
  %v41 = vld [vmem:[%s1 + $0x60] sm:$0xf]
  %v42 = vld [vmem:[%s1 + $0x64] sm:$0xf]
  %v43 = vld [vmem:[%s1 + $0x68] sm:$0xf]
  %v44 = vld [vmem:[%s1 + $0x6c] sm:$0xf]
  %v45 = vld [vmem:[%s1 + $0x70] sm:$0xf]
  %v46 = vld [vmem:[%s1 + $0x74] sm:$0xf]
  %v47 = vld [vmem:[%s1 + $0x78] sm:$0xf]
  %v48 = vld [vmem:[%s1 + $0x7c] sm:$0xf]
  %v49 = vld [vmem:[%s1 + $0x80] sm:$0xf]
  %v50 = vld [vmem:[%s1 + $0x84] sm:$0xf]
  %v51 = vld [vmem:[%s1 + $0x88] sm:$0xf]
  %v52 = vld [vmem:[%s1 + $0x8c] sm:$0xf]
  %v53 = vld [vmem:[%s1 + $0x90] sm:$0xf]
  %v54 = vld [vmem:[%s1 + $0x94] sm:$0xf]
  %v55 = vld [vmem:[%s1 + $0x98] sm:$0xf]
  %v56 = vld [vmem:[%s1 + $0x9c] sm:$0xf]
  %v57 = vld [vmem:[%s1 + $0xa0] sm:$0xf]
  %v58 = vld [vmem:[%s1 + $0xa4] sm:$0xf]
  %v59 = vld [vmem:[%s1 + $0xa8] sm:$0xf]
  %v60 = vld [vmem:[%s1 + $0xac] sm:$0xf]
  %v61 = vld [vmem:[%s1 + $0xb0] sm:$0xf]
  %v62 = vld [vmem:[%s1 + $0xb4] sm:$0xf]
  %v63 = vld [vmem:[%s1 + $0xb8] sm:$0xf]
  %v64 = vld [vmem:[%s1 + $0xbc] sm:$0xf]
  %v65 = vld [vmem:[%s1 + $0xc0] sm:$0xf]
  %v66 = vld [vmem:[%s1 + $0xc4] sm:$0xf]
  %v67 = vld [vmem:[%s1 + $0xc8] sm:$0xf]
  %v68 = vld [vmem:[%s1 + $0xcc] sm:$0xf]
  %v69 = vld [vmem:[%s1 + $0xd0] sm:$0xf]
  %v70 = vld [vmem:[%s1 + $0xd4] sm:$0xf]
  %v71 = vld [vmem:[%s1 + $0xd8] sm:$0xf]
  %v72 = vld [vmem:[%s1 + $0xdc] sm:$0xf]
  %v73 = vld [vmem:[%s1 + $0xe0] sm:$0xf]
  %v74 = vld [vmem:[%s1 + $0xe4] sm:$0xf]
  %v75 = vld [vmem:[%s1 + $0xe8] sm:$0xf]
  %v76 = vld [vmem:[%s1 + $0xec] sm:$0xf]
  %v77 = vld [vmem:[%s1 + $0xf0] sm:$0xf]
  %v78 = vld [vmem:[%s1 + $0xf4] sm:$0xf]
  %v79 = vld [vmem:[%s1 + $0xf8] sm:$0xf]
  %v80 = vld [vmem:[%s1 + $0xfc] sm:$0xf]
  %v81 = vld [vmem:[%s1 + $0x100] sm:$0xf]
  %v82 = vld [vmem:[%s1 + $0x104] sm:$0xf]
  %v83 = vld [vmem:[%s1 + $0x108] sm:$0xf]
  %v84 = vld [vmem:[%s1 + $0x10c] sm:$0xf]
  %v85 = vld [vmem:[%s1 + $0x110] sm:$0xf]
  %v86 = vld [vmem:[%s1 + $0x114] sm:$0xf]
  %v87 = vld [vmem:[%s1 + $0x118] sm:$0xf]
  %v88 = vld [vmem:[%s1 + $0x11c] sm:$0xf]
  %v89 = vld [vmem:[%s1 + $0x120] sm:$0xf]
  %v90 = vld [vmem:[%s1 + $0x124] sm:$0xf]
  %v91 = vld [vmem:[%s1 + $0x128] sm:$0xf]
  %v92 = vld [vmem:[%s1 + $0x12c] sm:$0xf]
  %v93 = vld [vmem:[%s1 + $0x130] sm:$0xf]
  %v94 = vld [vmem:[%s1 + $0x134] sm:$0xf]
  %v95 = vld [vmem:[%s1 + $0x138] sm:$0xf]
  %v96 = vld [vmem:[%s1 + $0x13c] sm:$0xf]
  %v97 = vld [vmem:[%s1 + $0x140] sm:$0xf]
  %v98 = vld [vmem:[%s1 + $0x144] sm:$0xf]
  %v99 = vld [vmem:[%s1 + $0x148] sm:$0xf]
  %v100 = vld [vmem:[%s1 + $0x14c] sm:$0xf]
  %v101 = vld [vmem:[%s1 + $0x150] sm:$0xf]
  %v102 = vld [vmem:[%s1 + $0x154] sm:$0xf]
  %v103 = vld [vmem:[%s1 + $0x158] sm:$0xf]
  %v104 = vld [vmem:[%s1 + $0x15c] sm:$0xf]
  %v105 = vld [vmem:[%s1 + $0x160] sm:$0xf]
  %v106 = vld [vmem:[%s1 + $0x164] sm:$0xf]
  %v107 = vld [vmem:[%s1 + $0x168] sm:$0xf]
  %v108 = vld [vmem:[%s1 + $0x16c] sm:$0xf]
  %v109 = vld [vmem:[%s1 + $0x170] sm:$0xf]
  %v110 = vld [vmem:[%s1 + $0x174] sm:$0xf]
  %v111 = vld [vmem:[%s1 + $0x178] sm:$0xf]
  %v112 = vld [vmem:[%s1 + $0x17c] sm:$0xf]
  %v113 = vld [vmem:[%s1 + $0x180] sm:$0xf]
  %v114 = vld [vmem:[%s1 + $0x184] sm:$0xf]
  %v115 = vld [vmem:[%s1 + $0x188] sm:$0xf]
  %v116 = vld [vmem:[%s1 + $0x18c] sm:$0xf]
  %v117 = vld [vmem:[%s1 + $0x190] sm:$0xf]
  %v118 = vld [vmem:[%s1 + $0x194] sm:$0xf]
  %v119 = vld [vmem:[%s1 + $0x198] sm:$0xf]
  %v120 = vld [vmem:[%s1 + $0x19c] sm:$0xf]
  %v121 = vld [vmem:[%s1 + $0x1a0] sm:$0xf]
  %v122 = vld [vmem:[%s1 + $0x1a4] sm:$0xf]
  %v123 = vld [vmem:[%s1 + $0x1a8] sm:$0xf]
  %v124 = vld [vmem:[%s1 + $0x1ac] sm:$0xf]
  %v125 = vld [vmem:[%s1 + $0x1b0] sm:$0xf]
  %v126 = vld [vmem:[%s1 + $0x1b4] sm:$0xf]
  %v127 = vld [vmem:[%s1 + $0x1b8] sm:$0xf]
  %v128 = vld [vmem:[%s1 + $0x1bc] sm:$0xf]
  %v129 = vld [vmem:[%s1 + $0x1c0] sm:$0xf]
  %v130 = vld [vmem:[%s1 + $0x1c4] sm:$0xf]
  %v131 = vld [vmem:[%s1 + $0x1c8] sm:$0xf]
  %v132 = vld [vmem:[%s1 + $0x1cc] sm:$0xf]
  %v133 = vld [vmem:[%s1 + $0x1d0] sm:$0xf]
  %v134 = vld [vmem:[%s1 + $0x1d4] sm:$0xf]
  %v135 = vld [vmem:[%s1 + $0x1d8] sm:$0xf]
  %v136 = vld [vmem:[%s1 + $0x1dc] sm:$0xf]
  %v137 = vld [vmem:[%s1 + $0x1e0] sm:$0xf]
  %v138 = vld [vmem:[%s1 + $0x1e4] sm:$0xf]
  %v139 = vld [vmem:[%s1 + $0x1e8] sm:$0xf]
  %v140 = vld [vmem:[%s1 + $0x1ec] sm:$0xf]
  %v141 = vld [vmem:[%s1 + $0x1f0] sm:$0xf]
  %v142 = vld [vmem:[%s1 + $0x1f4] sm:$0xf]
  %v143 = vld [vmem:[%s1 + $0x1f8] sm:$0xf]
  %v144 = vld [vmem:[%s1 + $0x1fc] sm:$0xf]
  %v145 = vld [vmem:[%s1 + $0x200] sm:$0xf]
  %v146 = vld [vmem:[%s1 + $0x204] sm:$0xf]
  %v147 = vld [vmem:[%s1 + $0x208] sm:$0xf]
  %v148 = vld [vmem:[%s1 + $0x20c] sm:$0xf]
  %v149 = vld [vmem:[%s1 + $0x210] sm:$0xf]
  %v150 = vld [vmem:[%s1 + $0x214] sm:$0xf]
  %v151 = vld [vmem:[%s1 + $0x218] sm:$0xf]
  %v152 = vld [vmem:[%s1 + $0x21c] sm:$0xf]
  %v153 = vld [vmem:[%s1 + $0x220] sm:$0xf]
  %v154 = vld [vmem:[%s1 + $0x224] sm:$0xf]
  %v155 = vld [vmem:[%s1 + $0x228] sm:$0xf]
  %v156 = vld [vmem:[%s1 + $0x22c] sm:$0xf]
  %v157 = vld [vmem:[%s1 + $0x230] sm:$0xf]
  %v158 = vld [vmem:[%s1 + $0x234] sm:$0xf]
  %v159 = vld [vmem:[%s1 + $0x238] sm:$0xf]
  %v160 = vld [vmem:[%s1 + $0x23c] sm:$0xf]
  %v161 = vld [vmem:[%s2] sm:$0x1]
  %v163 = vlaneseq
  %v164 = vshrl.u32 %v163, 7
  %v165 = vsub.s32 0, %v164
  %v166 = vrot.slane %v161, %v165
  %v170 = vcombine.high %v15, %v15
  %v172 = vunpack.c.l.s4 1966171168
  %v173 = vunpack.c.0.s8 %v172
  %v174 = vlaneseq
  %v175 = vshrl.u32 %v174, 7
  %v176 = vsub.s32 %v173, %v175
  %v177 = vrot.slane %v15, %v176
  %v179 = vunpack.c.l.s4 1966171168
  %v180 = vunpack.c.0.s8 %v179
  %v181 = vlaneseq
  %v182 = vshrl.u32 %v181, 7
  %v183 = vsub.s32 %v180, %v182
  %v184 = vrot.slane %v170, %v183
  %v185 = vcombine.high %v177, %v177
  %v186 = vcombine.high %v184, %v184
  %v188 = vunpack.c.l.s4 1966171168
  %v189 = vunpack.c.0.s8 %v188
  %v190 = vlaneseq
  %v191 = vshrl.u32 %v190, 7
  %v192 = vsub.s32 %v189, %v191
  %v193 = vrot.slane %v177, %v192
  %v195 = vunpack.c.l.s4 1966171168
  %v196 = vunpack.c.0.s8 %v195
  %v197 = vlaneseq
  %v198 = vshrl.u32 %v197, 7
  %v199 = vsub.s32 %v196, %v198
  %v200 = vrot.slane %v184, %v199
  %v202 = vunpack.c.l.s4 1966171168
  %v203 = vunpack.c.0.s8 %v202
  %v204 = vlaneseq
  %v205 = vshrl.u32 %v204, 7
  %v206 = vsub.s32 %v203, %v205
  %v207 = vrot.slane %v185, %v206
  %v209 = vunpack.c.l.s4 1966171168
  %v210 = vunpack.c.0.s8 %v209
  %v211 = vlaneseq
  %v212 = vshrl.u32 %v211, 7
  %v213 = vsub.s32 %v210, %v212
  %v214 = vrot.slane %v186, %v213
  %v215 = vcombine.high %v193, %v193
  %v216 = vcombine.high %v200, %v200
  %v217 = vcombine.high %v207, %v207
  %v218 = vcombine.high %v214, %v214
  %v220 = vunpack.c.l.s4 1966171168
  %v221 = vunpack.c.0.s8 %v220
  %v222 = vlaneseq
  %v223 = vshrl.u32 %v222, 7
  %v224 = vsub.s32 %v221, %v223
  %v225 = vrot.slane %v16, %v224
  %v227 = vunpack.c.l.s4 1966171168
  %v228 = vunpack.c.0.s8 %v227
  %v229 = vlaneseq
  %v230 = vshrl.u32 %v229, 7
  %v231 = vsub.s32 %v228, %v230
  %v232 = vrot.slane %v225, %v231
  %v386 = vunpack.c.l.b16 %v17
  %v387 = vunpack.c.l.b16 %v18
  %v388 = vunpack.c.l.b16 %v19
  %v389 = vunpack.c.l.b16 %v20
  %v390 = vunpack.c.l.b16 %v21
  %v391 = vunpack.c.l.b16 %v22
  %v392 = vunpack.c.l.b16 %v23
  %v393 = vunpack.c.l.b16 %v24
  %v394 = vunpack.c.l.b16 %v25
  %v395 = vunpack.c.l.b16 %v26
  %v396 = vunpack.c.l.b16 %v27
  %v397 = vunpack.c.l.b16 %v28
  %v398 = vunpack.c.l.b16 %v29
  %v399 = vunpack.c.l.b16 %v30
  %v400 = vunpack.c.l.b16 %v31
  %v401 = vunpack.c.l.b16 %v32
  %v402 = vunpack.c.l.b16 %v33
  %v403 = vunpack.c.l.b16 %v34
  %v404 = vunpack.c.l.b16 %v35
  %v405 = vunpack.c.l.b16 %v36
  %v406 = vunpack.c.l.b16 %v37
  %v407 = vunpack.c.l.b16 %v38
  %v408 = vunpack.c.l.b16 %v39
  %v409 = vunpack.c.l.b16 %v40
  %v410 = vunpack.c.l.b16 %v41
  %v411 = vunpack.c.l.b16 %v42
  %v412 = vunpack.c.l.b16 %v43
  %v413 = vunpack.c.l.b16 %v44
  %v414 = vunpack.c.l.b16 %v45
  %v415 = vunpack.c.l.b16 %v46
  %v416 = vunpack.c.l.b16 %v47
  %v417 = vunpack.c.l.b16 %v48
  %v418 = vunpack.c.l.b16 %v49
  %v419 = vunpack.c.l.b16 %v50
  %v420 = vunpack.c.l.b16 %v51
  %v421 = vunpack.c.l.b16 %v52
  %v422 = vunpack.c.l.b16 %v53
  %v423 = vunpack.c.l.b16 %v54
  %v424 = vunpack.c.l.b16 %v55
  %v425 = vunpack.c.l.b16 %v56
  %v426 = vunpack.c.l.b16 %v57
  %v427 = vunpack.c.l.b16 %v58
  %v428 = vunpack.c.l.b16 %v59
  %v429 = vunpack.c.l.b16 %v60
  %v430 = vunpack.c.l.b16 %v61
  %v431 = vunpack.c.l.b16 %v62
  %v432 = vunpack.c.l.b16 %v63
  %v433 = vunpack.c.l.b16 %v64
  %v434 = vunpack.c.l.b16 %v65
  %v435 = vunpack.c.l.b16 %v66
  %v436 = vunpack.c.l.b16 %v67
  %v437 = vunpack.c.l.b16 %v68
  %v438 = vunpack.c.l.b16 %v69
  %v439 = vunpack.c.l.b16 %v70
  %v440 = vunpack.c.l.b16 %v71
  %v441 = vunpack.c.l.b16 %v72
  %v442 = vunpack.c.l.b16 %v73
  %v443 = vunpack.c.l.b16 %v74
  %v444 = vunpack.c.l.b16 %v75
  %v445 = vunpack.c.l.b16 %v76
  %v446 = vunpack.c.l.b16 %v77
  %v447 = vunpack.c.l.b16 %v78
  %v448 = vunpack.c.l.b16 %v79
  %v449 = vunpack.c.l.b16 %v80
  %v450 = vunpack.c.l.b16 %v81
  %v451 = vunpack.c.l.b16 %v82
  %v452 = vunpack.c.l.b16 %v83
  %v453 = vunpack.c.l.b16 %v84
  %v454 = vunpack.c.l.b16 %v85
  %v455 = vunpack.c.l.b16 %v86
  %v456 = vunpack.c.l.b16 %v87
  %v457 = vunpack.c.l.b16 %v88
  %v458 = vunpack.c.l.b16 %v89
  %v459 = vunpack.c.l.b16 %v90
  %v460 = vunpack.c.l.b16 %v91
  %v461 = vunpack.c.l.b16 %v92
  %v462 = vunpack.c.l.b16 %v93
  %v463 = vunpack.c.l.b16 %v94
  %v464 = vunpack.c.l.b16 %v95
  %v465 = vunpack.c.l.b16 %v96
  %v466 = vunpack.c.l.b16 %v97
  %v467 = vunpack.c.l.b16 %v98
  %v468 = vunpack.c.l.b16 %v99
  %v469 = vunpack.c.l.b16 %v100
  %v470 = vunpack.c.l.b16 %v101
  %v471 = vunpack.c.l.b16 %v102
  %v472 = vunpack.c.l.b16 %v103
  %v473 = vunpack.c.l.b16 %v104
  %v474 = vunpack.c.l.b16 %v105
  %v475 = vunpack.c.l.b16 %v106
  %v476 = vunpack.c.l.b16 %v107
  %v477 = vunpack.c.l.b16 %v108
  %v478 = vunpack.c.l.b16 %v109
  %v479 = vunpack.c.l.b16 %v110
  %v480 = vunpack.c.l.b16 %v111
  %v481 = vunpack.c.l.b16 %v112
  %v482 = vunpack.c.l.b16 %v113
  %v483 = vunpack.c.l.b16 %v114
  %v484 = vunpack.c.l.b16 %v115
  %v485 = vunpack.c.l.b16 %v116
  %v486 = vunpack.c.l.b16 %v117
  %v487 = vunpack.c.l.b16 %v118
  %v488 = vunpack.c.l.b16 %v119
  %v489 = vunpack.c.l.b16 %v120
  %v490 = vunpack.c.l.b16 %v121
  %v491 = vunpack.c.l.b16 %v122
  %v492 = vunpack.c.l.b16 %v123
  %v493 = vunpack.c.l.b16 %v124
  %v494 = vunpack.c.l.b16 %v125
  %v495 = vunpack.c.l.b16 %v126
  %v496 = vunpack.c.l.b16 %v127
  %v497 = vunpack.c.l.b16 %v128
  %v498 = vunpack.c.l.b16 %v129
  %v499 = vunpack.c.l.b16 %v130
  %v500 = vunpack.c.l.b16 %v131
  %v501 = vunpack.c.l.b16 %v132
  %v502 = vunpack.c.l.b16 %v133
  %v503 = vunpack.c.l.b16 %v134
  %v504 = vunpack.c.l.b16 %v135
  %v505 = vunpack.c.l.b16 %v136
  %v506 = vunpack.c.l.b16 %v137
  %v507 = vunpack.c.l.b16 %v138
  %v508 = vunpack.c.l.b16 %v139
  %v509 = vunpack.c.l.b16 %v140
  %v510 = vunpack.c.l.b16 %v141
  %v511 = vunpack.c.l.b16 %v142
  %v512 = vunpack.c.l.b16 %v143
  %v513 = vunpack.c.l.b16 %v144
  %v514 = vunpack.c.l.b16 %v145
  %v515 = vunpack.c.l.b16 %v146
  %v516 = vunpack.c.l.b16 %v147
  %v517 = vunpack.c.l.b16 %v148
  %v518 = vunpack.c.l.b16 %v149
  %v519 = vunpack.c.l.b16 %v150
  %v520 = vunpack.c.l.b16 %v151
  %v521 = vunpack.c.l.b16 %v152
  %v522 = vunpack.c.l.b16 %v153
  %v523 = vunpack.c.l.b16 %v154
  %v524 = vunpack.c.l.b16 %v155
  %v525 = vunpack.c.l.b16 %v156
  %v526 = vunpack.c.l.b16 %v157
  %v527 = vunpack.c.l.b16 %v158
  %v528 = vunpack.c.l.b16 %v159
  %v529 = vunpack.c.l.b16 %v160
  %v530 = vpack.c.b16 %v387, %v386
  %v531 = vpack.c.b16 %v389, %v388
  %v532 = vpack.c.b16 %v391, %v390
  %v533 = vpack.c.b16 %v393, %v392
  %v534 = vpack.c.b16 %v395, %v394
  %v535 = vpack.c.b16 %v397, %v396
  %v536 = vpack.c.b16 %v399, %v398
  %v537 = vpack.c.b16 %v401, %v400
  %v538 = vpack.c.b16 %v403, %v402
  %v539 = vpack.c.b16 %v405, %v404
  %v540 = vpack.c.b16 %v407, %v406
  %v541 = vpack.c.b16 %v409, %v408
  %v542 = vpack.c.b16 %v411, %v410
  %v543 = vpack.c.b16 %v413, %v412
  %v544 = vpack.c.b16 %v415, %v414
  %v545 = vpack.c.b16 %v417, %v416
  %v546 = vpack.c.b16 %v419, %v418
  %v547 = vpack.c.b16 %v421, %v420
  %v548 = vpack.c.b16 %v423, %v422
  %v549 = vpack.c.b16 %v425, %v424
  %v550 = vpack.c.b16 %v427, %v426
  %v551 = vpack.c.b16 %v429, %v428
  %v552 = vpack.c.b16 %v431, %v430
  %v553 = vpack.c.b16 %v433, %v432
  %v554 = vpack.c.b16 %v435, %v434
  %v555 = vpack.c.b16 %v437, %v436
  %v556 = vpack.c.b16 %v439, %v438
  %v557 = vpack.c.b16 %v441, %v440
  %v558 = vpack.c.b16 %v443, %v442
  %v559 = vpack.c.b16 %v445, %v444
  %v560 = vpack.c.b16 %v447, %v446
  %v561 = vpack.c.b16 %v449, %v448
  %v562 = vpack.c.b16 %v451, %v450
  %v563 = vpack.c.b16 %v453, %v452
  %v564 = vpack.c.b16 %v455, %v454
  %v565 = vpack.c.b16 %v457, %v456
  %v566 = vpack.c.b16 %v459, %v458
  %v567 = vpack.c.b16 %v461, %v460
  %v568 = vpack.c.b16 %v463, %v462
  %v569 = vpack.c.b16 %v465, %v464
  %v570 = vpack.c.b16 %v467, %v466
  %v571 = vpack.c.b16 %v469, %v468
  %v572 = vpack.c.b16 %v471, %v470
  %v573 = vpack.c.b16 %v473, %v472
  %v574 = vpack.c.b16 %v475, %v474
  %v575 = vpack.c.b16 %v477, %v476
  %v576 = vpack.c.b16 %v479, %v478
  %v577 = vpack.c.b16 %v481, %v480
  %v578 = vpack.c.b16 %v483, %v482
  %v579 = vpack.c.b16 %v485, %v484
  %v580 = vpack.c.b16 %v487, %v486
  %v581 = vpack.c.b16 %v489, %v488
  %v582 = vpack.c.b16 %v491, %v490
  %v583 = vpack.c.b16 %v493, %v492
  %v584 = vpack.c.b16 %v495, %v494
  %v585 = vpack.c.b16 %v497, %v496
  %v586 = vpack.c.b16 %v499, %v498
  %v587 = vpack.c.b16 %v501, %v500
  %v588 = vpack.c.b16 %v503, %v502
  %v589 = vpack.c.b16 %v505, %v504
  %v590 = vpack.c.b16 %v507, %v506
  %v591 = vpack.c.b16 %v509, %v508
  %v592 = vpack.c.b16 %v511, %v510
  %v593 = vpack.c.b16 %v513, %v512
  %v594 = vpack.c.b16 %v515, %v514
  %v595 = vpack.c.b16 %v517, %v516
  %v596 = vpack.c.b16 %v519, %v518
  %v597 = vpack.c.b16 %v521, %v520
  %v598 = vpack.c.b16 %v523, %v522
  %v599 = vpack.c.b16 %v525, %v524
  %v600 = vpack.c.b16 %v527, %v526
  %v601 = vpack.c.b16 %v529, %v528
  %674 = vmatprep.subr.bf16.mxu0 0
  %675 = vmatpush1.bf16.msra.mxu0 %v530
  %676 = vmatprep.subr.bf16.mxu0 0
  %677 = vmatpush1.bf16.msra.mxu0 %v531
  %678 = vmatprep.subr.bf16.mxu0 0
  %679 = vmatpush1.bf16.msra.mxu0 %v532
  %680 = vmatprep.subr.bf16.mxu0 0
  %681 = vmatpush1.bf16.msra.mxu0 %v533
  %682 = vmatprep.subr.bf16.mxu0 0
  %683 = vmatpush1.bf16.msra.mxu0 %v534
  %684 = vmatprep.subr.bf16.mxu0 0
  %685 = vmatpush1.bf16.msra.mxu0 %v535
  %686 = vmatprep.subr.bf16.mxu0 0
  %687 = vmatpush1.bf16.msra.mxu0 %v536
  %688 = vmatprep.subr.bf16.mxu0 0
  %689 = vmatpush1.bf16.msra.mxu0 %v537
  %690 = vmatprep.subr.bf16.mxu0 0
  %691 = vmatpush1.bf16.msra.mxu0 %v538
  %692 = vmatprep.subr.bf16.mxu0 0
  %693 = vmatpush1.bf16.msra.mxu0 %v539
  %694 = vmatprep.subr.bf16.mxu0 0
  %695 = vmatpush1.bf16.msra.mxu0 %v540
  %696 = vmatprep.subr.bf16.mxu0 0
  %697 = vmatpush1.bf16.msra.mxu0 %v541
  %698 = vmatprep.subr.bf16.mxu0 0
  %699 = vmatpush1.bf16.msra.mxu0 %v542
  %700 = vmatprep.subr.bf16.mxu0 0
  %701 = vmatpush1.bf16.msra.mxu0 %v543
  %702 = vmatprep.subr.bf16.mxu0 0
  %703 = vmatpush1.bf16.msra.mxu0 %v544
  %704 = vmatprep.subr.bf16.mxu0 0
  %705 = vmatpush1.bf16.msra.mxu0 %v545
  %706 = vmatprep.mubr.bf16.mxu0 %v207
  %707 = vmatmul.mubr.bf16.gmra.mrb[0].mxu0 %v193
  %v708 = vpop.f32.mrb[0].mxu0
  %v709 = vadd.f32 %v166, %v708
  %v710 = vpop.f32.mrb[0].mxu0
  %v711 = vpop.f32.mrb[0].mxu0
  %v712 = vpop.f32.mrb[0].mxu0
  %713 = vdwg.mxu0
  %714 = vmatprep.subr.bf16.mxu0 0
  %715 = vmatpush1.bf16.msra.mxu0 %v546
  %716 = vmatprep.subr.bf16.mxu0 0
  %717 = vmatpush1.bf16.msra.mxu0 %v547
  %718 = vmatprep.subr.bf16.mxu0 0
  %719 = vmatpush1.bf16.msra.mxu0 %v548
  %720 = vmatprep.subr.bf16.mxu0 0
  %721 = vmatpush1.bf16.msra.mxu0 %v549
  %722 = vmatprep.subr.bf16.mxu0 0
  %723 = vmatpush1.bf16.msra.mxu0 %v550
  %724 = vmatprep.subr.bf16.mxu0 0
  %725 = vmatpush1.bf16.msra.mxu0 %v551
  %726 = vmatprep.subr.bf16.mxu0 0
  %727 = vmatpush1.bf16.msra.mxu0 %v552
  %728 = vmatprep.subr.bf16.mxu0 0
  %729 = vmatpush1.bf16.msra.mxu0 %v553
  %730 = vmatprep.subr.bf16.mxu0 0
  %731 = vmatpush1.bf16.msra.mxu0 %v554
  %732 = vmatprep.subr.bf16.mxu0 0
  %733 = vmatpush1.bf16.msra.mxu0 %v555
  %734 = vmatprep.subr.bf16.mxu0 0
  %735 = vmatpush1.bf16.msra.mxu0 %v556
  %736 = vmatprep.subr.bf16.mxu0 0
  %737 = vmatpush1.bf16.msra.mxu0 %v557
  %738 = vmatprep.subr.bf16.mxu0 0
  %739 = vmatpush1.bf16.msra.mxu0 %v558
  %740 = vmatprep.subr.bf16.mxu0 0
  %741 = vmatpush1.bf16.msra.mxu0 %v559
  %742 = vmatprep.subr.bf16.mxu0 0
  %743 = vmatpush1.bf16.msra.mxu0 %v560
  %744 = vmatprep.subr.bf16.mxu0 0
  %745 = vmatpush1.bf16.msra.mxu0 %v561
  %746 = vmatprep.mubr.bf16.mxu0 %v217
  %747 = vmatmul.mubr.bf16.gmra.mrb[0].mxu0 %v215
  %v748 = vpop.f32.mrb[0].mxu0
  %v749 = vadd.f32 %v709, %v748
  %v750 = vpop.f32.mrb[0].mxu0
  %v751 = vpop.f32.mrb[0].mxu0
  %v752 = vpop.f32.mrb[0].mxu0
  %753 = vdwg.mxu0
  %754 = vmatprep.subr.bf16.mxu0 0
  %755 = vmatpush1.bf16.msra.mxu0 %v562
  %756 = vmatprep.subr.bf16.mxu0 0
  %757 = vmatpush1.bf16.msra.mxu0 %v563
  %758 = vmatprep.subr.bf16.mxu0 0
  %759 = vmatpush1.bf16.msra.mxu0 %v564
  %760 = vmatprep.subr.bf16.mxu0 0
  %761 = vmatpush1.bf16.msra.mxu0 %v565
  %762 = vmatprep.subr.bf16.mxu0 0
  %763 = vmatpush1.bf16.msra.mxu0 %v566
  %764 = vmatprep.subr.bf16.mxu0 0
  %765 = vmatpush1.bf16.msra.mxu0 %v567
  %766 = vmatprep.subr.bf16.mxu0 0
  %767 = vmatpush1.bf16.msra.mxu0 %v568
  %768 = vmatprep.subr.bf16.mxu0 0
  %769 = vmatpush1.bf16.msra.mxu0 %v569
  %770 = vmatprep.subr.bf16.mxu0 0
  %771 = vmatpush1.bf16.msra.mxu0 %v570
  %772 = vmatprep.subr.bf16.mxu0 0
  %773 = vmatpush1.bf16.msra.mxu0 %v571
  %774 = vmatprep.subr.bf16.mxu0 0
  %775 = vmatpush1.bf16.msra.mxu0 %v572
  %776 = vmatprep.subr.bf16.mxu0 0
  %777 = vmatpush1.bf16.msra.mxu0 %v573
  %778 = vmatprep.subr.bf16.mxu0 0
  %779 = vmatpush1.bf16.msra.mxu0 %v574
  %780 = vmatprep.subr.bf16.mxu0 0
  %781 = vmatpush1.bf16.msra.mxu0 %v575
  %782 = vmatprep.subr.bf16.mxu0 0
  %783 = vmatpush1.bf16.msra.mxu0 %v576
  %784 = vmatprep.subr.bf16.mxu0 0
  %785 = vmatpush1.bf16.msra.mxu0 %v577
  %786 = vmatprep.mubr.bf16.mxu0 %v214
  %787 = vmatmul.mubr.bf16.gmra.mrb[0].mxu0 %v200
  %v788 = vpop.f32.mrb[0].mxu0
  %v789 = vadd.f32 %v749, %v788
  %v790 = vpop.f32.mrb[0].mxu0
  %v791 = vpop.f32.mrb[0].mxu0
  %v792 = vpop.f32.mrb[0].mxu0
  %793 = vdwg.mxu0
  %794 = vmatprep.subr.bf16.mxu0 0
  %795 = vmatpush1.bf16.msra.mxu0 %v578
  %796 = vmatprep.subr.bf16.mxu0 0
  %797 = vmatpush1.bf16.msra.mxu0 %v579
  %798 = vmatprep.subr.bf16.mxu0 0
  %799 = vmatpush1.bf16.msra.mxu0 %v580
  %800 = vmatprep.subr.bf16.mxu0 0
  %801 = vmatpush1.bf16.msra.mxu0 %v581
  %802 = vmatprep.subr.bf16.mxu0 0
  %803 = vmatpush1.bf16.msra.mxu0 %v582
  %804 = vmatprep.subr.bf16.mxu0 0
  %805 = vmatpush1.bf16.msra.mxu0 %v583
  %806 = vmatprep.subr.bf16.mxu0 0
  %807 = vmatpush1.bf16.msra.mxu0 %v584
  %808 = vmatprep.subr.bf16.mxu0 0
  %809 = vmatpush1.bf16.msra.mxu0 %v585
  %810 = vmatprep.subr.bf16.mxu0 0
  %811 = vmatpush1.bf16.msra.mxu0 %v586
  %812 = vmatprep.subr.bf16.mxu0 0
  %813 = vmatpush1.bf16.msra.mxu0 %v587
  %814 = vmatprep.subr.bf16.mxu0 0
  %815 = vmatpush1.bf16.msra.mxu0 %v588
  %816 = vmatprep.subr.bf16.mxu0 0
  %817 = vmatpush1.bf16.msra.mxu0 %v589
  %818 = vmatprep.subr.bf16.mxu0 0
  %819 = vmatpush1.bf16.msra.mxu0 %v590
  %820 = vmatprep.subr.bf16.mxu0 0
  %821 = vmatpush1.bf16.msra.mxu0 %v591
  %822 = vmatprep.subr.bf16.mxu0 0
  %823 = vmatpush1.bf16.msra.mxu0 %v592
  %824 = vmatprep.subr.bf16.mxu0 0
  %825 = vmatpush1.bf16.msra.mxu0 %v593
  %826 = vmatprep.mubr.bf16.mxu0 %v218
  %827 = vmatmul.mubr.bf16.gmra.mrb[0].mxu0 %v216
  %v828 = vpop.f32.mrb[0].mxu0
  %v829 = vadd.f32 %v789, %v828
  %v830 = vpop.f32.mrb[0].mxu0
  %v831 = vpop.f32.mrb[0].mxu0
  %v832 = vpop.f32.mrb[0].mxu0
  %833 = vdwg.mxu0
  %834 = vmatprep.subr.bf16.mxu0 0
  %835 = vmatpush1.bf16.msra.mxu0 %v594
  %836 = vmatprep.subr.bf16.mxu0 0
  %837 = vmatpush1.bf16.msra.mxu0 %v595
  %838 = vmatprep.subr.bf16.mxu0 0
  %839 = vmatpush1.bf16.msra.mxu0 %v596
  %840 = vmatprep.subr.bf16.mxu0 0
  %841 = vmatpush1.bf16.msra.mxu0 %v597
  %842 = vmatprep.subr.bf16.mxu0 0
  %843 = vmatpush1.bf16.msra.mxu0 %v598
  %844 = vmatprep.subr.bf16.mxu0 0
  %845 = vmatpush1.bf16.msra.mxu0 %v599
  %846 = vmatprep.subr.bf16.mxu0 0
  %847 = vmatpush1.bf16.msra.mxu0 %v600
  %848 = vmatprep.subr.bf16.mxu0 0
  %849 = vmatpush1.bf16.msra.mxu0 %v601
  %850 = vmatprep.subr.bf16.mxu0 0
  %851 = vmatpush1.bf16.msra.mxu0 0
  %852 = vmatprep.subr.bf16.mxu0 0
  %853 = vmatpush1.bf16.msra.mxu0 0
  %854 = vmatprep.subr.bf16.mxu0 0
  %855 = vmatpush1.bf16.msra.mxu0 0
  %856 = vmatprep.subr.bf16.mxu0 0
  %857 = vmatpush1.bf16.msra.mxu0 0
  %858 = vmatprep.subr.bf16.mxu0 0
  %859 = vmatpush1.bf16.msra.mxu0 0
  %860 = vmatprep.subr.bf16.mxu0 0
  %861 = vmatpush1.bf16.msra.mxu0 0
  %862 = vmatprep.subr.bf16.mxu0 0
  %863 = vmatpush1.bf16.msra.mxu0 0
  %864 = vmatprep.subr.bf16.mxu0 0
  %865 = vmatpush1.bf16.msra.mxu0 0
  %866 = vmatprep.mubr.bf16.mxu0 0
  %867 = vmatmul.mubr.bf16.gmra.mrb[0].mxu0 %v232
  %v868 = vpop.f32.mrb[0].mxu0
  %v869 = vadd.f32 %v829, %v868
  %v870 = vpop.f32.mrb[0].mxu0
  %v871 = vpop.f32.mrb[0].mxu0
  %v872 = vpop.f32.mrb[0].mxu0
  %873 = vdwg.mxu0
  %v874 = vpack.c.bf16 %v869, %v869
  %875 = vst [vmem:[%s3] sm:$0x1] %v874
  // Predicated region
  $region14: #{cobi_loss_forward.19} parent=0 // pred_check
    _
  $region15: #{cobi_loss_forward.19} parent=0 // pred_check_branch
    %877 = sbr.rel (0) target = $region17
  $region16: #{cobi_loss_forward.19} parent=0 // pred_region
    _
  $region17: #{cobi_loss_forward.19} parent=0 // pred_fallthru
    _
  // Predicated region
  $region18: #{cobi_loss_forward.19} parent=0 // pred_check
    _
  $region19: #{cobi_loss_forward.19} parent=0 // pred_check_branch
    %879 = sbr.rel (0) target = $region21
  $region20: #{cobi_loss_forward.19} parent=0 // pred_region
    _
  $region21: #{cobi_loss_forward.19} parent=0 // pred_fallthru
    _

// kernel: cobi_loss_forward.21
$region0: #{cobi_loss_forward.21}
  #allocation0 [shape = 'u32[]', space=smem, size = 0x4, offset = 0x4, fixed_abs, tag = 'smem constant byte address 0x4 - core index']
  #allocation1 [shape = 'u32[144,128]{1,0:T(1,128)}', space=vmem, size = 0x12000, scoped, tag = 'internal scratch']
  #allocation2 [shape = 'f32[1,1,1]{2,1,0:T(1,128)S(1)}', space=vmem, size = 0x200, scoped, tag = 'scoped memory for cobi_loss_forward.21']
  %s0 = inlined_call_operand.vmem [shape: bf16[2,1,128], index: 0, kind: input, shape index: {}]
  %s1 = inlined_call_operand.vmem [shape: bf16[2,128,1], index: 1, kind: input, shape index: {}]
  %s2 = inlined_call_operand.<no memory space> [shape: f32[1,1,1], index: 2, kind: input, shape index: {}]
  %s3 = inlined_call_operand.vmem [shape: f32[2,1,1], index: 3, kind: output, shape index: {}]
  %s4 = sld [smem:[#allocation0]]
  $region45: #{cobi_loss_forward.21} parent=0
    _
  %s6 = ssub.s32 1, %s4
  %s7 = scalar_select 0, %s6, %s4
  %v8 = vstv %s2
  %9 = vst [vmem:[#allocation2] sm:$0x1] %v8
  loop: start=0, step=1, limit=4
  $region2: #{cobi_loss_forward.21} parent=0 // loop_pre_header
    _
  $region3: #{cobi_loss_forward.21} parent=0 // loop_header
    %s11 = sphi 0, %s15
    %p12 = scmp.ge.s32.totalorder %s11, 4
    %s18 = sphi 0, %s30
    %s19 = sphi 0, %s26
    %s20 = sphi 0, %s18
    %s21 = sphi 0, %s19
    %s22 = sphi 0, %s20
    %s23 = sphi 0, %s21
    %s35 = sphi 0, %s37
    %s38 = sphi 0, %s35
    %s39 = sphi 0, %s38
    %s55 = sphi 0, %s39
    %s61 = sphi 0, %s63
    %s64 = sphi 0, %s61
    %s65 = sphi 0, %s64
    %s81 = sphi 0, %s65
    %s87 = sphi 0, %s89
    %s90 = sphi 0, %s87
    %s91 = sphi 0, %s90
    %s107 = sphi 0, %s91
    %s115 = sphi 0, %s117
    %s118 = sphi 0, %s115
    %s119 = sphi 0, %s118
    %s135 = sphi 0, %s119
  $region4: #{cobi_loss_forward.21} parent=0 // loop_header_branch
    %14 = sbr.rel (%p12) target = $region8
  $region5: #{cobi_loss_forward.21} parent=0 // loop_body
    %s16 = ssub.s32 %s11, 1
    %s17 = ssub.s32 %s11, 2
    %s24 = sadd.s32 1, %s19
    %p25 = scmp.ge.s32.totalorder %s24, 1
    %s26 = scalar_select %p25, 0, %s24
    %s27 = sadd.s32 1, %s18
    %s28 = scalar_select %p25, %s27, %s18
    %p29 = scmp.ge.s32.totalorder %s28, 2
    %s30 = scalar_select %p29, 0, %s28
    %s31 = ssub.s32 %s18, %s30
    %s32 = ssub.s32 %s19, %s26
    %s33 = sor.u32 %s31, %s32
    %p34 = scmp.eq.s32.totalorder %s33, 0
    %s36 = sadd.s32 %s35, 1
    %s37 = scalar_select %p34, %s35, %s36
    %p40 = pneg %p34
    %p41 = scmp.eq.s32.totalorder %s11, 1
    %p42 = por %p40, %p41
    %p43 = scmp.ne.s32.totalorder %s35, %s38
    %p44 = scmp.eq.s32.totalorder %s11, 0
    %p45 = por %p43, %p44
    %p46 = scmp.ne.s32.totalorder %s35, %s38
    %p47 = scmp.eq.s32.totalorder %s16, 1
    %p48 = por %p46, %p47
    %p49 = scmp.ne.s32.totalorder %s38, %s39
    %p50 = scmp.eq.s32.totalorder %s16, 0
    %p51 = por %p49, %p50
    %p52 = scmp.ne.s32.totalorder %s38, %s39
    %p53 = scmp.eq.s32.totalorder %s17, 1
    %p54 = por %p52, %p53
    %p56 = scmp.ne.s32.totalorder %s39, %s55
    %p57 = scmp.eq.s32.totalorder %s17, 0
    %p58 = por %p56, %p57
    %s59 = ssub.s32 %s18, %s30
    %p60 = scmp.eq.s32.totalorder %s59, 0
    %s62 = sadd.s32 %s61, 1
    %s63 = scalar_select %p60, %s61, %s62
    %p66 = pneg %p60
    %p67 = scmp.eq.s32.totalorder %s11, 1
    %p68 = por %p66, %p67
    %p69 = scmp.ne.s32.totalorder %s61, %s64
    %p70 = scmp.eq.s32.totalorder %s11, 0
    %p71 = por %p69, %p70
    %p72 = scmp.ne.s32.totalorder %s61, %s64
    %p73 = scmp.eq.s32.totalorder %s16, 1
    %p74 = por %p72, %p73
    %p75 = scmp.ne.s32.totalorder %s64, %s65
    %p76 = scmp.eq.s32.totalorder %s16, 0
    %p77 = por %p75, %p76
    %p78 = scmp.ne.s32.totalorder %s64, %s65
    %p79 = scmp.eq.s32.totalorder %s17, 1
    %p80 = por %p78, %p79
    %p82 = scmp.ne.s32.totalorder %s65, %s81
    %p83 = scmp.eq.s32.totalorder %s17, 0
    %p84 = por %p82, %p83
    %s85 = ssub.s32 %s19, %s26
    %p86 = scmp.eq.s32.totalorder %s85, 0
    %s88 = sadd.s32 %s87, 1
    %s89 = scalar_select %p86, %s87, %s88
    %p92 = pneg %p86
    %p93 = scmp.eq.s32.totalorder %s11, 1
    %p94 = por %p92, %p93
    %p95 = scmp.ne.s32.totalorder %s87, %s90
    %p96 = scmp.eq.s32.totalorder %s11, 0
    %p97 = por %p95, %p96
    %p98 = scmp.ne.s32.totalorder %s87, %s90
    %p99 = scmp.eq.s32.totalorder %s16, 1
    %p100 = por %p98, %p99
    %p101 = scmp.ne.s32.totalorder %s90, %s91
    %p102 = scmp.eq.s32.totalorder %s16, 0
    %p103 = por %p101, %p102
    %p104 = scmp.ne.s32.totalorder %s90, %s91
    %p105 = scmp.eq.s32.totalorder %s17, 1
    %p106 = por %p104, %p105
    %p108 = scmp.ne.s32.totalorder %s91, %s107
    %p109 = scmp.eq.s32.totalorder %s17, 0
    %p110 = por %p108, %p109
    %s111 = ssub.s32 %s18, %s30
    %s112 = ssub.s32 %s19, %s26
    %s113 = sor.u32 %s111, %s112
    %p114 = scmp.eq.s32.totalorder %s113, 0
    %s116 = sadd.s32 %s115, 1
    %s117 = scalar_select %p114, %s115, %s116
    %p120 = pneg %p114
    %p121 = scmp.eq.s32.totalorder %s11, 1
    %p122 = por %p120, %p121
    %p123 = scmp.ne.s32.totalorder %s115, %s118
    %p124 = scmp.eq.s32.totalorder %s11, 0
    %p125 = por %p123, %p124
    %p126 = scmp.ne.s32.totalorder %s115, %s118
    %p127 = scmp.eq.s32.totalorder %s16, 1
    %p128 = por %p126, %p127
    %p129 = scmp.ne.s32.totalorder %s118, %s119
    %p130 = scmp.eq.s32.totalorder %s16, 0
    %p131 = por %p129, %p130
    %p132 = scmp.ne.s32.totalorder %s118, %s119
    %p133 = scmp.eq.s32.totalorder %s17, 1
    %p134 = por %p132, %p133
    %p136 = scmp.ne.s32.totalorder %s119, %s135
    %p137 = scmp.eq.s32.totalorder %s17, 0
    %p138 = por %p136, %p137
    %p139 = scmp.le.s32.totalorder 1, %s11
    %p140 = scmp.lt.s32.totalorder %s11, 3
    %p141 = pnand %p139, %p140
    %p142 = pneg %p141
    // Predicated region
    $region9: #{cobi_loss_forward.21} parent=5 // pred_check
      _
    $region10: #{cobi_loss_forward.21} parent=5 // pred_check_branch
      %144 = sbr.rel (%p141) target = $region12
    $region11: #{cobi_loss_forward.21} parent=5 // pred_region
      %s145 = ssub.s32 %s11, 1
      // Predicated region
      $region13: #{cobi_loss_forward.21} parent=11 // pred_check
        %p146 = pneg %p103
      $region14: #{cobi_loss_forward.21} parent=11 // pred_check_branch
        %148 = sbr.rel (%p146) target = $region16
      $region15: #{cobi_loss_forward.21} parent=11 // pred_region
        %p149 = scmp.lt.s32.totalorder %s21, 0
        %s150 = scalar_select %p149, %s21, 0
        %s151 = scalar_lea.vmem [#allocation2], %s150
      $region16: #{cobi_loss_forward.21} parent=11 // pred_fallthru
        _
    $region12: #{cobi_loss_forward.21} parent=5 // pred_fallthru
      _
    %p152 = scmp.lt.s32.totalorder %s11, 2
    // Predicated region
    $region17: #{cobi_loss_forward.21} parent=5 // pred_check
      %p153 = pneg %p152
    $region18: #{cobi_loss_forward.21} parent=5 // pred_check_branch
      %155 = sbr.rel (%p153) target = $region20
    $region19: #{cobi_loss_forward.21} parent=5 // pred_region
      // Predicated region
      $region21: #{cobi_loss_forward.21} parent=19 // pred_check
        %p156 = pneg %p45
      $region22: #{cobi_loss_forward.21} parent=19 // pred_check_branch
        %158 = sbr.rel (%p156) target = $region24
      $region23: #{cobi_loss_forward.21} parent=19 // pred_region
        %p159 = scmp.lt.s32.totalorder %s18, 1
        %s160 = scalar_select %p159, %s18, 1
        %p161 = scmp.lt.s32.totalorder %s19, 0
        %s162 = scalar_select %p161, %s19, 0
        %s163 = sadd.s32 %s162, %s160
        %s164 = scalar_lea.vmem %s0, %s163
      $region24: #{cobi_loss_forward.21} parent=19 // pred_fallthru
        _
      // Predicated region
      $region25: #{cobi_loss_forward.21} parent=19 // pred_check
        %p165 = pneg %p71
      $region26: #{cobi_loss_forward.21} parent=19 // pred_check_branch
        %167 = sbr.rel (%p165) target = $region28
      $region27: #{cobi_loss_forward.21} parent=19 // pred_region
        %p168 = scmp.lt.s32.totalorder %s18, 1
        %s169 = scalar_select %p168, %s18, 1
        %s170 = smul.addr %s169, 16
        %s171 = smul.addr %s170, 4
        %s172 = scalar_lea.vmem %s1, %s171
      $region28: #{cobi_loss_forward.21} parent=19 // pred_fallthru
        _
    $region20: #{cobi_loss_forward.21} parent=5 // pred_fallthru
      _
    %p173 = scmp.le.s32.totalorder 1, %s11
    %p174 = scmp.lt.s32.totalorder %s11, 3
    %p175 = pnand %p173, %p174
    %p176 = pneg %p175
    // Predicated region
    $region29: #{cobi_loss_forward.21} parent=5 // pred_check
      _
    $region30: #{cobi_loss_forward.21} parent=5 // pred_check_branch
      %178 = sbr.rel (%p175) target = $region32
    $region31: #{cobi_loss_forward.21} parent=5 // pred_region
      %s179 = ssub.s32 %s11, 1
      %p180 = scmp.lt.s32.totalorder %s20, 1
      %s181 = scalar_select %p180, %s20, 1
      %p182 = scmp.lt.s32.totalorder %s21, 0
      %s183 = scalar_select %p182, %s21, 0
      %s184 = sadd.s32 %s183, %s181
      %s185 = scalar_lea.vmem %s0, %s184
      %p186 = pneg %p51
      %p187 = pneg %p48
      %p188 = scmp.lt.s32.totalorder %s20, 1
      %s189 = scalar_select %p188, %s20, 1
      %s190 = smul.addr %s189, 16
      %s191 = smul.addr %s190, 4
      %s192 = scalar_lea.vmem %s1, %s191
      %p193 = pneg %p77
      %p194 = pneg %p74
      %p195 = scmp.lt.s32.totalorder %s21, 0
      %s196 = scalar_select %p195, %s21, 0
      %s197 = scalar_lea.vmem [#allocation2], %s196
      %p198 = pneg %p103
      %p199 = pneg %p100
      %p200 = pneg %p131
      %p201 = pneg %p128
      %p202 = scmp.lt.s32.totalorder %s20, 1
      %s203 = scalar_select %p202, %s20, 1
      %p204 = scmp.lt.s32.totalorder %s21, 0
      %s205 = scalar_select %p204, %s21, 0
      %s206 = sadd.s32 %s205, %s203
      %s207 = scalar_lea.vmem %s3, %s206
      %p208 = scmp.lt.s32.totalorder %s20, 1
      %s209 = scalar_select %p208, %s20, 1
      %p210 = scmp.lt.s32.totalorder %s21, 0
      %s211 = scalar_select %p210, %s21, 0
      %s212 = sadd.s32 %s211, %s209
      %s213 = scalar_lea.vmem %s0, %s212
      %p214 = scmp.lt.s32.totalorder %s20, 1
      %s215 = scalar_select %p214, %s20, 1
      %s216 = smul.addr %s215, 16
      %s217 = smul.addr %s216, 4
      %s218 = scalar_lea.vmem %s1, %s217
      %p219 = scmp.lt.s32.totalorder %s21, 0
      %s220 = scalar_select %p219, %s21, 0
      %s221 = scalar_lea.vmem [#allocation2], %s220
      %p222 = scmp.lt.s32.totalorder %s20, 1
      %s223 = scalar_select %p222, %s20, 1
      %p224 = scmp.lt.s32.totalorder %s21, 0
      %s225 = scalar_select %p224, %s21, 0
      %s226 = sadd.s32 %s225, %s223
      %s227 = scalar_lea.vmem %s3, %s226
      %v229 = vld [vmem:[%s213] sm:$0x1]
      %v230 = vld [vmem:[%s218] sm:$0xf]
      %v231 = vld [vmem:[%s218 + $0x4] sm:$0xf]
      %v232 = vld [vmem:[%s218 + $0x8] sm:$0xf]
      %v233 = vld [vmem:[%s218 + $0xc] sm:$0xf]
      %v234 = vld [vmem:[%s218 + $0x10] sm:$0xf]
      %v235 = vld [vmem:[%s218 + $0x14] sm:$0xf]
      %v236 = vld [vmem:[%s218 + $0x18] sm:$0xf]
      %v237 = vld [vmem:[%s218 + $0x1c] sm:$0xf]
      %v238 = vld [vmem:[%s218 + $0x20] sm:$0xf]
      %v239 = vld [vmem:[%s218 + $0x24] sm:$0xf]
      %v240 = vld [vmem:[%s218 + $0x28] sm:$0xf]
      %v241 = vld [vmem:[%s218 + $0x2c] sm:$0xf]
      %v242 = vld [vmem:[%s218 + $0x30] sm:$0xf]
      %v243 = vld [vmem:[%s218 + $0x34] sm:$0xf]
      %v244 = vld [vmem:[%s218 + $0x38] sm:$0xf]
      %v245 = vld [vmem:[%s218 + $0x3c] sm:$0xf]
      %v262 = vunpack.c.l.b16 %v230
      %v263 = vunpack.c.l.b16 %v231
      %v264 = vunpack.c.l.b16 %v232
      %v265 = vunpack.c.l.b16 %v233
      %v266 = vunpack.c.l.b16 %v234
      %v267 = vunpack.c.l.b16 %v235
      %v268 = vunpack.c.l.b16 %v236
      %v269 = vunpack.c.l.b16 %v237
      %v270 = vunpack.c.l.b16 %v238
      %v271 = vunpack.c.l.b16 %v239
      %v272 = vunpack.c.l.b16 %v240
      %v273 = vunpack.c.l.b16 %v241
      %v274 = vunpack.c.l.b16 %v242
      %v275 = vunpack.c.l.b16 %v243
      %v276 = vunpack.c.l.b16 %v244
      %v277 = vunpack.c.l.b16 %v245
      %v278 = vpack.c.b16 %v263, %v262
      %v279 = vpack.c.b16 %v265, %v264
      %v280 = vpack.c.b16 %v267, %v266
      %v281 = vpack.c.b16 %v269, %v268
      %v282 = vpack.c.b16 %v271, %v270
      %v283 = vpack.c.b16 %v273, %v272
      %v284 = vpack.c.b16 %v275, %v274
      %v285 = vpack.c.b16 %v277, %v276
      %294 = vmatprep.subr.bf16.mxu0 0
      %295 = vmatpush1.bf16.msra.mxu0 %v278
      %296 = vmatprep.subr.bf16.mxu0 0
      %297 = vmatpush1.bf16.msra.mxu0 %v279
      %298 = vmatprep.subr.bf16.mxu0 0
      %299 = vmatpush1.bf16.msra.mxu0 %v280
      %300 = vmatprep.subr.bf16.mxu0 0
      %301 = vmatpush1.bf16.msra.mxu0 %v281
      %302 = vmatprep.subr.bf16.mxu0 0
      %303 = vmatpush1.bf16.msra.mxu0 %v282
      %304 = vmatprep.subr.bf16.mxu0 0
      %305 = vmatpush1.bf16.msra.mxu0 %v283
      %306 = vmatprep.subr.bf16.mxu0 0
      %307 = vmatpush1.bf16.msra.mxu0 %v284
      %308 = vmatprep.subr.bf16.mxu0 0
      %309 = vmatpush1.bf16.msra.mxu0 %v285
      %310 = vmatprep.subr.bf16.mxu0 0
      %311 = vmatpush1.bf16.msra.mxu0 0
      %312 = vmatprep.subr.bf16.mxu0 0
      %313 = vmatpush1.bf16.msra.mxu0 0
      %314 = vmatprep.subr.bf16.mxu0 0
      %315 = vmatpush1.bf16.msra.mxu0 0
      %316 = vmatprep.subr.bf16.mxu0 0
      %317 = vmatpush1.bf16.msra.mxu0 0
      %318 = vmatprep.subr.bf16.mxu0 0
      %319 = vmatpush1.bf16.msra.mxu0 0
      %320 = vmatprep.subr.bf16.mxu0 0
      %321 = vmatpush1.bf16.msra.mxu0 0
      %322 = vmatprep.subr.bf16.mxu0 0
      %323 = vmatpush1.bf16.msra.mxu0 0
      %324 = vmatprep.subr.bf16.mxu0 0
      %325 = vmatpush1.bf16.msra.mxu0 0
      %326 = vmatprep.mubr.bf16.mxu0 0
      %327 = vmatmul.mubr.bf16.gmra.mrb[0].mxu0 %v229
      %v328 = vpop.f32.mrb[0].mxu0
      %v329 = vadd.f32 0.0, %v328
      %v330 = vpop.f32.mrb[0].mxu0
      %v331 = vpop.f32.mrb[0].mxu0
      %v332 = vpop.f32.mrb[0].mxu0
      %333 = vdwg.mxu0
      %v334 = vsub.f32 1.0, %v329
      %vm335 = vcmp.lt.f32.partialorder %v334, 0.0
      %v336 = vsel %vm335, 0.0, %v334
      %v337 = vadd.f32 %v336, 1e-05
      %v338 = vrcp.pop %v337
      %v339 = vmul.f32 %v336, %v338
      %v340 = vmul.f32 %v339, -2.0
      %v341 = vmul.f32 %v340, 1.442695
      %v342 = vpow.pop %v341
      %v343 = vadd.f32 %v342, 0.0
      %v344 = vrcp.pop %v343
      %v345 = vmul.f32 %v342, %v344
      %v346 = vmul.f32 %v345, 0.9
      %v347 = vld [vmem:[%s221] sm:$0x1]
      %v348 = vmul.f32 %v347, 0.1
      %v349 = vadd.f32 %v346, %v348
      %vm350 = vcmask 0
      %351 = vst.msk [vmem:[%s227] sm:$0x1] %vm350, %v349
      %p352 = scmp.lt.s32.totalorder %s20, 1
      %s353 = scalar_select %p352, %s20, 1
      %p354 = scmp.lt.s32.totalorder %s21, 0
      %s355 = scalar_select %p354, %s21, 0
      %s356 = sadd.s32 %s355, %s353
      %s357 = scalar_lea.vmem %s3, %s356
      // Predicated region
      $region33: #{cobi_loss_forward.21} parent=31 // pred_check
        %p358 = pneg %p128
      $region34: #{cobi_loss_forward.21} parent=31 // pred_check_branch
        %360 = sbr.rel (%p358) target = $region36
      $region35: #{cobi_loss_forward.21} parent=31 // pred_region
        _
      $region36: #{cobi_loss_forward.21} parent=31 // pred_fallthru
        _
    $region32: #{cobi_loss_forward.21} parent=5 // pred_fallthru
      _
    %p361 = scmp.le.s32.totalorder 2, %s11
    // Predicated region
    $region37: #{cobi_loss_forward.21} parent=5 // pred_check
      %p362 = pneg %p361
    $region38: #{cobi_loss_forward.21} parent=5 // pred_check_branch
      %364 = sbr.rel (%p362) target = $region40
    $region39: #{cobi_loss_forward.21} parent=5 // pred_region
      %s365 = ssub.s32 %s11, 2
      // Predicated region
      $region41: #{cobi_loss_forward.21} parent=39 // pred_check
        %p366 = pneg %p134
      $region42: #{cobi_loss_forward.21} parent=39 // pred_check_branch
        %368 = sbr.rel (%p366) target = $region44
      $region43: #{cobi_loss_forward.21} parent=39 // pred_region
        %p369 = scmp.lt.s32.totalorder %s22, 1
        %s370 = scalar_select %p369, %s22, 1
        %p371 = scmp.lt.s32.totalorder %s23, 0
        %s372 = scalar_select %p371, %s23, 0
        %s373 = sadd.s32 %s372, %s370
        %s374 = scalar_lea.vmem %s3, %s373
      $region44: #{cobi_loss_forward.21} parent=39 // pred_fallthru
        _
    $region40: #{cobi_loss_forward.21} parent=5 // pred_fallthru
      _
  $region6: #{cobi_loss_forward.21} parent=0 // loop_footer
    %s15 = sadd.s32 1, %s11
  $region7: #{cobi_loss_forward.21} parent=0 // loop_footer_branch
    %10 = sbr.rel target = $region3
  $region8: #{cobi_loss_forward.21} parent=0 // loop_exit
    _

</llo_original>
